<compile_context>
chip_gen: v7x
topology: tpu7x:2x2x1
jax: 0.10.0
libtpu: 0.0.40
codegen_flags: <defaults>
</compile_context>

<pallas_src>
import jax
import jax.numpy as jnp
from jax.experimental import pallas as pl
from jax.experimental.pallas import tpu as pltpu

_EPS = 2e-5


# ----------------------------------------------------------------------------
# Kernel factory
# ----------------------------------------------------------------------------
def _make_kernel(nb, H, W, Cin, D, stride, fused):
    Ho = (H + 2 - 3) // stride + 1
    Wo = (W + 2 - 3) // stride + 1
    Hh, Wh = (H + 2) // 2, (W + 2) // 2        # parity-plane extents (stride 2)
    M, Mo = nb * H * W, nb * Ho * Wo
    f32, bf16 = jnp.float32, jnp.bfloat16

    def zero_halo(pad_ref, C):
        # Only the 1-wide border needs zeros; the interior is fully rewritten
        # every grid step, so no full-buffer memset.
        pad_ref[:, 0:1, :, :] = jnp.zeros((nb, 1, W + 2, C), f32)
        pad_ref[:, H + 1:H + 2, :, :] = jnp.zeros((nb, 1, W + 2, C), f32)
        pad_ref[:, 1:H + 1, 0:1, :] = jnp.zeros((nb, H, 1, C), f32)
        pad_ref[:, 1:H + 1, W + 1:W + 2, :] = jnp.zeros((nb, H, 1, C), f32)

    def dot_taps(taps, wk, C):
        # taps: 3 f32 (rows, C) values; wk: (3*C, D) bf16 value.
        if fused:
            patch = jnp.concatenate(taps, axis=1).astype(bf16)
            return jnp.dot(patch, wk, preferred_element_type=f32)
        out = None
        for kw in range(3):
            part = jnp.dot(taps[kw].astype(bf16),
                           wk[kw * C:(kw + 1) * C, :],
                           preferred_element_type=f32)
            out = part if out is None else out + part
        return out

    def conv3x3_s1(pad_ref, w_ref, C):
        acc = None
        for kh in range(3):
            taps = [pad_ref[:, kh:kh + H, kw:kw + W, :].reshape(M, C)
                    for kw in range(3)]
            part = dot_taps(taps, w_ref[kh], C)
            acc = part if acc is None else acc + part
        return acc

    def conv3x3_s2(par, w_ref, C):
        # par[rr][cc] holds padded positions (2a+rr, 2b+cc).
        acc = None
        for kh in range(3):
            taps = []
            for kw in range(3):
                p = par[kh % 2][kw % 2]
                taps.append(p[:, kh // 2:kh // 2 + Ho,
                              kw // 2:kw // 2 + Wo, :].reshape(Mo, C))
            part = dot_taps(taps, w_ref[kh], C)
            acc = part if acc is None else acc + part
        return acc

    def store_out(o_ref, out):
        if fused:   # lane-dense slab (last dim Wo*D)
            o_ref[...] = out.reshape(nb, Ho, Wo * D).astype(o_ref.dtype)
        else:
            o_ref[...] = out.reshape(nb, Ho, Wo, D).astype(o_ref.dtype)

    if stride == 1:
        def kernel(x_ref, w1_ref, w2_ref, bn0_ref, cst_ref, o_ref, pad0, pad1):
            bn0, cst = bn0_ref[...], cst_ref[...]
            s0 = bn0[0:1].reshape(1, 1, 1, Cin)
            h0 = bn0[1:2].reshape(1, 1, 1, Cin)
            b1, alpha, b2 = cst[0:1], cst[1:2], cst[2:3]

            x = x_ref[...].astype(f32)                       # (nb, H, W, Cin)

            zero_halo(pad0, Cin)
            pad0[:, 1:H + 1, 1:W + 1, :] = x * s0 + h0       # BN0 (eval mode)

            y1 = conv3x3_s1(pad0, w1_ref, Cin) + b1          # conv1 (+BN1 scale folded)
            y1 = jnp.where(y1 > 0, y1, y1 * alpha)           # PReLU

            zero_halo(pad1, D)
            pad1[:, 1:H + 1, 1:W + 1, :] = y1.reshape(nb, H, W, D)

            res = conv3x3_s1(pad1, w2_ref, D) + b2           # conv2 (+BN2 folded)
            store_out(o_ref, res + x.reshape(M, Cin))        # identity shortcut
    else:
        def kernel(x_ref, xs_ref, w1_ref, w2_ref, wsc_ref, bn0_ref, cst_ref,
                   o_ref, pad0, pad1, rows0, rows1, p00, p01, p10, p11):
            bn0, cst = bn0_ref[...], cst_ref[...]
            s0 = bn0[0:1].reshape(1, 1, 1, Cin)
            h0 = bn0[1:2].reshape(1, 1, 1, Cin)
            b1, alpha, b2, bsc = cst[0:1], cst[1:2], cst[2:3], cst[3:4]

            x = x_ref[...].astype(f32)

            zero_halo(pad0, Cin)
            pad0[:, 1:H + 1, 1:W + 1, :] = x * s0 + h0

            y1 = conv3x3_s1(pad0, w1_ref, Cin) + b1
            y1 = jnp.where(y1 > 0, y1, y1 * alpha)

            zero_halo(pad1, D)
            pad1[:, 1:H + 1, 1:W + 1, :] = y1.reshape(nb, H, W, D)

            # Deinterleave the padded conv1 output ONCE into 4 even/odd parity
            # planes: rows first (cheap major-axis stride), then one sublane
            # gather per plane -- instead of 9 strided sublane reads.
            rows0[...] = pad1[:, pl.ds(0, Hh, 2), :, :]
            rows1[...] = pad1[:, pl.ds(1, Hh, 2), :, :]
            p00[...] = rows0[:, :, pl.ds(0, Wh, 2), :]
            p01[...] = rows0[:, :, pl.ds(1, Wh, 2), :]
            p10[...] = rows1[:, :, pl.ds(0, Wh, 2), :]
            p11[...] = rows1[:, :, pl.ds(1, Wh, 2), :]

            res = conv3x3_s2(((p00, p01), (p10, p11)), w2_ref, D) + b2

            # Shortcut: 1x1 stride-2 conv (+BN folded) on the pre-sampled x.
            xs = xs_ref[...].astype(bf16).reshape(Mo, Cin)
            sc = jnp.dot(xs, wsc_ref[...], preferred_element_type=f32) + bsc

            store_out(o_ref, res + sc)

    return kernel, Ho, Wo


# ----------------------------------------------------------------------------
# Wrapper (layout transposes, BN folding, BlockSpecs)
# ----------------------------------------------------------------------------
def _bn_scale_shift(params, prefix):
    g, b = params[prefix + "_g"], params[prefix + "_b"]
    m, v = params[prefix + "_m"], params[prefix + "_v"]
    s = g / jnp.sqrt(v + _EPS)
    return s.astype(jnp.float32), (b - m * s).astype(jnp.float32)


def bottleneck_ir_forward(x_nchw, params, stride, *, batch_block=1):
    assert stride in (1, 2)
    x = jnp.transpose(x_nchw, (0, 2, 3, 1)).astype(jnp.float32)   # NCHW -> NHWC
    N, H, W, Cin = x.shape
    D = params["w1"].shape[0]
    nb = batch_block
    assert N % nb == 0, "batch_block must divide the batch size"
    if stride == 1:
        assert Cin == D, "identity shortcut requires in_channel == depth"
    else:
        assert H % 2 == 0 and W % 2 == 0, "stride-2 block expects even H, W"

    # Fold the (inference-mode) BatchNorm scales into the conv weights; only
    # per-channel shifts + PReLU slope are applied inside the kernel.
    s0, h0 = _bn_scale_shift(params, "bn0")
    s1, h1 = _bn_scale_shift(params, "bn1")
    s2, h2 = _bn_scale_shift(params, "bn2")
    alpha = params["prelu"].astype(jnp.float32)

    # conv weights: OIHW -> (kh, kw*C, D), bf16 for the MXU.
    w1 = (jnp.transpose(params["w1"], (2, 3, 1, 0)) * s1
          ).reshape(3, 3 * Cin, D).astype(jnp.bfloat16)
    w2 = (jnp.transpose(params["w2"], (2, 3, 1, 0)) * s2
          ).reshape(3, 3 * D, D).astype(jnp.bfloat16)

    bn0 = jnp.stack([s0, h0])                                      # (2, Cin)
    if stride == 2:
        ssc, hsc = _bn_scale_shift(params, "bnsc")
        wsc = (jnp.transpose(params["wsc"].reshape(D, Cin), (1, 0)) * ssc
               ).astype(jnp.bfloat16)                              # (Cin, D)
        cst = jnp.stack([h1, alpha, h2, hsc])                      # (4, D)
        x_s = x[:, ::2, ::2, :]                  # 1x1/stride-2 shortcut sample
    else:
        cst = jnp.stack([h1, alpha, h2])                           # (3, D)

    def run(fused):
        kernel, Ho, Wo = _make_kernel(nb, H, W, Cin, D, stride, fused)

        def const_spec(shape):
            nd = len(shape)
            return pl.BlockSpec(shape, lambda b, _n=nd: (0,) * _n)

        x_spec = pl.BlockSpec((nb, H, W, Cin), lambda b: (b, 0, 0, 0))
        if fused:
            out_shape = jax.ShapeDtypeStruct((N, Ho, Wo * D), jnp.float32)
            out_spec = pl.BlockSpec((nb, Ho, Wo * D), lambda b: (b, 0, 0))
        else:
            out_shape = jax.ShapeDtypeStruct((N, Ho, Wo, D), jnp.float32)
            out_spec = pl.BlockSpec((nb, Ho, Wo, D), lambda b: (b, 0, 0, 0))

        scratch = [pltpu.VMEM((nb, H + 2, W + 2, Cin), jnp.float32),  # padded BN0(x)
                   pltpu.VMEM((nb, H + 2, W + 2, D), jnp.float32)]    # padded PReLU out

        if stride == 2:
            Hh, Wh = (H + 2) // 2, (W + 2) // 2
            in_arrays = [x, x_s, w1, w2, wsc, bn0, cst]
            in_specs = [x_spec,
                        pl.BlockSpec((nb, Ho, Wo, Cin), lambda b: (b, 0, 0, 0)),
                        const_spec((3, 3 * Cin, D)),
                        const_spec((3, 3 * D, D)),
                        const_spec((Cin, D)),
                        const_spec((2, Cin)),
                        const_spec((4, D))]
            scratch += [pltpu.VMEM((nb, Hh, W + 2, D), jnp.float32),  # even rows
                        pltpu.VMEM((nb, Hh, W + 2, D), jnp.float32),  # odd rows
                        pltpu.VMEM((nb, Hh, Wh, D), jnp.float32),     # parity planes
                        pltpu.VMEM((nb, Hh, Wh, D), jnp.float32),
                        pltpu.VMEM((nb, Hh, Wh, D), jnp.float32),
                        pltpu.VMEM((nb, Hh, Wh, D), jnp.float32)]
        else:
            in_arrays = [x, w1, w2, bn0, cst]
            in_specs = [x_spec,
                        const_spec((3, 3 * Cin, D)),
                        const_spec((3, 3 * D, D)),
                        const_spec((2, Cin)),
                        const_spec((3, D))]

        out = pl.pallas_call(
            kernel,
            out_shape=out_shape,
            grid=(N // nb,),
            in_specs=in_specs,
            out_specs=out_spec,
            scratch_shapes=scratch,
            compiler_params=pltpu.CompilerParams(
                dimension_semantics=("parallel",)),
        )(*in_arrays)
        if fused:
            out = out.reshape(N, Ho, Wo, D)
        return jnp.transpose(out, (0, 3, 1, 2))                    # NHWC -> NCHW

    try:
        return jax.block_until_ready(run(fused=True))
    except Exception:
        # Portability fallback: per-tap matmuls + (Ho, Wo, D) stores if the
        # fused (lane-concat / lane-dense-store) path does not lower on this
        # Mosaic toolchain.
        return jax.block_until_ready(run(fused=False))


# ----------------------------------------------------------------------------
# Deterministic parameter init (shapes follow the PyTorch module __init__)
# ----------------------------------------------------------------------------
def init_params(key, in_channel, depth, stride):
    keys = iter(jax.random.split(key, 32))
    nrm = lambda shape, s=0.1: s * jax.random.normal(next(keys), shape, jnp.float32)
    uni = lambda shape, lo, hi: jax.random.uniform(next(keys), shape, jnp.float32, lo, hi)

    def bn_params(c):
        return {"g": uni((c,), 0.5, 1.5), "b": nrm((c,)),
                "m": nrm((c,)), "v": uni((c,), 0.5, 1.5)}

    p = {"w1": nrm((depth, in_channel, 3, 3)),
         "w2": nrm((depth, depth, 3, 3)),
         "prelu": uni((depth,), 0.1, 0.4)}
    for name, c in (("bn0", in_channel), ("bn1", depth), ("bn2", depth)):
        bp = bn_params(c)
        for k, v in bp.items():
            p[f"{name}_{k}"] = v
    if stride == 2:
        p["wsc"] = nrm((depth, in_channel, 1, 1))
        bp = bn_params(depth)
        for k, v in bp.items():
            p[f"bnsc_{k}"] = v
    return p


# ----------------------------------------------------------------------------
# Pure-JAX reference (for verification only)
# ----------------------------------------------------------------------------
def reference_forward(x_nchw, p, stride):
    x = jnp.transpose(x_nchw, (0, 2, 3, 1)).astype(jnp.float32)

    def bn(h, pre):
        g, b, m, v = p[pre + "_g"], p[pre + "_b"], p[pre + "_m"], p[pre + "_v"]
        return (h - m) * (g / jnp.sqrt(v + _EPS)) + b

    def conv(h, w_oihw, s, pad):
        w = jnp.transpose(w_oihw, (2, 3, 1, 0))
        return jax.lax.conv_general_dilated(
            h, w, (s, s), ((pad, pad), (pad, pad)),
            dimension_numbers=("NHWC", "HWIO", "NHWC"),
            precision=jax.lax.Precision.HIGHEST)

    h = bn(x, "bn0")
    h = conv(h, p["w1"], 1, 1)
    h = bn(h, "bn1")
    h = jnp.where(h > 0, h, h * p["prelu"])
    h = conv(h, p["w2"], stride, 1)
    res = bn(h, "bn2")
    if stride == 2:
        sc = bn(conv(x, p["wsc"], 2, 0), "bnsc")
    else:
        sc = x
    return jnp.transpose(res + sc, (0, 3, 1, 2))


# ----------------------------------------------------------------------------
if __name__ == "__main__":
    key = jax.random.PRNGKey(0)
    kx, kp1, kp2 = jax.random.split(key, 3)

    # Tolerance note: the kernel feeds the MXU bf16 operands (per perf
    # guidance) while the reference uses f32 Precision.HIGHEST, so atol is
    # slightly wider than pure-f32 would need.
    RTOL, ATOL = 2e-2, 4e-2

    # --- stride = 2 block (Conv1x1 + BN shortcut), 1 image/step, grid of 2 ---
    N, Cin, H, W, D = 2, 8, 16, 16, 16
    x = jax.random.normal(kx, (N, Cin, H, W), jnp.float32)          # NCHW
    p2 = init_params(kp1, Cin, D, stride=2)
    y2 = jax.block_until_ready(bottleneck_ir_forward(x, p2, stride=2))
    r2 = reference_forward(x, p2, 2)
    assert y2.shape == (N, D, H // 2, W // 2)
    assert jnp.allclose(y2, r2, rtol=RTOL, atol=ATOL), float(jnp.max(jnp.abs(y2 - r2)))

    # --- stride = 1 block (identity shortcut), 2 images per grid step --------
    x1 = jax.random.normal(kx, (N, D, H, W), jnp.float32)
    p1 = init_params(kp2, D, D, stride=1)
    y1 = jax.block_until_ready(
        bottleneck_ir_forward(x1, p1, stride=1, batch_block=2))
    r1 = reference_forward(x1, p1, 1)
    assert y1.shape == (N, D, H, W)
    assert jnp.allclose(y1, r1, rtol=RTOL, atol=ATOL), float(jnp.max(jnp.abs(y1 - r1)))

    print("KERNEL_OK")
</pallas_src>

<mosaic_0001>
module attributes {stable_mosaic.version = 11 : i64} {
  func.func @kernel(%arg0: i32, %arg1: memref<1x16x16x8xf32, #tpu.memory_space<vmem>>, %arg2: memref<1x8x8x8xf32, #tpu.memory_space<vmem>>, %arg3: memref<3x24x16xbf16, #tpu.memory_space<vmem>>, %arg4: memref<3x48x16xbf16, #tpu.memory_space<vmem>>, %arg5: memref<8x16xbf16, #tpu.memory_space<vmem>>, %arg6: memref<2x8xf32, #tpu.memory_space<vmem>>, %arg7: memref<4x16xf32, #tpu.memory_space<vmem>>, %arg8: memref<1x8x128xf32, #tpu.memory_space<vmem>>, %arg9: memref<1x18x18x8xf32, #tpu.memory_space<vmem>>, %arg10: memref<1x18x18x16xf32, #tpu.memory_space<vmem>>, %arg11: memref<1x9x18x16xf32, #tpu.memory_space<vmem>>, %arg12: memref<1x9x18x16xf32, #tpu.memory_space<vmem>>, %arg13: memref<1x9x9x16xf32, #tpu.memory_space<vmem>>, %arg14: memref<1x9x9x16xf32, #tpu.memory_space<vmem>>, %arg15: memref<1x9x9x16xf32, #tpu.memory_space<vmem>>, %arg16: memref<1x9x9x16xf32, #tpu.memory_space<vmem>>) attributes {dimension_semantics = [#tpu.dimension_semantics<parallel>], iteration_bounds = array<i64: 2>, scalar_prefetch = 0 : i64, scratch_operands = 8 : i64, tpu.core_type = #tpu.core_type<tc>, window_params = [{transform_indices = @transform_0, window_bounds = array<i64: 1, 16, 16, 8>}, {transform_indices = @transform_1, window_bounds = array<i64: 1, 8, 8, 8>}, {pipeline_mode = #tpu.pipeline_mode<synchronous>, transform_indices = @transform_2, window_bounds = array<i64: 3, 24, 16>}, {pipeline_mode = #tpu.pipeline_mode<synchronous>, transform_indices = @transform_3, window_bounds = array<i64: 3, 48, 16>}, {pipeline_mode = #tpu.pipeline_mode<synchronous>, transform_indices = @transform_4, window_bounds = array<i64: 8, 16>}, {pipeline_mode = #tpu.pipeline_mode<synchronous>, transform_indices = @transform_5, window_bounds = array<i64: 2, 8>}, {pipeline_mode = #tpu.pipeline_mode<synchronous>, transform_indices = @transform_6, window_bounds = array<i64: 4, 16>}, {transform_indices = @transform_7, window_bounds = array<i64: 1, 8, 128>}]} {
    %c0 = arith.constant 0 : index
    %c0_0 = arith.constant 0 : index
    %0 = vector.load %arg6[%c0, %c0_0] : memref<2x8xf32, #tpu.memory_space<vmem>>, vector<2x8xf32>
    %c0_1 = arith.constant 0 : index
    %c0_2 = arith.constant 0 : index
    %1 = vector.load %arg7[%c0_1, %c0_2] : memref<4x16xf32, #tpu.memory_space<vmem>>, vector<4x16xf32>
    %2 = vector.extract_strided_slice %0 {offsets = [0, 0], sizes = [1, 8], strides = [1, 1]} : vector<2x8xf32> to vector<1x8xf32>
    %3 = vector.shape_cast %2 : vector<1x8xf32> to vector<1x1x1x8xf32>
    %4 = vector.extract_strided_slice %0 {offsets = [1, 0], sizes = [1, 8], strides = [1, 1]} : vector<2x8xf32> to vector<1x8xf32>
    %5 = vector.shape_cast %4 : vector<1x8xf32> to vector<1x1x1x8xf32>
    %6 = vector.extract_strided_slice %1 {offsets = [0, 0], sizes = [1, 16], strides = [1, 1]} : vector<4x16xf32> to vector<1x16xf32>
    %7 = vector.extract_strided_slice %1 {offsets = [1, 0], sizes = [1, 16], strides = [1, 1]} : vector<4x16xf32> to vector<1x16xf32>
    %8 = vector.extract_strided_slice %1 {offsets = [2, 0], sizes = [1, 16], strides = [1, 1]} : vector<4x16xf32> to vector<1x16xf32>
    %9 = vector.extract_strided_slice %1 {offsets = [3, 0], sizes = [1, 16], strides = [1, 1]} : vector<4x16xf32> to vector<1x16xf32>
    %c0_3 = arith.constant 0 : index
    %c0_4 = arith.constant 0 : index
    %c0_5 = arith.constant 0 : index
    %c0_6 = arith.constant 0 : index
    %10 = vector.load %arg1[%c0_3, %c0_4, %c0_5, %c0_6] : memref<1x16x16x8xf32, #tpu.memory_space<vmem>>, vector<1x16x16x8xf32>
    %cst = arith.constant 0.000000e+00 : f32
    %11 = vector.broadcast %cst : f32 to vector<1x1x18x8xf32>
    %c0_7 = arith.constant 0 : index
    %c0_8 = arith.constant 0 : index
    %c0_9 = arith.constant 0 : index
    %c0_10 = arith.constant 0 : index
    %12 = vector.load %arg9[%c0_7, %c0_8, %c0_9, %c0_10] : memref<1x18x18x8xf32, #tpu.memory_space<vmem>>, vector<1x1x18x8xf32>
    tpu.vector_store %arg9[%c0_7, %c0_8, %c0_9, %c0_10], %11 {strides = array<i32>} : memref<1x18x18x8xf32, #tpu.memory_space<vmem>>, vector<1x1x18x8xf32>,
    %cst_11 = arith.constant 0.000000e+00 : f32
    %13 = vector.broadcast %cst_11 : f32 to vector<1x1x18x8xf32>
    %c0_12 = arith.constant 0 : index
    %c17 = arith.constant 17 : index
    %c0_13 = arith.constant 0 : index
    %c0_14 = arith.constant 0 : index
    %14 = vector.load %arg9[%c0_12, %c17, %c0_13, %c0_14] : memref<1x18x18x8xf32, #tpu.memory_space<vmem>>, vector<1x1x18x8xf32>
    tpu.vector_store %arg9[%c0_12, %c17, %c0_13, %c0_14], %13 {strides = array<i32>} : memref<1x18x18x8xf32, #tpu.memory_space<vmem>>, vector<1x1x18x8xf32>,
    %cst_15 = arith.constant 0.000000e+00 : f32
    %15 = vector.broadcast %cst_15 : f32 to vector<1x16x1x8xf32>
    %c0_16 = arith.constant 0 : index
    %c1 = arith.constant 1 : index
    %c0_17 = arith.constant 0 : index
    %c0_18 = arith.constant 0 : index
    %16 = vector.load %arg9[%c0_16, %c1, %c0_17, %c0_18] : memref<1x18x18x8xf32, #tpu.memory_space<vmem>>, vector<1x16x1x8xf32>
    tpu.vector_store %arg9[%c0_16, %c1, %c0_17, %c0_18], %15 {strides = array<i32>} : memref<1x18x18x8xf32, #tpu.memory_space<vmem>>, vector<1x16x1x8xf32>,
    %cst_19 = arith.constant 0.000000e+00 : f32
    %17 = vector.broadcast %cst_19 : f32 to vector<1x16x1x8xf32>
    %c0_20 = arith.constant 0 : index
    %c1_21 = arith.constant 1 : index
    %c17_22 = arith.constant 17 : index
    %c0_23 = arith.constant 0 : index
    %18 = vector.load %arg9[%c0_20, %c1_21, %c17_22, %c0_23] : memref<1x18x18x8xf32, #tpu.memory_space<vmem>>, vector<1x16x1x8xf32>
    tpu.vector_store %arg9[%c0_20, %c1_21, %c17_22, %c0_23], %17 {strides = array<i32>} : memref<1x18x18x8xf32, #tpu.memory_space<vmem>>, vector<1x16x1x8xf32>,
    %19 = vector.broadcast %3 : vector<1x1x1x8xf32> to vector<1x16x16x8xf32>
    %20 = arith.mulf %10, %19 : vector<1x16x16x8xf32>
    %21 = vector.broadcast %5 : vector<1x1x1x8xf32> to vector<1x16x16x8xf32>
    %22 = arith.addf %20, %21 : vector<1x16x16x8xf32>
    %c0_24 = arith.constant 0 : index
    %c1_25 = arith.constant 1 : index
    %c1_26 = arith.constant 1 : index
    %c0_27 = arith.constant 0 : index
    %23 = vector.load %arg9[%c0_24, %c1_25, %c1_26, %c0_27] : memref<1x18x18x8xf32, #tpu.memory_space<vmem>>, vector<1x16x16x8xf32>
    tpu.vector_store %arg9[%c0_24, %c1_25, %c1_26, %c0_27], %22 {strides = array<i32>} : memref<1x18x18x8xf32, #tpu.memory_space<vmem>>, vector<1x16x16x8xf32>,
    %c0_28 = arith.constant 0 : index
    %c0_29 = arith.constant 0 : index
    %c0_30 = arith.constant 0 : index
    %c0_31 = arith.constant 0 : index
    %24 = vector.load %arg9[%c0_28, %c0_29, %c0_30, %c0_31] : memref<1x18x18x8xf32, #tpu.memory_space<vmem>>, vector<1x16x16x8xf32>
    %25 = vector.shape_cast %24 : vector<1x16x16x8xf32> to vector<256x8xf32>
    %c0_32 = arith.constant 0 : index
    %c0_33 = arith.constant 0 : index
    %c1_34 = arith.constant 1 : index
    %c0_35 = arith.constant 0 : index
    %26 = vector.load %arg9[%c0_32, %c0_33, %c1_34, %c0_35] : memref<1x18x18x8xf32, #tpu.memory_space<vmem>>, vector<1x16x16x8xf32>
    %27 = vector.shape_cast %26 : vector<1x16x16x8xf32> to vector<256x8xf32>
    %c0_36 = arith.constant 0 : index
    %c0_37 = arith.constant 0 : index
    %c2 = arith.constant 2 : index
    %c0_38 = arith.constant 0 : index
    %28 = vector.load %arg9[%c0_36, %c0_37, %c2, %c0_38] : memref<1x18x18x8xf32, #tpu.memory_space<vmem>>, vector<1x16x16x8xf32>
    %29 = vector.shape_cast %28 : vector<1x16x16x8xf32> to vector<256x8xf32>
    %c0_39 = arith.constant 0 : index
    %c0_40 = arith.constant 0 : index
    %c0_41 = arith.constant 0 : index
    %30 = vector.load %arg3[%c0_39, %c0_40, %c0_41] : memref<3x24x16xbf16, #tpu.memory_space<vmem>>, vector<1x24x16xbf16>
    %31 = vector.shape_cast %30 : vector<1x24x16xbf16> to vector<24x16xbf16>
    %32 = tpu.concatenate %25, %27, %29 in 1 : vector<256x8xf32>, vector<256x8xf32>, vector<256x8xf32> -> vector<256x24xf32>
    %33 = arith.truncf %32 : vector<256x24xf32> to vector<256x24xbf16>
    %cst_42 = arith.constant dense<0.000000e+00> : vector<256x16xf32>
    %34 = tpu.matmul %33, %31, %cst_42 {dimension_numbers = #tpu.dot_dimension_numbers<[1], [0], [0], [1], [0, 0, 1, 1], [], []>} : vector<256x24xbf16>, vector<24x16xbf16>, vector<256x16xf32> -> vector<256x16xf32>
    %c0_43 = arith.constant 0 : index
    %c1_44 = arith.constant 1 : index
    %c0_45 = arith.constant 0 : index
    %c0_46 = arith.constant 0 : index
    %35 = vector.load %arg9[%c0_43, %c1_44, %c0_45, %c0_46] : memref<1x18x18x8xf32, #tpu.memory_space<vmem>>, vector<1x16x16x8xf32>
    %36 = vector.shape_cast %35 : vector<1x16x16x8xf32> to vector<256x8xf32>
    %c0_47 = arith.constant 0 : index
    %c1_48 = arith.constant 1 : index
    %c1_49 = arith.constant 1 : index
    %c0_50 = arith.constant 0 : index
    %37 = vector.load %arg9[%c0_47, %c1_48, %c1_49, %c0_50] : memref<1x18x18x8xf32, #tpu.memory_space<vmem>>, vector<1x16x16x8xf32>
    %38 = vector.shape_cast %37 : vector<1x16x16x8xf32> to vector<256x8xf32>
    %c0_51 = arith.constant 0 : index
    %c1_52 = arith.constant 1 : index
    %c2_53 = arith.constant 2 : index
    %c0_54 = arith.constant 0 : index
    %39 = vector.load %arg9[%c0_51, %c1_52, %c2_53, %c0_54] : memref<1x18x18x8xf32, #tpu.memory_space<vmem>>, vector<1x16x16x8xf32>
    %40 = vector.shape_cast %39 : vector<1x16x16x8xf32> to vector<256x8xf32>
    %c1_55 = arith.constant 1 : index
    %c0_56 = arith.constant 0 : index
    %c0_57 = arith.constant 0 : index
    %41 = vector.load %arg3[%c1_55, %c0_56, %c0_57] : memref<3x24x16xbf16, #tpu.memory_space<vmem>>, vector<1x24x16xbf16>
    %42 = vector.shape_cast %41 : vector<1x24x16xbf16> to vector<24x16xbf16>
    %43 = tpu.concatenate %36, %38, %40 in 1 : vector<256x8xf32>, vector<256x8xf32>, vector<256x8xf32> -> vector<256x24xf32>
    %44 = arith.truncf %43 : vector<256x24xf32> to vector<256x24xbf16>
    %cst_58 = arith.constant dense<0.000000e+00> : vector<256x16xf32>
    %45 = tpu.matmul %44, %42, %cst_58 {dimension_numbers = #tpu.dot_dimension_numbers<[1], [0], [0], [1], [0, 0, 1, 1], [], []>} : vector<256x24xbf16>, vector<24x16xbf16>, vector<256x16xf32> -> vector<256x16xf32>
    %46 = arith.addf %34, %45 : vector<256x16xf32>
    %c0_59 = arith.constant 0 : index
    %c2_60 = arith.constant 2 : index
    %c0_61 = arith.constant 0 : index
    %c0_62 = arith.constant 0 : index
    %47 = vector.load %arg9[%c0_59, %c2_60, %c0_61, %c0_62] : memref<1x18x18x8xf32, #tpu.memory_space<vmem>>, vector<1x16x16x8xf32>
    %48 = vector.shape_cast %47 : vector<1x16x16x8xf32> to vector<256x8xf32>
    %c0_63 = arith.constant 0 : index
    %c2_64 = arith.constant 2 : index
    %c1_65 = arith.constant 1 : index
    %c0_66 = arith.constant 0 : index
    %49 = vector.load %arg9[%c0_63, %c2_64, %c1_65, %c0_66] : memref<1x18x18x8xf32, #tpu.memory_space<vmem>>, vector<1x16x16x8xf32>
    %50 = vector.shape_cast %49 : vector<1x16x16x8xf32> to vector<256x8xf32>
    %c0_67 = arith.constant 0 : index
    %c2_68 = arith.constant 2 : index
    %c2_69 = arith.constant 2 : index
    %c0_70 = arith.constant 0 : index
    %51 = vector.load %arg9[%c0_67, %c2_68, %c2_69, %c0_70] : memref<1x18x18x8xf32, #tpu.memory_space<vmem>>, vector<1x16x16x8xf32>
    %52 = vector.shape_cast %51 : vector<1x16x16x8xf32> to vector<256x8xf32>
    %c2_71 = arith.constant 2 : index
    %c0_72 = arith.constant 0 : index
    %c0_73 = arith.constant 0 : index
    %53 = vector.load %arg3[%c2_71, %c0_72, %c0_73] : memref<3x24x16xbf16, #tpu.memory_space<vmem>>, vector<1x24x16xbf16>
    %54 = vector.shape_cast %53 : vector<1x24x16xbf16> to vector<24x16xbf16>
    %55 = tpu.concatenate %48, %50, %52 in 1 : vector<256x8xf32>, vector<256x8xf32>, vector<256x8xf32> -> vector<256x24xf32>
    %56 = arith.truncf %55 : vector<256x24xf32> to vector<256x24xbf16>
    %cst_74 = arith.constant dense<0.000000e+00> : vector<256x16xf32>
    %57 = tpu.matmul %56, %54, %cst_74 {dimension_numbers = #tpu.dot_dimension_numbers<[1], [0], [0], [1], [0, 0, 1, 1], [], []>} : vector<256x24xbf16>, vector<24x16xbf16>, vector<256x16xf32> -> vector<256x16xf32>
    %58 = arith.addf %46, %57 : vector<256x16xf32>
    %59 = vector.broadcast %6 : vector<1x16xf32> to vector<256x16xf32>
    %60 = arith.addf %58, %59 : vector<256x16xf32>
    %cst_75 = arith.constant 0.000000e+00 : f32
    %61 = vector.broadcast %cst_75 : f32 to vector<256x16xf32>
    %62 = arith.cmpf ogt, %60, %61 : vector<256x16xf32>
    %63 = vector.broadcast %7 : vector<1x16xf32> to vector<256x16xf32>
    %64 = arith.mulf %60, %63 : vector<256x16xf32>
    %65 = arith.select %62, %60, %64 : vector<256x16xi1>, vector<256x16xf32>
    %cst_76 = arith.constant 0.000000e+00 : f32
    %66 = vector.broadcast %cst_76 : f32 to vector<1x1x18x16xf32>
    %c0_77 = arith.constant 0 : index
    %c0_78 = arith.constant 0 : index
    %c0_79 = arith.constant 0 : index
    %c0_80 = arith.constant 0 : index
    %67 = vector.load %arg10[%c0_77, %c0_78, %c0_79, %c0_80] : memref<1x18x18x16xf32, #tpu.memory_space<vmem>>, vector<1x1x18x16xf32>
    tpu.vector_store %arg10[%c0_77, %c0_78, %c0_79, %c0_80], %66 {strides = array<i32>} : memref<1x18x18x16xf32, #tpu.memory_space<vmem>>, vector<1x1x18x16xf32>,
    %cst_81 = arith.constant 0.000000e+00 : f32
    %68 = vector.broadcast %cst_81 : f32 to vector<1x1x18x16xf32>
    %c0_82 = arith.constant 0 : index
    %c17_83 = arith.constant 17 : index
    %c0_84 = arith.constant 0 : index
    %c0_85 = arith.constant 0 : index
    %69 = vector.load %arg10[%c0_82, %c17_83, %c0_84, %c0_85] : memref<1x18x18x16xf32, #tpu.memory_space<vmem>>, vector<1x1x18x16xf32>
    tpu.vector_store %arg10[%c0_82, %c17_83, %c0_84, %c0_85], %68 {strides = array<i32>} : memref<1x18x18x16xf32, #tpu.memory_space<vmem>>, vector<1x1x18x16xf32>,
    %cst_86 = arith.constant 0.000000e+00 : f32
    %70 = vector.broadcast %cst_86 : f32 to vector<1x16x1x16xf32>
    %c0_87 = arith.constant 0 : index
    %c1_88 = arith.constant 1 : index
    %c0_89 = arith.constant 0 : index
    %c0_90 = arith.constant 0 : index
    %71 = vector.load %arg10[%c0_87, %c1_88, %c0_89, %c0_90] : memref<1x18x18x16xf32, #tpu.memory_space<vmem>>, vector<1x16x1x16xf32>
    tpu.vector_store %arg10[%c0_87, %c1_88, %c0_89, %c0_90], %70 {strides = array<i32>} : memref<1x18x18x16xf32, #tpu.memory_space<vmem>>, vector<1x16x1x16xf32>,
    %cst_91 = arith.constant 0.000000e+00 : f32
    %72 = vector.broadcast %cst_91 : f32 to vector<1x16x1x16xf32>
    %c0_92 = arith.constant 0 : index
    %c1_93 = arith.constant 1 : index
    %c17_94 = arith.constant 17 : index
    %c0_95 = arith.constant 0 : index
    %73 = vector.load %arg10[%c0_92, %c1_93, %c17_94, %c0_95] : memref<1x18x18x16xf32, #tpu.memory_space<vmem>>, vector<1x16x1x16xf32>
    tpu.vector_store %arg10[%c0_92, %c1_93, %c17_94, %c0_95], %72 {strides = array<i32>} : memref<1x18x18x16xf32, #tpu.memory_space<vmem>>, vector<1x16x1x16xf32>,
    %74 = vector.shape_cast %65 : vector<256x16xf32> to vector<1x16x16x16xf32>
    %c0_96 = arith.constant 0 : index
    %c1_97 = arith.constant 1 : index
    %c1_98 = arith.constant 1 : index
    %c0_99 = arith.constant 0 : index
    %75 = vector.load %arg10[%c0_96, %c1_97, %c1_98, %c0_99] : memref<1x18x18x16xf32, #tpu.memory_space<vmem>>, vector<1x16x16x16xf32>
    tpu.vector_store %arg10[%c0_96, %c1_97, %c1_98, %c0_99], %74 {strides = array<i32>} : memref<1x18x18x16xf32, #tpu.memory_space<vmem>>, vector<1x16x16x16xf32>,
    %c0_100 = arith.constant 0 : index
    %c0_101 = arith.constant 0 : index
    %c0_102 = arith.constant 0 : index
    %c0_103 = arith.constant 0 : index
    %76 = tpu.strided_load %arg10[%c0_100, %c0_101, %c0_102, %c0_103] {strides = array<i32: 1, 2, 1, 1>} : memref<1x18x18x16xf32, #tpu.memory_space<vmem>>, vector<1x9x18x16xf32>
    %c0_104 = arith.constant 0 : index
    %c0_105 = arith.constant 0 : index
    %c0_106 = arith.constant 0 : index
    %c0_107 = arith.constant 0 : index
    %77 = vector.load %arg11[%c0_104, %c0_105, %c0_106, %c0_107] : memref<1x9x18x16xf32, #tpu.memory_space<vmem>>, vector<1x9x18x16xf32>
    tpu.vector_store %arg11[%c0_104, %c0_105, %c0_106, %c0_107], %76 {strides = array<i32>} : memref<1x9x18x16xf32, #tpu.memory_space<vmem>>, vector<1x9x18x16xf32>,
    %c0_108 = arith.constant 0 : index
    %c1_109 = arith.constant 1 : index
    %c0_110 = arith.constant 0 : index
    %c0_111 = arith.constant 0 : index
    %78 = tpu.strided_load %arg10[%c0_108, %c1_109, %c0_110, %c0_111] {strides = array<i32: 1, 2, 1, 1>} : memref<1x18x18x16xf32, #tpu.memory_space<vmem>>, vector<1x9x18x16xf32>
    %c0_112 = arith.constant 0 : index
    %c0_113 = arith.constant 0 : index
    %c0_114 = arith.constant 0 : index
    %c0_115 = arith.constant 0 : index
    %79 = vector.load %arg12[%c0_112, %c0_113, %c0_114, %c0_115] : memref<1x9x18x16xf32, #tpu.memory_space<vmem>>, vector<1x9x18x16xf32>
    tpu.vector_store %arg12[%c0_112, %c0_113, %c0_114, %c0_115], %78 {strides = array<i32>} : memref<1x9x18x16xf32, #tpu.memory_space<vmem>>, vector<1x9x18x16xf32>,
    %c0_116 = arith.constant 0 : index
    %c0_117 = arith.constant 0 : index
    %c0_118 = arith.constant 0 : index
    %c0_119 = arith.constant 0 : index
    %80 = tpu.strided_load %arg11[%c0_116, %c0_117, %c0_118, %c0_119] {strides = array<i32: 1, 1, 2, 1>} : memref<1x9x18x16xf32, #tpu.memory_space<vmem>>, vector<1x9x9x16xf32>
    %c0_120 = arith.constant 0 : index
    %c0_121 = arith.constant 0 : index
    %c0_122 = arith.constant 0 : index
    %c0_123 = arith.constant 0 : index
    %81 = vector.load %arg13[%c0_120, %c0_121, %c0_122, %c0_123] : memref<1x9x9x16xf32, #tpu.memory_space<vmem>>, vector<1x9x9x16xf32>
    tpu.vector_store %arg13[%c0_120, %c0_121, %c0_122, %c0_123], %80 {strides = array<i32>} : memref<1x9x9x16xf32, #tpu.memory_space<vmem>>, vector<1x9x9x16xf32>,
    %c0_124 = arith.constant 0 : index
    %c0_125 = arith.constant 0 : index
    %c1_126 = arith.constant 1 : index
    %c0_127 = arith.constant 0 : index
    %82 = tpu.strided_load %arg11[%c0_124, %c0_125, %c1_126, %c0_127] {strides = array<i32: 1, 1, 2, 1>} : memref<1x9x18x16xf32, #tpu.memory_space<vmem>>, vector<1x9x9x16xf32>
    %c0_128 = arith.constant 0 : index
    %c0_129 = arith.constant 0 : index
    %c0_130 = arith.constant 0 : index
    %c0_131 = arith.constant 0 : index
    %83 = vector.load %arg14[%c0_128, %c0_129, %c0_130, %c0_131] : memref<1x9x9x16xf32, #tpu.memory_space<vmem>>, vector<1x9x9x16xf32>
    tpu.vector_store %arg14[%c0_128, %c0_129, %c0_130, %c0_131], %82 {strides = array<i32>} : memref<1x9x9x16xf32, #tpu.memory_space<vmem>>, vector<1x9x9x16xf32>,
    %c0_132 = arith.constant 0 : index
    %c0_133 = arith.constant 0 : index
    %c0_134 = arith.constant 0 : index
    %c0_135 = arith.constant 0 : index
    %84 = tpu.strided_load %arg12[%c0_132, %c0_133, %c0_134, %c0_135] {strides = array<i32: 1, 1, 2, 1>} : memref<1x9x18x16xf32, #tpu.memory_space<vmem>>, vector<1x9x9x16xf32>
    %c0_136 = arith.constant 0 : index
    %c0_137 = arith.constant 0 : index
    %c0_138 = arith.constant 0 : index
    %c0_139 = arith.constant 0 : index
    %85 = vector.load %arg15[%c0_136, %c0_137, %c0_138, %c0_139] : memref<1x9x9x16xf32, #tpu.memory_space<vmem>>, vector<1x9x9x16xf32>
    tpu.vector_store %arg15[%c0_136, %c0_137, %c0_138, %c0_139], %84 {strides = array<i32>} : memref<1x9x9x16xf32, #tpu.memory_space<vmem>>, vector<1x9x9x16xf32>,
    %c0_140 = arith.constant 0 : index
    %c0_141 = arith.constant 0 : index
    %c1_142 = arith.constant 1 : index
    %c0_143 = arith.constant 0 : index
    %86 = tpu.strided_load %arg12[%c0_140, %c0_141, %c1_142, %c0_143] {strides = array<i32: 1, 1, 2, 1>} : memref<1x9x18x16xf32, #tpu.memory_space<vmem>>, vector<1x9x9x16xf32>
    %c0_144 = arith.constant 0 : index
    %c0_145 = arith.constant 0 : index
    %c0_146 = arith.constant 0 : index
    %c0_147 = arith.constant 0 : index
    %87 = vector.load %arg16[%c0_144, %c0_145, %c0_146, %c0_147] : memref<1x9x9x16xf32, #tpu.memory_space<vmem>>, vector<1x9x9x16xf32>
    tpu.vector_store %arg16[%c0_144, %c0_145, %c0_146, %c0_147], %86 {strides = array<i32>} : memref<1x9x9x16xf32, #tpu.memory_space<vmem>>, vector<1x9x9x16xf32>,
    %c0_148 = arith.constant 0 : index
    %c0_149 = arith.constant 0 : index
    %c0_150 = arith.constant 0 : index
    %c0_151 = arith.constant 0 : index
    %88 = vector.load %arg13[%c0_148, %c0_149, %c0_150, %c0_151] : memref<1x9x9x16xf32, #tpu.memory_space<vmem>>, vector<1x8x8x16xf32>
    %89 = vector.shape_cast %88 : vector<1x8x8x16xf32> to vector<64x16xf32>
    %c0_152 = arith.constant 0 : index
    %c0_153 = arith.constant 0 : index
    %c0_154 = arith.constant 0 : index
    %c0_155 = arith.constant 0 : index
    %90 = vector.load %arg14[%c0_152, %c0_153, %c0_154, %c0_155] : memref<1x9x9x16xf32, #tpu.memory_space<vmem>>, vector<1x8x8x16xf32>
    %91 = vector.shape_cast %90 : vector<1x8x8x16xf32> to vector<64x16xf32>
    %c0_156 = arith.constant 0 : index
    %c0_157 = arith.constant 0 : index
    %c1_158 = arith.constant 1 : index
    %c0_159 = arith.constant 0 : index
    %92 = vector.load %arg13[%c0_156, %c0_157, %c1_158, %c0_159] : memref<1x9x9x16xf32, #tpu.memory_space<vmem>>, vector<1x8x8x16xf32>
    %93 = vector.shape_cast %92 : vector<1x8x8x16xf32> to vector<64x16xf32>
    %c0_160 = arith.constant 0 : index
    %c0_161 = arith.constant 0 : index
    %c0_162 = arith.constant 0 : index
    %94 = vector.load %arg4[%c0_160, %c0_161, %c0_162] : memref<3x48x16xbf16, #tpu.memory_space<vmem>>, vector<1x48x16xbf16>
    %95 = vector.shape_cast %94 : vector<1x48x16xbf16> to vector<48x16xbf16>
    %96 = tpu.concatenate %89, %91, %93 in 1 : vector<64x16xf32>, vector<64x16xf32>, vector<64x16xf32> -> vector<64x48xf32>
    %97 = arith.truncf %96 : vector<64x48xf32> to vector<64x48xbf16>
    %cst_163 = arith.constant dense<0.000000e+00> : vector<64x16xf32>
    %98 = tpu.matmul %97, %95, %cst_163 {dimension_numbers = #tpu.dot_dimension_numbers<[1], [0], [0], [1], [0, 0, 1, 1], [], []>} : vector<64x48xbf16>, vector<48x16xbf16>, vector<64x16xf32> -> vector<64x16xf32>
    %c0_164 = arith.constant 0 : index
    %c0_165 = arith.constant 0 : index
    %c0_166 = arith.constant 0 : index
    %c0_167 = arith.constant 0 : index
    %99 = vector.load %arg15[%c0_164, %c0_165, %c0_166, %c0_167] : memref<1x9x9x16xf32, #tpu.memory_space<vmem>>, vector<1x8x8x16xf32>
    %100 = vector.shape_cast %99 : vector<1x8x8x16xf32> to vector<64x16xf32>
    %c0_168 = arith.constant 0 : index
    %c0_169 = arith.constant 0 : index
    %c0_170 = arith.constant 0 : index
    %c0_171 = arith.constant 0 : index
    %101 = vector.load %arg16[%c0_168, %c0_169, %c0_170, %c0_171] : memref<1x9x9x16xf32, #tpu.memory_space<vmem>>, vector<1x8x8x16xf32>
    %102 = vector.shape_cast %101 : vector<1x8x8x16xf32> to vector<64x16xf32>
    %c0_172 = arith.constant 0 : index
    %c0_173 = arith.constant 0 : index
    %c1_174 = arith.constant 1 : index
    %c0_175 = arith.constant 0 : index
    %103 = vector.load %arg15[%c0_172, %c0_173, %c1_174, %c0_175] : memref<1x9x9x16xf32, #tpu.memory_space<vmem>>, vector<1x8x8x16xf32>
    %104 = vector.shape_cast %103 : vector<1x8x8x16xf32> to vector<64x16xf32>
    %c1_176 = arith.constant 1 : index
    %c0_177 = arith.constant 0 : index
    %c0_178 = arith.constant 0 : index
    %105 = vector.load %arg4[%c1_176, %c0_177, %c0_178] : memref<3x48x16xbf16, #tpu.memory_space<vmem>>, vector<1x48x16xbf16>
    %106 = vector.shape_cast %105 : vector<1x48x16xbf16> to vector<48x16xbf16>
    %107 = tpu.concatenate %100, %102, %104 in 1 : vector<64x16xf32>, vector<64x16xf32>, vector<64x16xf32> -> vector<64x48xf32>
    %108 = arith.truncf %107 : vector<64x48xf32> to vector<64x48xbf16>
    %cst_179 = arith.constant dense<0.000000e+00> : vector<64x16xf32>
    %109 = tpu.matmul %108, %106, %cst_179 {dimension_numbers = #tpu.dot_dimension_numbers<[1], [0], [0], [1], [0, 0, 1, 1], [], []>} : vector<64x48xbf16>, vector<48x16xbf16>, vector<64x16xf32> -> vector<64x16xf32>
    %110 = arith.addf %98, %109 : vector<64x16xf32>
    %c0_180 = arith.constant 0 : index
    %c1_181 = arith.constant 1 : index
    %c0_182 = arith.constant 0 : index
    %c0_183 = arith.constant 0 : index
    %111 = vector.load %arg13[%c0_180, %c1_181, %c0_182, %c0_183] : memref<1x9x9x16xf32, #tpu.memory_space<vmem>>, vector<1x8x8x16xf32>
    %112 = vector.shape_cast %111 : vector<1x8x8x16xf32> to vector<64x16xf32>
    %c0_184 = arith.constant 0 : index
    %c1_185 = arith.constant 1 : index
    %c0_186 = arith.constant 0 : index
    %c0_187 = arith.constant 0 : index
    %113 = vector.load %arg14[%c0_184, %c1_185, %c0_186, %c0_187] : memref<1x9x9x16xf32, #tpu.memory_space<vmem>>, vector<1x8x8x16xf32>
    %114 = vector.shape_cast %113 : vector<1x8x8x16xf32> to vector<64x16xf32>
    %c0_188 = arith.constant 0 : index
    %c1_189 = arith.constant 1 : index
    %c1_190 = arith.constant 1 : index
    %c0_191 = arith.constant 0 : index
    %115 = vector.load %arg13[%c0_188, %c1_189, %c1_190, %c0_191] : memref<1x9x9x16xf32, #tpu.memory_space<vmem>>, vector<1x8x8x16xf32>
    %116 = vector.shape_cast %115 : vector<1x8x8x16xf32> to vector<64x16xf32>
    %c2_192 = arith.constant 2 : index
    %c0_193 = arith.constant 0 : index
    %c0_194 = arith.constant 0 : index
    %117 = vector.load %arg4[%c2_192, %c0_193, %c0_194] : memref<3x48x16xbf16, #tpu.memory_space<vmem>>, vector<1x48x16xbf16>
    %118 = vector.shape_cast %117 : vector<1x48x16xbf16> to vector<48x16xbf16>
    %119 = tpu.concatenate %112, %114, %116 in 1 : vector<64x16xf32>, vector<64x16xf32>, vector<64x16xf32> -> vector<64x48xf32>
    %120 = arith.truncf %119 : vector<64x48xf32> to vector<64x48xbf16>
    %cst_195 = arith.constant dense<0.000000e+00> : vector<64x16xf32>
    %121 = tpu.matmul %120, %118, %cst_195 {dimension_numbers = #tpu.dot_dimension_numbers<[1], [0], [0], [1], [0, 0, 1, 1], [], []>} : vector<64x48xbf16>, vector<48x16xbf16>, vector<64x16xf32> -> vector<64x16xf32>
    %122 = arith.addf %110, %121 : vector<64x16xf32>
    %123 = vector.broadcast %8 : vector<1x16xf32> to vector<64x16xf32>
    %124 = arith.addf %122, %123 : vector<64x16xf32>
    %c0_196 = arith.constant 0 : index
    %c0_197 = arith.constant 0 : index
    %c0_198 = arith.constant 0 : index
    %c0_199 = arith.constant 0 : index
    %125 = vector.load %arg2[%c0_196, %c0_197, %c0_198, %c0_199] : memref<1x8x8x8xf32, #tpu.memory_space<vmem>>, vector<1x8x8x8xf32>
    %126 = arith.truncf %125 : vector<1x8x8x8xf32> to vector<1x8x8x8xbf16>
    %127 = vector.shape_cast %126 : vector<1x8x8x8xbf16> to vector<64x8xbf16>
    %c0_200 = arith.constant 0 : index
    %c0_201 = arith.constant 0 : index
    %128 = vector.load %arg5[%c0_200, %c0_201] : memref<8x16xbf16, #tpu.memory_space<vmem>>, vector<8x16xbf16>
    %cst_202 = arith.constant dense<0.000000e+00> : vector<64x16xf32>
    %129 = tpu.matmul %127, %128, %cst_202 {dimension_numbers = #tpu.dot_dimension_numbers<[1], [0], [0], [1], [0, 0, 1, 1], [], []>} : vector<64x8xbf16>, vector<8x16xbf16>, vector<64x16xf32> -> vector<64x16xf32>
    %130 = vector.broadcast %9 : vector<1x16xf32> to vector<64x16xf32>
    %131 = arith.addf %129, %130 : vector<64x16xf32>
    %132 = arith.addf %124, %131 : vector<64x16xf32>
    %133 = vector.shape_cast %132 : vector<64x16xf32> to vector<1x8x128xf32>
    %c0_203 = arith.constant 0 : index
    %c0_204 = arith.constant 0 : index
    %c0_205 = arith.constant 0 : index
    %134 = vector.load %arg8[%c0_203, %c0_204, %c0_205] : memref<1x8x128xf32, #tpu.memory_space<vmem>>, vector<1x8x128xf32>
    tpu.vector_store %arg8[%c0_203, %c0_204, %c0_205], %133 {strides = array<i32>} : memref<1x8x128xf32, #tpu.memory_space<vmem>>, vector<1x8x128xf32>,
    return
  }
  func.func @transform_0(%arg0: i32) -> (i32, i32, i32, i32) {
    %c0_i32 = arith.constant 0 : i32
    %c0_i32_0 = arith.constant 0 : i32
    %c0_i32_1 = arith.constant 0 : i32
    %c0_i32_2 = arith.constant 0 : i32
    return %arg0, %c0_i32, %c0_i32_0, %c0_i32_1 : i32, i32, i32, i32
  }
  func.func @transform_1(%arg0: i32) -> (i32, i32, i32, i32) {
    %c0_i32 = arith.constant 0 : i32
    %c0_i32_0 = arith.constant 0 : i32
    %c0_i32_1 = arith.constant 0 : i32
    %c0_i32_2 = arith.constant 0 : i32
    return %arg0, %c0_i32, %c0_i32_0, %c0_i32_1 : i32, i32, i32, i32
  }
  func.func @transform_2(%arg0: i32) -> (i32, i32, i32) {
    %c0_i32 = arith.constant 0 : i32
    %c0_i32_0 = arith.constant 0 : i32
    %c0_i32_1 = arith.constant 0 : i32
    %c0_i32_2 = arith.constant 0 : i32
    return %c0_i32, %c0_i32_0, %c0_i32_1 : i32, i32, i32
  }
  func.func @transform_3(%arg0: i32) -> (i32, i32, i32) {
    %c0_i32 = arith.constant 0 : i32
    %c0_i32_0 = arith.constant 0 : i32
    %c0_i32_1 = arith.constant 0 : i32
    %c0_i32_2 = arith.constant 0 : i32
    return %c0_i32, %c0_i32_0, %c0_i32_1 : i32, i32, i32
  }
  func.func @transform_4(%arg0: i32) -> (i32, i32) {
    %c0_i32 = arith.constant 0 : i32
    %c0_i32_0 = arith.constant 0 : i32
    %c0_i32_1 = arith.constant 0 : i32
    return %c0_i32, %c0_i32_0 : i32, i32
  }
  func.func @transform_5(%arg0: i32) -> (i32, i32) {
    %c0_i32 = arith.constant 0 : i32
    %c0_i32_0 = arith.constant 0 : i32
    %c0_i32_1 = arith.constant 0 : i32
    return %c0_i32, %c0_i32_0 : i32, i32
  }
  func.func @transform_6(%arg0: i32) -> (i32, i32) {
    %c0_i32 = arith.constant 0 : i32
    %c0_i32_0 = arith.constant 0 : i32
    %c0_i32_1 = arith.constant 0 : i32
    return %c0_i32, %c0_i32_0 : i32, i32
  }
  func.func @transform_7(%arg0: i32) -> (i32, i32, i32) {
    %c0_i32 = arith.constant 0 : i32
    %c0_i32_0 = arith.constant 0 : i32
    %c0_i32_1 = arith.constant 0 : i32
    return %arg0, %c0_i32, %c0_i32_0 : i32, i32, i32
  }
}

module attributes {stable_mosaic.version = 11 : i64} {
  func.func @kernel(%arg0: i32, %arg1: memref<1x16x16x8xf32, #tpu.memory_space<vmem>>, %arg2: memref<1x8x8x8xf32, #tpu.memory_space<vmem>>, %arg3: memref<3x24x16xbf16, #tpu.memory_space<vmem>>, %arg4: memref<3x48x16xbf16, #tpu.memory_space<vmem>>, %arg5: memref<8x16xbf16, #tpu.memory_space<vmem>>, %arg6: memref<2x8xf32, #tpu.memory_space<vmem>>, %arg7: memref<4x16xf32, #tpu.memory_space<vmem>>, %arg8: memref<1x8x8x16xf32, #tpu.memory_space<vmem>>, %arg9: memref<1x18x18x8xf32, #tpu.memory_space<vmem>>, %arg10: memref<1x18x18x16xf32, #tpu.memory_space<vmem>>, %arg11: memref<1x9x18x16xf32, #tpu.memory_space<vmem>>, %arg12: memref<1x9x18x16xf32, #tpu.memory_space<vmem>>, %arg13: memref<1x9x9x16xf32, #tpu.memory_space<vmem>>, %arg14: memref<1x9x9x16xf32, #tpu.memory_space<vmem>>, %arg15: memref<1x9x9x16xf32, #tpu.memory_space<vmem>>, %arg16: memref<1x9x9x16xf32, #tpu.memory_space<vmem>>) attributes {dimension_semantics = [#tpu.dimension_semantics<parallel>], iteration_bounds = array<i64: 2>, scalar_prefetch = 0 : i64, scratch_operands = 8 : i64, tpu.core_type = #tpu.core_type<tc>, window_params = [{transform_indices = @transform_0, window_bounds = array<i64: 1, 16, 16, 8>}, {transform_indices = @transform_1, window_bounds = array<i64: 1, 8, 8, 8>}, {pipeline_mode = #tpu.pipeline_mode<synchronous>, transform_indices = @transform_2, window_bounds = array<i64: 3, 24, 16>}, {pipeline_mode = #tpu.pipeline_mode<synchronous>, transform_indices = @transform_3, window_bounds = array<i64: 3, 48, 16>}, {pipeline_mode = #tpu.pipeline_mode<synchronous>, transform_indices = @transform_4, window_bounds = array<i64: 8, 16>}, {pipeline_mode = #tpu.pipeline_mode<synchronous>, transform_indices = @transform_5, window_bounds = array<i64: 2, 8>}, {pipeline_mode = #tpu.pipeline_mode<synchronous>, transform_indices = @transform_6, window_bounds = array<i64: 4, 16>}, {transform_indices = @transform_7, window_bounds = array<i64: 1, 8, 8, 16>}]} {
    %c0 = arith.constant 0 : index
    %c0_0 = arith.constant 0 : index
    %0 = vector.load %arg6[%c0, %c0_0] : memref<2x8xf32, #tpu.memory_space<vmem>>, vector<2x8xf32>
    %c0_1 = arith.constant 0 : index
    %c0_2 = arith.constant 0 : index
    %1 = vector.load %arg7[%c0_1, %c0_2] : memref<4x16xf32, #tpu.memory_space<vmem>>, vector<4x16xf32>
    %2 = vector.extract_strided_slice %0 {offsets = [0, 0], sizes = [1, 8], strides = [1, 1]} : vector<2x8xf32> to vector<1x8xf32>
    %3 = vector.shape_cast %2 : vector<1x8xf32> to vector<1x1x1x8xf32>
    %4 = vector.extract_strided_slice %0 {offsets = [1, 0], sizes = [1, 8], strides = [1, 1]} : vector<2x8xf32> to vector<1x8xf32>
    %5 = vector.shape_cast %4 : vector<1x8xf32> to vector<1x1x1x8xf32>
    %6 = vector.extract_strided_slice %1 {offsets = [0, 0], sizes = [1, 16], strides = [1, 1]} : vector<4x16xf32> to vector<1x16xf32>
    %7 = vector.extract_strided_slice %1 {offsets = [1, 0], sizes = [1, 16], strides = [1, 1]} : vector<4x16xf32> to vector<1x16xf32>
    %8 = vector.extract_strided_slice %1 {offsets = [2, 0], sizes = [1, 16], strides = [1, 1]} : vector<4x16xf32> to vector<1x16xf32>
    %9 = vector.extract_strided_slice %1 {offsets = [3, 0], sizes = [1, 16], strides = [1, 1]} : vector<4x16xf32> to vector<1x16xf32>
    %c0_3 = arith.constant 0 : index
    %c0_4 = arith.constant 0 : index
    %c0_5 = arith.constant 0 : index
    %c0_6 = arith.constant 0 : index
    %10 = vector.load %arg1[%c0_3, %c0_4, %c0_5, %c0_6] : memref<1x16x16x8xf32, #tpu.memory_space<vmem>>, vector<1x16x16x8xf32>
    %cst = arith.constant 0.000000e+00 : f32
    %11 = vector.broadcast %cst : f32 to vector<1x1x18x8xf32>
    %c0_7 = arith.constant 0 : index
    %c0_8 = arith.constant 0 : index
    %c0_9 = arith.constant 0 : index
    %c0_10 = arith.constant 0 : index
    %12 = vector.load %arg9[%c0_7, %c0_8, %c0_9, %c0_10] : memref<1x18x18x8xf32, #tpu.memory_space<vmem>>, vector<1x1x18x8xf32>
    tpu.vector_store %arg9[%c0_7, %c0_8, %c0_9, %c0_10], %11 {strides = array<i32>} : memref<1x18x18x8xf32, #tpu.memory_space<vmem>>, vector<1x1x18x8xf32>,
    %cst_11 = arith.constant 0.000000e+00 : f32
    %13 = vector.broadcast %cst_11 : f32 to vector<1x1x18x8xf32>
    %c0_12 = arith.constant 0 : index
    %c17 = arith.constant 17 : index
    %c0_13 = arith.constant 0 : index
    %c0_14 = arith.constant 0 : index
    %14 = vector.load %arg9[%c0_12, %c17, %c0_13, %c0_14] : memref<1x18x18x8xf32, #tpu.memory_space<vmem>>, vector<1x1x18x8xf32>
    tpu.vector_store %arg9[%c0_12, %c17, %c0_13, %c0_14], %13 {strides = array<i32>} : memref<1x18x18x8xf32, #tpu.memory_space<vmem>>, vector<1x1x18x8xf32>,
    %cst_15 = arith.constant 0.000000e+00 : f32
    %15 = vector.broadcast %cst_15 : f32 to vector<1x16x1x8xf32>
    %c0_16 = arith.constant 0 : index
    %c1 = arith.constant 1 : index
    %c0_17 = arith.constant 0 : index
    %c0_18 = arith.constant 0 : index
    %16 = vector.load %arg9[%c0_16, %c1, %c0_17, %c0_18] : memref<1x18x18x8xf32, #tpu.memory_space<vmem>>, vector<1x16x1x8xf32>
    tpu.vector_store %arg9[%c0_16, %c1, %c0_17, %c0_18], %15 {strides = array<i32>} : memref<1x18x18x8xf32, #tpu.memory_space<vmem>>, vector<1x16x1x8xf32>,
    %cst_19 = arith.constant 0.000000e+00 : f32
    %17 = vector.broadcast %cst_19 : f32 to vector<1x16x1x8xf32>
    %c0_20 = arith.constant 0 : index
    %c1_21 = arith.constant 1 : index
    %c17_22 = arith.constant 17 : index
    %c0_23 = arith.constant 0 : index
    %18 = vector.load %arg9[%c0_20, %c1_21, %c17_22, %c0_23] : memref<1x18x18x8xf32, #tpu.memory_space<vmem>>, vector<1x16x1x8xf32>
    tpu.vector_store %arg9[%c0_20, %c1_21, %c17_22, %c0_23], %17 {strides = array<i32>} : memref<1x18x18x8xf32, #tpu.memory_space<vmem>>, vector<1x16x1x8xf32>,
    %19 = vector.broadcast %3 : vector<1x1x1x8xf32> to vector<1x16x16x8xf32>
    %20 = arith.mulf %10, %19 : vector<1x16x16x8xf32>
    %21 = vector.broadcast %5 : vector<1x1x1x8xf32> to vector<1x16x16x8xf32>
    %22 = arith.addf %20, %21 : vector<1x16x16x8xf32>
    %c0_24 = arith.constant 0 : index
    %c1_25 = arith.constant 1 : index
    %c1_26 = arith.constant 1 : index
    %c0_27 = arith.constant 0 : index
    %23 = vector.load %arg9[%c0_24, %c1_25, %c1_26, %c0_27] : memref<1x18x18x8xf32, #tpu.memory_space<vmem>>, vector<1x16x16x8xf32>
    tpu.vector_store %arg9[%c0_24, %c1_25, %c1_26, %c0_27], %22 {strides = array<i32>} : memref<1x18x18x8xf32, #tpu.memory_space<vmem>>, vector<1x16x16x8xf32>,
    %c0_28 = arith.constant 0 : index
    %c0_29 = arith.constant 0 : index
    %c0_30 = arith.constant 0 : index
    %c0_31 = arith.constant 0 : index
    %24 = vector.load %arg9[%c0_28, %c0_29, %c0_30, %c0_31] : memref<1x18x18x8xf32, #tpu.memory_space<vmem>>, vector<1x16x16x8xf32>
    %25 = vector.shape_cast %24 : vector<1x16x16x8xf32> to vector<256x8xf32>
    %c0_32 = arith.constant 0 : index
    %c0_33 = arith.constant 0 : index
    %c1_34 = arith.constant 1 : index
    %c0_35 = arith.constant 0 : index
    %26 = vector.load %arg9[%c0_32, %c0_33, %c1_34, %c0_35] : memref<1x18x18x8xf32, #tpu.memory_space<vmem>>, vector<1x16x16x8xf32>
    %27 = vector.shape_cast %26 : vector<1x16x16x8xf32> to vector<256x8xf32>
    %c0_36 = arith.constant 0 : index
    %c0_37 = arith.constant 0 : index
    %c2 = arith.constant 2 : index
    %c0_38 = arith.constant 0 : index
    %28 = vector.load %arg9[%c0_36, %c0_37, %c2, %c0_38] : memref<1x18x18x8xf32, #tpu.memory_space<vmem>>, vector<1x16x16x8xf32>
    %29 = vector.shape_cast %28 : vector<1x16x16x8xf32> to vector<256x8xf32>
    %c0_39 = arith.constant 0 : index
    %c0_40 = arith.constant 0 : index
    %c0_41 = arith.constant 0 : index
    %30 = vector.load %arg3[%c0_39, %c0_40, %c0_41] : memref<3x24x16xbf16, #tpu.memory_space<vmem>>, vector<1x24x16xbf16>
    %31 = vector.shape_cast %30 : vector<1x24x16xbf16> to vector<24x16xbf16>
    %32 = arith.truncf %25 : vector<256x8xf32> to vector<256x8xbf16>
    %33 = vector.extract_strided_slice %31 {offsets = [0, 0], sizes = [8, 16], strides = [1, 1]} : vector<24x16xbf16> to vector<8x16xbf16>
    %cst_42 = arith.constant dense<0.000000e+00> : vector<256x16xf32>
    %34 = tpu.matmul %32, %33, %cst_42 {dimension_numbers = #tpu.dot_dimension_numbers<[1], [0], [0], [1], [0, 0, 1, 1], [], []>} : vector<256x8xbf16>, vector<8x16xbf16>, vector<256x16xf32> -> vector<256x16xf32>
    %35 = arith.truncf %27 : vector<256x8xf32> to vector<256x8xbf16>
    %36 = vector.extract_strided_slice %31 {offsets = [8, 0], sizes = [8, 16], strides = [1, 1]} : vector<24x16xbf16> to vector<8x16xbf16>
    %cst_43 = arith.constant dense<0.000000e+00> : vector<256x16xf32>
    %37 = tpu.matmul %35, %36, %cst_43 {dimension_numbers = #tpu.dot_dimension_numbers<[1], [0], [0], [1], [0, 0, 1, 1], [], []>} : vector<256x8xbf16>, vector<8x16xbf16>, vector<256x16xf32> -> vector<256x16xf32>
    %38 = arith.addf %34, %37 : vector<256x16xf32>
    %39 = arith.truncf %29 : vector<256x8xf32> to vector<256x8xbf16>
    %40 = vector.extract_strided_slice %31 {offsets = [16, 0], sizes = [8, 16], strides = [1, 1]} : vector<24x16xbf16> to vector<8x16xbf16>
    %cst_44 = arith.constant dense<0.000000e+00> : vector<256x16xf32>
    %41 = tpu.matmul %39, %40, %cst_44 {dimension_numbers = #tpu.dot_dimension_numbers<[1], [0], [0], [1], [0, 0, 1, 1], [], []>} : vector<256x8xbf16>, vector<8x16xbf16>, vector<256x16xf32> -> vector<256x16xf32>
    %42 = arith.addf %38, %41 : vector<256x16xf32>
    %c0_45 = arith.constant 0 : index
    %c1_46 = arith.constant 1 : index
    %c0_47 = arith.constant 0 : index
    %c0_48 = arith.constant 0 : index
    %43 = vector.load %arg9[%c0_45, %c1_46, %c0_47, %c0_48] : memref<1x18x18x8xf32, #tpu.memory_space<vmem>>, vector<1x16x16x8xf32>
    %44 = vector.shape_cast %43 : vector<1x16x16x8xf32> to vector<256x8xf32>
    %c0_49 = arith.constant 0 : index
    %c1_50 = arith.constant 1 : index
    %c1_51 = arith.constant 1 : index
    %c0_52 = arith.constant 0 : index
    %45 = vector.load %arg9[%c0_49, %c1_50, %c1_51, %c0_52] : memref<1x18x18x8xf32, #tpu.memory_space<vmem>>, vector<1x16x16x8xf32>
    %46 = vector.shape_cast %45 : vector<1x16x16x8xf32> to vector<256x8xf32>
    %c0_53 = arith.constant 0 : index
    %c1_54 = arith.constant 1 : index
    %c2_55 = arith.constant 2 : index
    %c0_56 = arith.constant 0 : index
    %47 = vector.load %arg9[%c0_53, %c1_54, %c2_55, %c0_56] : memref<1x18x18x8xf32, #tpu.memory_space<vmem>>, vector<1x16x16x8xf32>
    %48 = vector.shape_cast %47 : vector<1x16x16x8xf32> to vector<256x8xf32>
    %c1_57 = arith.constant 1 : index
    %c0_58 = arith.constant 0 : index
    %c0_59 = arith.constant 0 : index
    %49 = vector.load %arg3[%c1_57, %c0_58, %c0_59] : memref<3x24x16xbf16, #tpu.memory_space<vmem>>, vector<1x24x16xbf16>
    %50 = vector.shape_cast %49 : vector<1x24x16xbf16> to vector<24x16xbf16>
    %51 = arith.truncf %44 : vector<256x8xf32> to vector<256x8xbf16>
    %52 = vector.extract_strided_slice %50 {offsets = [0, 0], sizes = [8, 16], strides = [1, 1]} : vector<24x16xbf16> to vector<8x16xbf16>
    %cst_60 = arith.constant dense<0.000000e+00> : vector<256x16xf32>
    %53 = tpu.matmul %51, %52, %cst_60 {dimension_numbers = #tpu.dot_dimension_numbers<[1], [0], [0], [1], [0, 0, 1, 1], [], []>} : vector<256x8xbf16>, vector<8x16xbf16>, vector<256x16xf32> -> vector<256x16xf32>
    %54 = arith.truncf %46 : vector<256x8xf32> to vector<256x8xbf16>
    %55 = vector.extract_strided_slice %50 {offsets = [8, 0], sizes = [8, 16], strides = [1, 1]} : vector<24x16xbf16> to vector<8x16xbf16>
    %cst_61 = arith.constant dense<0.000000e+00> : vector<256x16xf32>
    %56 = tpu.matmul %54, %55, %cst_61 {dimension_numbers = #tpu.dot_dimension_numbers<[1], [0], [0], [1], [0, 0, 1, 1], [], []>} : vector<256x8xbf16>, vector<8x16xbf16>, vector<256x16xf32> -> vector<256x16xf32>
    %57 = arith.addf %53, %56 : vector<256x16xf32>
    %58 = arith.truncf %48 : vector<256x8xf32> to vector<256x8xbf16>
    %59 = vector.extract_strided_slice %50 {offsets = [16, 0], sizes = [8, 16], strides = [1, 1]} : vector<24x16xbf16> to vector<8x16xbf16>
    %cst_62 = arith.constant dense<0.000000e+00> : vector<256x16xf32>
    %60 = tpu.matmul %58, %59, %cst_62 {dimension_numbers = #tpu.dot_dimension_numbers<[1], [0], [0], [1], [0, 0, 1, 1], [], []>} : vector<256x8xbf16>, vector<8x16xbf16>, vector<256x16xf32> -> vector<256x16xf32>
    %61 = arith.addf %57, %60 : vector<256x16xf32>
    %62 = arith.addf %42, %61 : vector<256x16xf32>
    %c0_63 = arith.constant 0 : index
    %c2_64 = arith.constant 2 : index
    %c0_65 = arith.constant 0 : index
    %c0_66 = arith.constant 0 : index
    %63 = vector.load %arg9[%c0_63, %c2_64, %c0_65, %c0_66] : memref<1x18x18x8xf32, #tpu.memory_space<vmem>>, vector<1x16x16x8xf32>
    %64 = vector.shape_cast %63 : vector<1x16x16x8xf32> to vector<256x8xf32>
    %c0_67 = arith.constant 0 : index
    %c2_68 = arith.constant 2 : index
    %c1_69 = arith.constant 1 : index
    %c0_70 = arith.constant 0 : index
    %65 = vector.load %arg9[%c0_67, %c2_68, %c1_69, %c0_70] : memref<1x18x18x8xf32, #tpu.memory_space<vmem>>, vector<1x16x16x8xf32>
    %66 = vector.shape_cast %65 : vector<1x16x16x8xf32> to vector<256x8xf32>
    %c0_71 = arith.constant 0 : index
    %c2_72 = arith.constant 2 : index
    %c2_73 = arith.constant 2 : index
    %c0_74 = arith.constant 0 : index
    %67 = vector.load %arg9[%c0_71, %c2_72, %c2_73, %c0_74] : memref<1x18x18x8xf32, #tpu.memory_space<vmem>>, vector<1x16x16x8xf32>
    %68 = vector.shape_cast %67 : vector<1x16x16x8xf32> to vector<256x8xf32>
    %c2_75 = arith.constant 2 : index
    %c0_76 = arith.constant 0 : index
    %c0_77 = arith.constant 0 : index
    %69 = vector.load %arg3[%c2_75, %c0_76, %c0_77] : memref<3x24x16xbf16, #tpu.memory_space<vmem>>, vector<1x24x16xbf16>
    %70 = vector.shape_cast %69 : vector<1x24x16xbf16> to vector<24x16xbf16>
    %71 = arith.truncf %64 : vector<256x8xf32> to vector<256x8xbf16>
    %72 = vector.extract_strided_slice %70 {offsets = [0, 0], sizes = [8, 16], strides = [1, 1]} : vector<24x16xbf16> to vector<8x16xbf16>
    %cst_78 = arith.constant dense<0.000000e+00> : vector<256x16xf32>
    %73 = tpu.matmul %71, %72, %cst_78 {dimension_numbers = #tpu.dot_dimension_numbers<[1], [0], [0], [1], [0, 0, 1, 1], [], []>} : vector<256x8xbf16>, vector<8x16xbf16>, vector<256x16xf32> -> vector<256x16xf32>
    %74 = arith.truncf %66 : vector<256x8xf32> to vector<256x8xbf16>
    %75 = vector.extract_strided_slice %70 {offsets = [8, 0], sizes = [8, 16], strides = [1, 1]} : vector<24x16xbf16> to vector<8x16xbf16>
    %cst_79 = arith.constant dense<0.000000e+00> : vector<256x16xf32>
    %76 = tpu.matmul %74, %75, %cst_79 {dimension_numbers = #tpu.dot_dimension_numbers<[1], [0], [0], [1], [0, 0, 1, 1], [], []>} : vector<256x8xbf16>, vector<8x16xbf16>, vector<256x16xf32> -> vector<256x16xf32>
    %77 = arith.addf %73, %76 : vector<256x16xf32>
    %78 = arith.truncf %68 : vector<256x8xf32> to vector<256x8xbf16>
    %79 = vector.extract_strided_slice %70 {offsets = [16, 0], sizes = [8, 16], strides = [1, 1]} : vector<24x16xbf16> to vector<8x16xbf16>
    %cst_80 = arith.constant dense<0.000000e+00> : vector<256x16xf32>
    %80 = tpu.matmul %78, %79, %cst_80 {dimension_numbers = #tpu.dot_dimension_numbers<[1], [0], [0], [1], [0, 0, 1, 1], [], []>} : vector<256x8xbf16>, vector<8x16xbf16>, vector<256x16xf32> -> vector<256x16xf32>
    %81 = arith.addf %77, %80 : vector<256x16xf32>
    %82 = arith.addf %62, %81 : vector<256x16xf32>
    %83 = vector.broadcast %6 : vector<1x16xf32> to vector<256x16xf32>
    %84 = arith.addf %82, %83 : vector<256x16xf32>
    %cst_81 = arith.constant 0.000000e+00 : f32
    %85 = vector.broadcast %cst_81 : f32 to vector<256x16xf32>
    %86 = arith.cmpf ogt, %84, %85 : vector<256x16xf32>
    %87 = vector.broadcast %7 : vector<1x16xf32> to vector<256x16xf32>
    %88 = arith.mulf %84, %87 : vector<256x16xf32>
    %89 = arith.select %86, %84, %88 : vector<256x16xi1>, vector<256x16xf32>
    %cst_82 = arith.constant 0.000000e+00 : f32
    %90 = vector.broadcast %cst_82 : f32 to vector<1x1x18x16xf32>
    %c0_83 = arith.constant 0 : index
    %c0_84 = arith.constant 0 : index
    %c0_85 = arith.constant 0 : index
    %c0_86 = arith.constant 0 : index
    %91 = vector.load %arg10[%c0_83, %c0_84, %c0_85, %c0_86] : memref<1x18x18x16xf32, #tpu.memory_space<vmem>>, vector<1x1x18x16xf32>
    tpu.vector_store %arg10[%c0_83, %c0_84, %c0_85, %c0_86], %90 {strides = array<i32>} : memref<1x18x18x16xf32, #tpu.memory_space<vmem>>, vector<1x1x18x16xf32>,
    %cst_87 = arith.constant 0.000000e+00 : f32
    %92 = vector.broadcast %cst_87 : f32 to vector<1x1x18x16xf32>
    %c0_88 = arith.constant 0 : index
    %c17_89 = arith.constant 17 : index
    %c0_90 = arith.constant 0 : index
    %c0_91 = arith.constant 0 : index
    %93 = vector.load %arg10[%c0_88, %c17_89, %c0_90, %c0_91] : memref<1x18x18x16xf32, #tpu.memory_space<vmem>>, vector<1x1x18x16xf32>
    tpu.vector_store %arg10[%c0_88, %c17_89, %c0_90, %c0_91], %92 {strides = array<i32>} : memref<1x18x18x16xf32, #tpu.memory_space<vmem>>, vector<1x1x18x16xf32>,
    %cst_92 = arith.constant 0.000000e+00 : f32
    %94 = vector.broadcast %cst_92 : f32 to vector<1x16x1x16xf32>
    %c0_93 = arith.constant 0 : index
    %c1_94 = arith.constant 1 : index
    %c0_95 = arith.constant 0 : index
    %c0_96 = arith.constant 0 : index
    %95 = vector.load %arg10[%c0_93, %c1_94, %c0_95, %c0_96] : memref<1x18x18x16xf32, #tpu.memory_space<vmem>>, vector<1x16x1x16xf32>
    tpu.vector_store %arg10[%c0_93, %c1_94, %c0_95, %c0_96], %94 {strides = array<i32>} : memref<1x18x18x16xf32, #tpu.memory_space<vmem>>, vector<1x16x1x16xf32>,
    %cst_97 = arith.constant 0.000000e+00 : f32
    %96 = vector.broadcast %cst_97 : f32 to vector<1x16x1x16xf32>
    %c0_98 = arith.constant 0 : index
    %c1_99 = arith.constant 1 : index
    %c17_100 = arith.constant 17 : index
    %c0_101 = arith.constant 0 : index
    %97 = vector.load %arg10[%c0_98, %c1_99, %c17_100, %c0_101] : memref<1x18x18x16xf32, #tpu.memory_space<vmem>>, vector<1x16x1x16xf32>
    tpu.vector_store %arg10[%c0_98, %c1_99, %c17_100, %c0_101], %96 {strides = array<i32>} : memref<1x18x18x16xf32, #tpu.memory_space<vmem>>, vector<1x16x1x16xf32>,
    %98 = vector.shape_cast %89 : vector<256x16xf32> to vector<1x16x16x16xf32>
    %c0_102 = arith.constant 0 : index
    %c1_103 = arith.constant 1 : index
    %c1_104 = arith.constant 1 : index
    %c0_105 = arith.constant 0 : index
    %99 = vector.load %arg10[%c0_102, %c1_103, %c1_104, %c0_105] : memref<1x18x18x16xf32, #tpu.memory_space<vmem>>, vector<1x16x16x16xf32>
    tpu.vector_store %arg10[%c0_102, %c1_103, %c1_104, %c0_105], %98 {strides = array<i32>} : memref<1x18x18x16xf32, #tpu.memory_space<vmem>>, vector<1x16x16x16xf32>,
    %c0_106 = arith.constant 0 : index
    %c0_107 = arith.constant 0 : index
    %c0_108 = arith.constant 0 : index
    %c0_109 = arith.constant 0 : index
    %100 = tpu.strided_load %arg10[%c0_106, %c0_107, %c0_108, %c0_109] {strides = array<i32: 1, 2, 1, 1>} : memref<1x18x18x16xf32, #tpu.memory_space<vmem>>, vector<1x9x18x16xf32>
    %c0_110 = arith.constant 0 : index
    %c0_111 = arith.constant 0 : index
    %c0_112 = arith.constant 0 : index
    %c0_113 = arith.constant 0 : index
    %101 = vector.load %arg11[%c0_110, %c0_111, %c0_112, %c0_113] : memref<1x9x18x16xf32, #tpu.memory_space<vmem>>, vector<1x9x18x16xf32>
    tpu.vector_store %arg11[%c0_110, %c0_111, %c0_112, %c0_113], %100 {strides = array<i32>} : memref<1x9x18x16xf32, #tpu.memory_space<vmem>>, vector<1x9x18x16xf32>,
    %c0_114 = arith.constant 0 : index
    %c1_115 = arith.constant 1 : index
    %c0_116 = arith.constant 0 : index
    %c0_117 = arith.constant 0 : index
    %102 = tpu.strided_load %arg10[%c0_114, %c1_115, %c0_116, %c0_117] {strides = array<i32: 1, 2, 1, 1>} : memref<1x18x18x16xf32, #tpu.memory_space<vmem>>, vector<1x9x18x16xf32>
    %c0_118 = arith.constant 0 : index
    %c0_119 = arith.constant 0 : index
    %c0_120 = arith.constant 0 : index
    %c0_121 = arith.constant 0 : index
    %103 = vector.load %arg12[%c0_118, %c0_119, %c0_120, %c0_121] : memref<1x9x18x16xf32, #tpu.memory_space<vmem>>, vector<1x9x18x16xf32>
    tpu.vector_store %arg12[%c0_118, %c0_119, %c0_120, %c0_121], %102 {strides = array<i32>} : memref<1x9x18x16xf32, #tpu.memory_space<vmem>>, vector<1x9x18x16xf32>,
    %c0_122 = arith.constant 0 : index
    %c0_123 = arith.constant 0 : index
    %c0_124 = arith.constant 0 : index
    %c0_125 = arith.constant 0 : index
    %104 = tpu.strided_load %arg11[%c0_122, %c0_123, %c0_124, %c0_125] {strides = array<i32: 1, 1, 2, 1>} : memref<1x9x18x16xf32, #tpu.memory_space<vmem>>, vector<1x9x9x16xf32>
    %c0_126 = arith.constant 0 : index
    %c0_127 = arith.constant 0 : index
    %c0_128 = arith.constant 0 : index
    %c0_129 = arith.constant 0 : index
    %105 = vector.load %arg13[%c0_126, %c0_127, %c0_128, %c0_129] : memref<1x9x9x16xf32, #tpu.memory_space<vmem>>, vector<1x9x9x16xf32>
    tpu.vector_store %arg13[%c0_126, %c0_127, %c0_128, %c0_129], %104 {strides = array<i32>} : memref<1x9x9x16xf32, #tpu.memory_space<vmem>>, vector<1x9x9x16xf32>,
    %c0_130 = arith.constant 0 : index
    %c0_131 = arith.constant 0 : index
    %c1_132 = arith.constant 1 : index
    %c0_133 = arith.constant 0 : index
    %106 = tpu.strided_load %arg11[%c0_130, %c0_131, %c1_132, %c0_133] {strides = array<i32: 1, 1, 2, 1>} : memref<1x9x18x16xf32, #tpu.memory_space<vmem>>, vector<1x9x9x16xf32>
    %c0_134 = arith.constant 0 : index
    %c0_135 = arith.constant 0 : index
    %c0_136 = arith.constant 0 : index
    %c0_137 = arith.constant 0 : index
    %107 = vector.load %arg14[%c0_134, %c0_135, %c0_136, %c0_137] : memref<1x9x9x16xf32, #tpu.memory_space<vmem>>, vector<1x9x9x16xf32>
    tpu.vector_store %arg14[%c0_134, %c0_135, %c0_136, %c0_137], %106 {strides = array<i32>} : memref<1x9x9x16xf32, #tpu.memory_space<vmem>>, vector<1x9x9x16xf32>,
    %c0_138 = arith.constant 0 : index
    %c0_139 = arith.constant 0 : index
    %c0_140 = arith.constant 0 : index
    %c0_141 = arith.constant 0 : index
    %108 = tpu.strided_load %arg12[%c0_138, %c0_139, %c0_140, %c0_141] {strides = array<i32: 1, 1, 2, 1>} : memref<1x9x18x16xf32, #tpu.memory_space<vmem>>, vector<1x9x9x16xf32>
    %c0_142 = arith.constant 0 : index
    %c0_143 = arith.constant 0 : index
    %c0_144 = arith.constant 0 : index
    %c0_145 = arith.constant 0 : index
    %109 = vector.load %arg15[%c0_142, %c0_143, %c0_144, %c0_145] : memref<1x9x9x16xf32, #tpu.memory_space<vmem>>, vector<1x9x9x16xf32>
    tpu.vector_store %arg15[%c0_142, %c0_143, %c0_144, %c0_145], %108 {strides = array<i32>} : memref<1x9x9x16xf32, #tpu.memory_space<vmem>>, vector<1x9x9x16xf32>,
    %c0_146 = arith.constant 0 : index
    %c0_147 = arith.constant 0 : index
    %c1_148 = arith.constant 1 : index
    %c0_149 = arith.constant 0 : index
    %110 = tpu.strided_load %arg12[%c0_146, %c0_147, %c1_148, %c0_149] {strides = array<i32: 1, 1, 2, 1>} : memref<1x9x18x16xf32, #tpu.memory_space<vmem>>, vector<1x9x9x16xf32>
    %c0_150 = arith.constant 0 : index
    %c0_151 = arith.constant 0 : index
    %c0_152 = arith.constant 0 : index
    %c0_153 = arith.constant 0 : index
    %111 = vector.load %arg16[%c0_150, %c0_151, %c0_152, %c0_153] : memref<1x9x9x16xf32, #tpu.memory_space<vmem>>, vector<1x9x9x16xf32>
    tpu.vector_store %arg16[%c0_150, %c0_151, %c0_152, %c0_153], %110 {strides = array<i32>} : memref<1x9x9x16xf32, #tpu.memory_space<vmem>>, vector<1x9x9x16xf32>,
    %c0_154 = arith.constant 0 : index
    %c0_155 = arith.constant 0 : index
    %c0_156 = arith.constant 0 : index
    %c0_157 = arith.constant 0 : index
    %112 = vector.load %arg13[%c0_154, %c0_155, %c0_156, %c0_157] : memref<1x9x9x16xf32, #tpu.memory_space<vmem>>, vector<1x8x8x16xf32>
    %113 = vector.shape_cast %112 : vector<1x8x8x16xf32> to vector<64x16xf32>
    %c0_158 = arith.constant 0 : index
    %c0_159 = arith.constant 0 : index
    %c0_160 = arith.constant 0 : index
    %c0_161 = arith.constant 0 : index
    %114 = vector.load %arg14[%c0_158, %c0_159, %c0_160, %c0_161] : memref<1x9x9x16xf32, #tpu.memory_space<vmem>>, vector<1x8x8x16xf32>
    %115 = vector.shape_cast %114 : vector<1x8x8x16xf32> to vector<64x16xf32>
    %c0_162 = arith.constant 0 : index
    %c0_163 = arith.constant 0 : index
    %c1_164 = arith.constant 1 : index
    %c0_165 = arith.constant 0 : index
    %116 = vector.load %arg13[%c0_162, %c0_163, %c1_164, %c0_165] : memref<1x9x9x16xf32, #tpu.memory_space<vmem>>, vector<1x8x8x16xf32>
    %117 = vector.shape_cast %116 : vector<1x8x8x16xf32> to vector<64x16xf32>
    %c0_166 = arith.constant 0 : index
    %c0_167 = arith.constant 0 : index
    %c0_168 = arith.constant 0 : index
    %118 = vector.load %arg4[%c0_166, %c0_167, %c0_168] : memref<3x48x16xbf16, #tpu.memory_space<vmem>>, vector<1x48x16xbf16>
    %119 = vector.shape_cast %118 : vector<1x48x16xbf16> to vector<48x16xbf16>
    %120 = arith.truncf %113 : vector<64x16xf32> to vector<64x16xbf16>
    %121 = vector.extract_strided_slice %119 {offsets = [0, 0], sizes = [16, 16], strides = [1, 1]} : vector<48x16xbf16> to vector<16x16xbf16>
    %cst_169 = arith.constant dense<0.000000e+00> : vector<64x16xf32>
    %122 = tpu.matmul %120, %121, %cst_169 {dimension_numbers = #tpu.dot_dimension_numbers<[1], [0], [0], [1], [0, 0, 1, 1], [], []>} : vector<64x16xbf16>, vector<16x16xbf16>, vector<64x16xf32> -> vector<64x16xf32>
    %123 = arith.truncf %115 : vector<64x16xf32> to vector<64x16xbf16>
    %124 = vector.extract_strided_slice %119 {offsets = [16, 0], sizes = [16, 16], strides = [1, 1]} : vector<48x16xbf16> to vector<16x16xbf16>
    %cst_170 = arith.constant dense<0.000000e+00> : vector<64x16xf32>
    %125 = tpu.matmul %123, %124, %cst_170 {dimension_numbers = #tpu.dot_dimension_numbers<[1], [0], [0], [1], [0, 0, 1, 1], [], []>} : vector<64x16xbf16>, vector<16x16xbf16>, vector<64x16xf32> -> vector<64x16xf32>
    %126 = arith.addf %122, %125 : vector<64x16xf32>
    %127 = arith.truncf %117 : vector<64x16xf32> to vector<64x16xbf16>
    %128 = vector.extract_strided_slice %119 {offsets = [32, 0], sizes = [16, 16], strides = [1, 1]} : vector<48x16xbf16> to vector<16x16xbf16>
    %cst_171 = arith.constant dense<0.000000e+00> : vector<64x16xf32>
    %129 = tpu.matmul %127, %128, %cst_171 {dimension_numbers = #tpu.dot_dimension_numbers<[1], [0], [0], [1], [0, 0, 1, 1], [], []>} : vector<64x16xbf16>, vector<16x16xbf16>, vector<64x16xf32> -> vector<64x16xf32>
    %130 = arith.addf %126, %129 : vector<64x16xf32>
    %c0_172 = arith.constant 0 : index
    %c0_173 = arith.constant 0 : index
    %c0_174 = arith.constant 0 : index
    %c0_175 = arith.constant 0 : index
    %131 = vector.load %arg15[%c0_172, %c0_173, %c0_174, %c0_175] : memref<1x9x9x16xf32, #tpu.memory_space<vmem>>, vector<1x8x8x16xf32>
    %132 = vector.shape_cast %131 : vector<1x8x8x16xf32> to vector<64x16xf32>
    %c0_176 = arith.constant 0 : index
    %c0_177 = arith.constant 0 : index
    %c0_178 = arith.constant 0 : index
    %c0_179 = arith.constant 0 : index
    %133 = vector.load %arg16[%c0_176, %c0_177, %c0_178, %c0_179] : memref<1x9x9x16xf32, #tpu.memory_space<vmem>>, vector<1x8x8x16xf32>
    %134 = vector.shape_cast %133 : vector<1x8x8x16xf32> to vector<64x16xf32>
    %c0_180 = arith.constant 0 : index
    %c0_181 = arith.constant 0 : index
    %c1_182 = arith.constant 1 : index
    %c0_183 = arith.constant 0 : index
    %135 = vector.load %arg15[%c0_180, %c0_181, %c1_182, %c0_183] : memref<1x9x9x16xf32, #tpu.memory_space<vmem>>, vector<1x8x8x16xf32>
    %136 = vector.shape_cast %135 : vector<1x8x8x16xf32> to vector<64x16xf32>
    %c1_184 = arith.constant 1 : index
    %c0_185 = arith.constant 0 : index
    %c0_186 = arith.constant 0 : index
    %137 = vector.load %arg4[%c1_184, %c0_185, %c0_186] : memref<3x48x16xbf16, #tpu.memory_space<vmem>>, vector<1x48x16xbf16>
    %138 = vector.shape_cast %137 : vector<1x48x16xbf16> to vector<48x16xbf16>
    %139 = arith.truncf %132 : vector<64x16xf32> to vector<64x16xbf16>
    %140 = vector.extract_strided_slice %138 {offsets = [0, 0], sizes = [16, 16], strides = [1, 1]} : vector<48x16xbf16> to vector<16x16xbf16>
    %cst_187 = arith.constant dense<0.000000e+00> : vector<64x16xf32>
    %141 = tpu.matmul %139, %140, %cst_187 {dimension_numbers = #tpu.dot_dimension_numbers<[1], [0], [0], [1], [0, 0, 1, 1], [], []>} : vector<64x16xbf16>, vector<16x16xbf16>, vector<64x16xf32> -> vector<64x16xf32>
    %142 = arith.truncf %134 : vector<64x16xf32> to vector<64x16xbf16>
    %143 = vector.extract_strided_slice %138 {offsets = [16, 0], sizes = [16, 16], strides = [1, 1]} : vector<48x16xbf16> to vector<16x16xbf16>
    %cst_188 = arith.constant dense<0.000000e+00> : vector<64x16xf32>
    %144 = tpu.matmul %142, %143, %cst_188 {dimension_numbers = #tpu.dot_dimension_numbers<[1], [0], [0], [1], [0, 0, 1, 1], [], []>} : vector<64x16xbf16>, vector<16x16xbf16>, vector<64x16xf32> -> vector<64x16xf32>
    %145 = arith.addf %141, %144 : vector<64x16xf32>
    %146 = arith.truncf %136 : vector<64x16xf32> to vector<64x16xbf16>
    %147 = vector.extract_strided_slice %138 {offsets = [32, 0], sizes = [16, 16], strides = [1, 1]} : vector<48x16xbf16> to vector<16x16xbf16>
    %cst_189 = arith.constant dense<0.000000e+00> : vector<64x16xf32>
    %148 = tpu.matmul %146, %147, %cst_189 {dimension_numbers = #tpu.dot_dimension_numbers<[1], [0], [0], [1], [0, 0, 1, 1], [], []>} : vector<64x16xbf16>, vector<16x16xbf16>, vector<64x16xf32> -> vector<64x16xf32>
    %149 = arith.addf %145, %148 : vector<64x16xf32>
    %150 = arith.addf %130, %149 : vector<64x16xf32>
    %c0_190 = arith.constant 0 : index
    %c1_191 = arith.constant 1 : index
    %c0_192 = arith.constant 0 : index
    %c0_193 = arith.constant 0 : index
    %151 = vector.load %arg13[%c0_190, %c1_191, %c0_192, %c0_193] : memref<1x9x9x16xf32, #tpu.memory_space<vmem>>, vector<1x8x8x16xf32>
    %152 = vector.shape_cast %151 : vector<1x8x8x16xf32> to vector<64x16xf32>
    %c0_194 = arith.constant 0 : index
    %c1_195 = arith.constant 1 : index
    %c0_196 = arith.constant 0 : index
    %c0_197 = arith.constant 0 : index
    %153 = vector.load %arg14[%c0_194, %c1_195, %c0_196, %c0_197] : memref<1x9x9x16xf32, #tpu.memory_space<vmem>>, vector<1x8x8x16xf32>
    %154 = vector.shape_cast %153 : vector<1x8x8x16xf32> to vector<64x16xf32>
    %c0_198 = arith.constant 0 : index
    %c1_199 = arith.constant 1 : index
    %c1_200 = arith.constant 1 : index
    %c0_201 = arith.constant 0 : index
    %155 = vector.load %arg13[%c0_198, %c1_199, %c1_200, %c0_201] : memref<1x9x9x16xf32, #tpu.memory_space<vmem>>, vector<1x8x8x16xf32>
    %156 = vector.shape_cast %155 : vector<1x8x8x16xf32> to vector<64x16xf32>
    %c2_202 = arith.constant 2 : index
    %c0_203 = arith.constant 0 : index
    %c0_204 = arith.constant 0 : index
    %157 = vector.load %arg4[%c2_202, %c0_203, %c0_204] : memref<3x48x16xbf16, #tpu.memory_space<vmem>>, vector<1x48x16xbf16>
    %158 = vector.shape_cast %157 : vector<1x48x16xbf16> to vector<48x16xbf16>
    %159 = arith.truncf %152 : vector<64x16xf32> to vector<64x16xbf16>
    %160 = vector.extract_strided_slice %158 {offsets = [0, 0], sizes = [16, 16], strides = [1, 1]} : vector<48x16xbf16> to vector<16x16xbf16>
    %cst_205 = arith.constant dense<0.000000e+00> : vector<64x16xf32>
    %161 = tpu.matmul %159, %160, %cst_205 {dimension_numbers = #tpu.dot_dimension_numbers<[1], [0], [0], [1], [0, 0, 1, 1], [], []>} : vector<64x16xbf16>, vector<16x16xbf16>, vector<64x16xf32> -> vector<64x16xf32>
    %162 = arith.truncf %154 : vector<64x16xf32> to vector<64x16xbf16>
    %163 = vector.extract_strided_slice %158 {offsets = [16, 0], sizes = [16, 16], strides = [1, 1]} : vector<48x16xbf16> to vector<16x16xbf16>
    %cst_206 = arith.constant dense<0.000000e+00> : vector<64x16xf32>
    %164 = tpu.matmul %162, %163, %cst_206 {dimension_numbers = #tpu.dot_dimension_numbers<[1], [0], [0], [1], [0, 0, 1, 1], [], []>} : vector<64x16xbf16>, vector<16x16xbf16>, vector<64x16xf32> -> vector<64x16xf32>
    %165 = arith.addf %161, %164 : vector<64x16xf32>
    %166 = arith.truncf %156 : vector<64x16xf32> to vector<64x16xbf16>
    %167 = vector.extract_strided_slice %158 {offsets = [32, 0], sizes = [16, 16], strides = [1, 1]} : vector<48x16xbf16> to vector<16x16xbf16>
    %cst_207 = arith.constant dense<0.000000e+00> : vector<64x16xf32>
    %168 = tpu.matmul %166, %167, %cst_207 {dimension_numbers = #tpu.dot_dimension_numbers<[1], [0], [0], [1], [0, 0, 1, 1], [], []>} : vector<64x16xbf16>, vector<16x16xbf16>, vector<64x16xf32> -> vector<64x16xf32>
    %169 = arith.addf %165, %168 : vector<64x16xf32>
    %170 = arith.addf %150, %169 : vector<64x16xf32>
    %171 = vector.broadcast %8 : vector<1x16xf32> to vector<64x16xf32>
    %172 = arith.addf %170, %171 : vector<64x16xf32>
    %c0_208 = arith.constant 0 : index
    %c0_209 = arith.constant 0 : index
    %c0_210 = arith.constant 0 : index
    %c0_211 = arith.constant 0 : index
    %173 = vector.load %arg2[%c0_208, %c0_209, %c0_210, %c0_211] : memref<1x8x8x8xf32, #tpu.memory_space<vmem>>, vector<1x8x8x8xf32>
    %174 = arith.truncf %173 : vector<1x8x8x8xf32> to vector<1x8x8x8xbf16>
    %175 = vector.shape_cast %174 : vector<1x8x8x8xbf16> to vector<64x8xbf16>
    %c0_212 = arith.constant 0 : index
    %c0_213 = arith.constant 0 : index
    %176 = vector.load %arg5[%c0_212, %c0_213] : memref<8x16xbf16, #tpu.memory_space<vmem>>, vector<8x16xbf16>
    %cst_214 = arith.constant dense<0.000000e+00> : vector<64x16xf32>
    %177 = tpu.matmul %175, %176, %cst_214 {dimension_numbers = #tpu.dot_dimension_numbers<[1], [0], [0], [1], [0, 0, 1, 1], [], []>} : vector<64x8xbf16>, vector<8x16xbf16>, vector<64x16xf32> -> vector<64x16xf32>
    %178 = vector.broadcast %9 : vector<1x16xf32> to vector<64x16xf32>
    %179 = arith.addf %177, %178 : vector<64x16xf32>
    %180 = arith.addf %172, %179 : vector<64x16xf32>
    %181 = vector.shape_cast %180 : vector<64x16xf32> to vector<1x8x8x16xf32>
    %c0_215 = arith.constant 0 : index
    %c0_216 = arith.constant 0 : index
    %c0_217 = arith.constant 0 : index
    %c0_218 = arith.constant 0 : index
    %182 = vector.load %arg8[%c0_215, %c0_216, %c0_217, %c0_218] : memref<1x8x8x16xf32, #tpu.memory_space<vmem>>, vector<1x8x8x16xf32>
    tpu.vector_store %arg8[%c0_215, %c0_216, %c0_217, %c0_218], %181 {strides = array<i32>} : memref<1x8x8x16xf32, #tpu.memory_space<vmem>>, vector<1x8x8x16xf32>,
    return
  }
  func.func @transform_0(%arg0: i32) -> (i32, i32, i32, i32) {
    %c0_i32 = arith.constant 0 : i32
    %c0_i32_0 = arith.constant 0 : i32
    %c0_i32_1 = arith.constant 0 : i32
    %c0_i32_2 = arith.constant 0 : i32
    return %arg0, %c0_i32, %c0_i32_0, %c0_i32_1 : i32, i32, i32, i32
  }
  func.func @transform_1(%arg0: i32) -> (i32, i32, i32, i32) {
    %c0_i32 = arith.constant 0 : i32
    %c0_i32_0 = arith.constant 0 : i32
    %c0_i32_1 = arith.constant 0 : i32
    %c0_i32_2 = arith.constant 0 : i32
    return %arg0, %c0_i32, %c0_i32_0, %c0_i32_1 : i32, i32, i32, i32
  }
  func.func @transform_2(%arg0: i32) -> (i32, i32, i32) {
    %c0_i32 = arith.constant 0 : i32
    %c0_i32_0 = arith.constant 0 : i32
    %c0_i32_1 = arith.constant 0 : i32
    %c0_i32_2 = arith.constant 0 : i32
    return %c0_i32, %c0_i32_0, %c0_i32_1 : i32, i32, i32
  }
  func.func @transform_3(%arg0: i32) -> (i32, i32, i32) {
    %c0_i32 = arith.constant 0 : i32
    %c0_i32_0 = arith.constant 0 : i32
    %c0_i32_1 = arith.constant 0 : i32
    %c0_i32_2 = arith.constant 0 : i32
    return %c0_i32, %c0_i32_0, %c0_i32_1 : i32, i32, i32
  }
  func.func @transform_4(%arg0: i32) -> (i32, i32) {
    %c0_i32 = arith.constant 0 : i32
    %c0_i32_0 = arith.constant 0 : i32
    %c0_i32_1 = arith.constant 0 : i32
    return %c0_i32, %c0_i32_0 : i32, i32
  }
  func.func @transform_5(%arg0: i32) -> (i32, i32) {
    %c0_i32 = arith.constant 0 : i32
    %c0_i32_0 = arith.constant 0 : i32
    %c0_i32_1 = arith.constant 0 : i32
    return %c0_i32, %c0_i32_0 : i32, i32
  }
  func.func @transform_6(%arg0: i32) -> (i32, i32) {
    %c0_i32 = arith.constant 0 : i32
    %c0_i32_0 = arith.constant 0 : i32
    %c0_i32_1 = arith.constant 0 : i32
    return %c0_i32, %c0_i32_0 : i32, i32
  }
  func.func @transform_7(%arg0: i32) -> (i32, i32, i32, i32) {
    %c0_i32 = arith.constant 0 : i32
    %c0_i32_0 = arith.constant 0 : i32
    %c0_i32_1 = arith.constant 0 : i32
    %c0_i32_2 = arith.constant 0 : i32
    return %arg0, %c0_i32, %c0_i32_0, %c0_i32_1 : i32, i32, i32, i32
  }
}

</mosaic_0001>

<llo_original>
// kernel: tpu_custom_call.1
$region0: #{tpu_custom_call.1}
  #allocation0 [shape = 'u32[]', space=smem, size = 0x4, offset = 0x4, fixed_abs, tag = 'smem constant byte address 0x4 - core index']
  #allocation1 [shape = 'u32[144,128]{1,0:T(1,128)}', space=vmem, size = 0x12000, scoped, tag = 'internal scratch']
  #allocation2 [shape = 'f32[1,18,18,8]{3,2,1,0:T(8,128)}', space=vmem, size = 0x36000, scoped, tag = 'scratch operand']
  #allocation3 [shape = 'f32[1,18,18,16]{3,2,1,0:T(8,128)}', space=vmem, size = 0x36000, scoped, tag = 'scratch operand']
  #allocation4 [shape = 'f32[1,9,18,16]{3,2,1,0:T(8,128)}', space=vmem, size = 0x1b000, scoped, tag = 'scratch operand']
  #allocation5 [shape = 'f32[1,9,18,16]{3,2,1,0:T(8,128)}', space=vmem, size = 0x1b000, scoped, tag = 'scratch operand']
  #allocation6 [shape = 'f32[1,9,9,16]{3,2,1,0:T(8,128)}', space=vmem, size = 0x12000, scoped, tag = 'scratch operand']
  #allocation7 [shape = 'f32[1,9,9,16]{3,2,1,0:T(8,128)}', space=vmem, size = 0x12000, scoped, tag = 'scratch operand']
  #allocation8 [shape = 'f32[1,9,9,16]{3,2,1,0:T(8,128)}', space=vmem, size = 0x12000, scoped, tag = 'scratch operand']
  #allocation9 [shape = 'f32[1,9,9,16]{3,2,1,0:T(8,128)}', space=vmem, size = 0x12000, scoped, tag = 'scratch operand']
  %s0 = inlined_call_operand.vmem [shape: f32[2,16,16,8], index: 0, kind: input, shape index: {}]
  %s1 = inlined_call_operand.vmem [shape: f32[2,8,8,8], index: 1, kind: input, shape index: {}]
  %s2 = inlined_call_operand.vmem [shape: bf16[3,24,16], index: 2, kind: input, shape index: {}]
  %s3 = inlined_call_operand.vmem [shape: bf16[3,48,16], index: 3, kind: input, shape index: {}]
  %s4 = inlined_call_operand.vmem [shape: bf16[8,16], index: 4, kind: input, shape index: {}]
  %s5 = inlined_call_operand.vmem [shape: f32[2,8], index: 5, kind: input, shape index: {}]
  %s6 = inlined_call_operand.vmem [shape: f32[4,16], index: 6, kind: input, shape index: {}]
  %s7 = inlined_call_operand.hbm [shape: f32[2,8,8,16], index: 7, kind: output, shape index: {}]
  %s8 = sld [smem:[#allocation0]]
  $region61: #{tpu_custom_call.1} parent=0
    _
  %s10 = ssub.s32 1, %s8
  %s11 = scalar_select 0, %s10, %s8
  $region1: #{tpu_custom_call.1} parent=0
    #allocation10 [shape = 'u8[65536]{0}', space=vmem, size = 0x10000, scoped, tag = 'output window, operand 0']
    #allocation11 [shape = 's32[2]{0}', space=sflag, size = 0x8, scoped, tag = 'scoped memory for tpu_custom_call.1']
    %12 = vsyncpa [#allocation11], 0
    %s13 = scalar_lea.sflag [#allocation11], 1
    %14 = vsyncpa %s13, 0
    loop: start=0, step=1, limit=4
    $region2: #{tpu_custom_call.1} parent=1 // loop_pre_header
      _
    $region3: #{tpu_custom_call.1} parent=1 // loop_header
      %s16 = sphi 0, %s20
      %p17 = scmp.ge.s32.totalorder %s16, 4
      %s26 = sphi 0, %s28
      %s29 = sphi 0, %s26
      %s30 = sphi 0, %s29
      %s46 = sphi 0, %s30
      %s52 = sphi 0, %s54
      %s55 = sphi 0, %s52
      %s56 = sphi 0, %s55
      %s72 = sphi 0, %s56
      %s76 = sphi 0, %s76
      %s78 = sphi 0, %s76
      %s79 = sphi 0, %s78
      %s93 = sphi 0, %s79
      %s97 = sphi 0, %s97
      %s99 = sphi 0, %s97
      %s100 = sphi 0, %s99
      %s114 = sphi 0, %s100
      %s118 = sphi 0, %s118
      %s120 = sphi 0, %s118
      %s121 = sphi 0, %s120
      %s135 = sphi 0, %s121
      %s139 = sphi 0, %s139
      %s141 = sphi 0, %s139
      %s142 = sphi 0, %s141
      %s156 = sphi 0, %s142
      %s160 = sphi 0, %s160
      %s162 = sphi 0, %s160
      %s163 = sphi 0, %s162
      %s177 = sphi 0, %s163
      %s183 = sphi 0, %s185
      %s186 = sphi 0, %s183
      %s187 = sphi 0, %s186
      %s203 = sphi 0, %s187
    $region4: #{tpu_custom_call.1} parent=1 // loop_header_branch
      %19 = sbr.rel (%p17) target = $region8
    $region5: #{tpu_custom_call.1} parent=1 // loop_body
      %s21 = ssub.s32 %s16, 1
      %s22 = ssub.s32 %s16, 2
      %s23 = sadd.s32 %s16, 1
      %s24 = ssub.s32 %s16, %s23
      %p25 = scmp.eq.s32.totalorder %s24, 0
      %s27 = sadd.s32 %s26, 1
      %s28 = scalar_select %p25, %s26, %s27
      %p31 = pneg %p25
      %p32 = scmp.eq.s32.totalorder %s16, 1
      %p33 = por %p31, %p32
      %p34 = scmp.ne.s32.totalorder %s26, %s29
      %p35 = scmp.eq.s32.totalorder %s16, 0
      %p36 = por %p34, %p35
      %p37 = scmp.ne.s32.totalorder %s26, %s29
      %p38 = scmp.eq.s32.totalorder %s21, 1
      %p39 = por %p37, %p38
      %p40 = scmp.ne.s32.totalorder %s29, %s30
      %p41 = scmp.eq.s32.totalorder %s21, 0
      %p42 = por %p40, %p41
      %p43 = scmp.ne.s32.totalorder %s29, %s30
      %p44 = scmp.eq.s32.totalorder %s22, 1
      %p45 = por %p43, %p44
      %p47 = scmp.ne.s32.totalorder %s30, %s46
      %p48 = scmp.eq.s32.totalorder %s22, 0
      %p49 = por %p47, %p48
      %s50 = ssub.s32 %s16, %s23
      %p51 = scmp.eq.s32.totalorder %s50, 0
      %s53 = sadd.s32 %s52, 1
      %s54 = scalar_select %p51, %s52, %s53
      %p57 = pneg %p51
      %p58 = scmp.eq.s32.totalorder %s16, 1
      %p59 = por %p57, %p58
      %p60 = scmp.ne.s32.totalorder %s52, %s55
      %p61 = scmp.eq.s32.totalorder %s16, 0
      %p62 = por %p60, %p61
      %p63 = scmp.ne.s32.totalorder %s52, %s55
      %p64 = scmp.eq.s32.totalorder %s21, 1
      %p65 = por %p63, %p64
      %p66 = scmp.ne.s32.totalorder %s55, %s56
      %p67 = scmp.eq.s32.totalorder %s21, 0
      %p68 = por %p66, %p67
      %p69 = scmp.ne.s32.totalorder %s55, %s56
      %p70 = scmp.eq.s32.totalorder %s22, 1
      %p71 = por %p69, %p70
      %p73 = scmp.ne.s32.totalorder %s56, %s72
      %p74 = scmp.eq.s32.totalorder %s22, 0
      %p75 = por %p73, %p74
      %s77 = sadd.s32 %s76, 1
      %p80 = scmp.eq.s32.totalorder %s16, 1
      %p81 = scmp.ne.s32.totalorder %s76, %s78
      %p82 = scmp.eq.s32.totalorder %s16, 0
      %p83 = por %p81, %p82
      %p84 = scmp.ne.s32.totalorder %s76, %s78
      %p85 = scmp.eq.s32.totalorder %s21, 1
      %p86 = por %p84, %p85
      %p87 = scmp.ne.s32.totalorder %s78, %s79
      %p88 = scmp.eq.s32.totalorder %s21, 0
      %p89 = por %p87, %p88
      %p90 = scmp.ne.s32.totalorder %s78, %s79
      %p91 = scmp.eq.s32.totalorder %s22, 1
      %p92 = por %p90, %p91
      %p94 = scmp.ne.s32.totalorder %s79, %s93
      %p95 = scmp.eq.s32.totalorder %s22, 0
      %p96 = por %p94, %p95
      %s98 = sadd.s32 %s97, 1
      %p101 = scmp.eq.s32.totalorder %s16, 1
      %p102 = scmp.ne.s32.totalorder %s97, %s99
      %p103 = scmp.eq.s32.totalorder %s16, 0
      %p104 = por %p102, %p103
      %p105 = scmp.ne.s32.totalorder %s97, %s99
      %p106 = scmp.eq.s32.totalorder %s21, 1
      %p107 = por %p105, %p106
      %p108 = scmp.ne.s32.totalorder %s99, %s100
      %p109 = scmp.eq.s32.totalorder %s21, 0
      %p110 = por %p108, %p109
      %p111 = scmp.ne.s32.totalorder %s99, %s100
      %p112 = scmp.eq.s32.totalorder %s22, 1
      %p113 = por %p111, %p112
      %p115 = scmp.ne.s32.totalorder %s100, %s114
      %p116 = scmp.eq.s32.totalorder %s22, 0
      %p117 = por %p115, %p116
      %s119 = sadd.s32 %s118, 1
      %p122 = scmp.eq.s32.totalorder %s16, 1
      %p123 = scmp.ne.s32.totalorder %s118, %s120
      %p124 = scmp.eq.s32.totalorder %s16, 0
      %p125 = por %p123, %p124
      %p126 = scmp.ne.s32.totalorder %s118, %s120
      %p127 = scmp.eq.s32.totalorder %s21, 1
      %p128 = por %p126, %p127
      %p129 = scmp.ne.s32.totalorder %s120, %s121
      %p130 = scmp.eq.s32.totalorder %s21, 0
      %p131 = por %p129, %p130
      %p132 = scmp.ne.s32.totalorder %s120, %s121
      %p133 = scmp.eq.s32.totalorder %s22, 1
      %p134 = por %p132, %p133
      %p136 = scmp.ne.s32.totalorder %s121, %s135
      %p137 = scmp.eq.s32.totalorder %s22, 0
      %p138 = por %p136, %p137
      %s140 = sadd.s32 %s139, 1
      %p143 = scmp.eq.s32.totalorder %s16, 1
      %p144 = scmp.ne.s32.totalorder %s139, %s141
      %p145 = scmp.eq.s32.totalorder %s16, 0
      %p146 = por %p144, %p145
      %p147 = scmp.ne.s32.totalorder %s139, %s141
      %p148 = scmp.eq.s32.totalorder %s21, 1
      %p149 = por %p147, %p148
      %p150 = scmp.ne.s32.totalorder %s141, %s142
      %p151 = scmp.eq.s32.totalorder %s21, 0
      %p152 = por %p150, %p151
      %p153 = scmp.ne.s32.totalorder %s141, %s142
      %p154 = scmp.eq.s32.totalorder %s22, 1
      %p155 = por %p153, %p154
      %p157 = scmp.ne.s32.totalorder %s142, %s156
      %p158 = scmp.eq.s32.totalorder %s22, 0
      %p159 = por %p157, %p158
      %s161 = sadd.s32 %s160, 1
      %p164 = scmp.eq.s32.totalorder %s16, 1
      %p165 = scmp.ne.s32.totalorder %s160, %s162
      %p166 = scmp.eq.s32.totalorder %s16, 0
      %p167 = por %p165, %p166
      %p168 = scmp.ne.s32.totalorder %s160, %s162
      %p169 = scmp.eq.s32.totalorder %s21, 1
      %p170 = por %p168, %p169
      %p171 = scmp.ne.s32.totalorder %s162, %s163
      %p172 = scmp.eq.s32.totalorder %s21, 0
      %p173 = por %p171, %p172
      %p174 = scmp.ne.s32.totalorder %s162, %s163
      %p175 = scmp.eq.s32.totalorder %s22, 1
      %p176 = por %p174, %p175
      %p178 = scmp.ne.s32.totalorder %s163, %s177
      %p179 = scmp.eq.s32.totalorder %s22, 0
      %p180 = por %p178, %p179
      %s181 = ssub.s32 %s16, %s23
      %p182 = scmp.eq.s32.totalorder %s181, 0
      %s184 = sadd.s32 %s183, 1
      %s185 = scalar_select %p182, %s183, %s184
      %p188 = pneg %p182
      %p189 = scmp.eq.s32.totalorder %s16, 1
      %p190 = por %p188, %p189
      %p191 = scmp.ne.s32.totalorder %s183, %s186
      %p192 = scmp.eq.s32.totalorder %s16, 0
      %p193 = por %p191, %p192
      %p194 = scmp.ne.s32.totalorder %s183, %s186
      %p195 = scmp.eq.s32.totalorder %s21, 1
      %p196 = por %p194, %p195
      %p197 = scmp.ne.s32.totalorder %s186, %s187
      %p198 = scmp.eq.s32.totalorder %s21, 0
      %p199 = por %p197, %p198
      %p200 = scmp.ne.s32.totalorder %s186, %s187
      %p201 = scmp.eq.s32.totalorder %s22, 1
      %p202 = por %p200, %p201
      %p204 = scmp.ne.s32.totalorder %s187, %s203
      %p205 = scmp.eq.s32.totalorder %s22, 0
      %p206 = por %p204, %p205
      %p207 = scmp.le.s32.totalorder 1, %s16
      %p208 = scmp.lt.s32.totalorder %s16, 3
      %p209 = pnand %p207, %p208
      %p210 = pneg %p209
      // Predicated region
      $region9: #{tpu_custom_call.1} parent=5 // pred_check
        _
      $region10: #{tpu_custom_call.1} parent=5 // pred_check_branch
        %212 = sbr.rel (%p209) target = $region12
      $region11: #{tpu_custom_call.1} parent=5 // pred_region
        %s213 = ssub.s32 %s16, 1
        // Predicated region
        $region13: #{tpu_custom_call.1} parent=11 // pred_check
          %p214 = pneg %p89
        $region14: #{tpu_custom_call.1} parent=11 // pred_check_branch
          %216 = sbr.rel (%p214) target = $region16
        $region15: #{tpu_custom_call.1} parent=11 // pred_region
          _
        $region16: #{tpu_custom_call.1} parent=11 // pred_fallthru
          _
        // Predicated region
        $region17: #{tpu_custom_call.1} parent=11 // pred_check
          %p217 = pneg %p110
        $region18: #{tpu_custom_call.1} parent=11 // pred_check_branch
          %219 = sbr.rel (%p217) target = $region20
        $region19: #{tpu_custom_call.1} parent=11 // pred_region
          _
        $region20: #{tpu_custom_call.1} parent=11 // pred_fallthru
          _
        // Predicated region
        $region21: #{tpu_custom_call.1} parent=11 // pred_check
          %p220 = pneg %p131
        $region22: #{tpu_custom_call.1} parent=11 // pred_check_branch
          %222 = sbr.rel (%p220) target = $region24
        $region23: #{tpu_custom_call.1} parent=11 // pred_region
          _
        $region24: #{tpu_custom_call.1} parent=11 // pred_fallthru
          _
        // Predicated region
        $region25: #{tpu_custom_call.1} parent=11 // pred_check
          %p223 = pneg %p152
        $region26: #{tpu_custom_call.1} parent=11 // pred_check_branch
          %225 = sbr.rel (%p223) target = $region28
        $region27: #{tpu_custom_call.1} parent=11 // pred_region
          _
        $region28: #{tpu_custom_call.1} parent=11 // pred_fallthru
          _
        // Predicated region
        $region29: #{tpu_custom_call.1} parent=11 // pred_check
          %p226 = pneg %p173
        $region30: #{tpu_custom_call.1} parent=11 // pred_check_branch
          %228 = sbr.rel (%p226) target = $region32
        $region31: #{tpu_custom_call.1} parent=11 // pred_region
          _
        $region32: #{tpu_custom_call.1} parent=11 // pred_fallthru
          _
      $region12: #{tpu_custom_call.1} parent=5 // pred_fallthru
        _
      %p229 = scmp.lt.s32.totalorder %s16, 2
      // Predicated region
      $region33: #{tpu_custom_call.1} parent=5 // pred_check
        %p230 = pneg %p229
      $region34: #{tpu_custom_call.1} parent=5 // pred_check_branch
        %232 = sbr.rel (%p230) target = $region36
      $region35: #{tpu_custom_call.1} parent=5 // pred_region
        // Predicated region
        $region37: #{tpu_custom_call.1} parent=35 // pred_check
          %p233 = pneg %p36
        $region38: #{tpu_custom_call.1} parent=35 // pred_check_branch
          %235 = sbr.rel (%p233) target = $region40
        $region39: #{tpu_custom_call.1} parent=35 // pred_region
          %p236 = scmp.lt.s32.totalorder %s16, 1
          %s237 = scalar_select %p236, %s16, 1
          %s238 = smul.addr %s237, 32
          %s239 = smul.addr %s238, 8
          %s240 = scalar_lea.vmem %s0, %s239
        $region40: #{tpu_custom_call.1} parent=35 // pred_fallthru
          _
        // Predicated region
        $region41: #{tpu_custom_call.1} parent=35 // pred_check
          %p241 = pneg %p62
        $region42: #{tpu_custom_call.1} parent=35 // pred_check_branch
          %243 = sbr.rel (%p241) target = $region44
        $region43: #{tpu_custom_call.1} parent=35 // pred_region
          %p244 = scmp.lt.s32.totalorder %s16, 1
          %s245 = scalar_select %p244, %s16, 1
          %s246 = smul.addr %s245, 8
          %s247 = smul.addr %s246, 8
          %s248 = scalar_lea.vmem %s1, %s247
        $region44: #{tpu_custom_call.1} parent=35 // pred_fallthru
          _
      $region36: #{tpu_custom_call.1} parent=5 // pred_fallthru
        _
      %p249 = scmp.le.s32.totalorder 1, %s16
      %p250 = scmp.lt.s32.totalorder %s16, 3
      %p251 = pnand %p249, %p250
      %p252 = pneg %p251
      // Predicated region
      $region45: #{tpu_custom_call.1} parent=5 // pred_check
        _
      $region46: #{tpu_custom_call.1} parent=5 // pred_check_branch
        %254 = sbr.rel (%p251) target = $region48
      $region47: #{tpu_custom_call.1} parent=5 // pred_region
        %s255 = ssub.s32 %s16, 1
        %p256 = scmp.lt.s32.totalorder %s21, 1
        %s257 = scalar_select %p256, %s21, 1
        %s258 = smul.addr %s257, 32
        %s259 = smul.addr %s258, 8
        %s260 = scalar_lea.vmem %s0, %s259
        %p261 = pneg %p42
        %p262 = pneg %p39
        %p263 = scmp.lt.s32.totalorder %s21, 1
        %s264 = scalar_select %p263, %s21, 1
        %s265 = smul.addr %s264, 8
        %s266 = smul.addr %s265, 8
        %s267 = scalar_lea.vmem %s1, %s266
        %p268 = pneg %p68
        %p269 = pneg %p65
        %p270 = pneg %p89
        %p271 = pneg %p86
        %p272 = pneg %p110
        %p273 = pneg %p107
        %p274 = pneg %p131
        %p275 = pneg %p128
        %p276 = pneg %p152
        %p277 = pneg %p149
        %p278 = pneg %p173
        %p279 = pneg %p170
        %p280 = pneg %p199
        %p281 = pneg %p196
        %s282 = sand.u32 %s186, 1
        %s283 = scalar_lea.sflag [#allocation11], %s282
        %s284 = sand.u32 %s186, 1
        %s285 = smul.addr %s284, 64
        %s286 = scalar_lea.vmem [#allocation10], %s285
        %p287 = scmp.lt.s32.totalorder %s21, 1
        %s288 = scalar_select %p287, %s21, 1
        %s289 = smul.addr %s288, 32
        %s290 = smul.addr %s289, 8
        %s291 = scalar_lea.vmem %s0, %s290
        %p292 = scmp.lt.s32.totalorder %s21, 1
        %s293 = scalar_select %p292, %s21, 1
        %s294 = smul.addr %s293, 8
        %s295 = smul.addr %s294, 8
        %s296 = scalar_lea.vmem %s1, %s295
        %v298 = vld [vmem:[%s5] sm:$0x3]
        %v299 = vld [vmem:[%s6] sm:$0xf]
        %v300 = vld [vmem:[%s291] sm:$0xff]
        %v301 = vld [vmem:[%s291 + $0x8] sm:$0xff]
        %v302 = vld [vmem:[%s291 + $0x10] sm:$0xff]
        %v303 = vld [vmem:[%s291 + $0x18] sm:$0xff]
        %v304 = vld [vmem:[%s291 + $0x20] sm:$0xff]
        %v305 = vld [vmem:[%s291 + $0x28] sm:$0xff]
        %v306 = vld [vmem:[%s291 + $0x30] sm:$0xff]
        %v307 = vld [vmem:[%s291 + $0x38] sm:$0xff]
        %v308 = vld [vmem:[%s291 + $0x40] sm:$0xff]
        %v309 = vld [vmem:[%s291 + $0x48] sm:$0xff]
        %v310 = vld [vmem:[%s291 + $0x50] sm:$0xff]
        %v311 = vld [vmem:[%s291 + $0x58] sm:$0xff]
        %v312 = vld [vmem:[%s291 + $0x60] sm:$0xff]
        %v313 = vld [vmem:[%s291 + $0x68] sm:$0xff]
        %v314 = vld [vmem:[%s291 + $0x70] sm:$0xff]
        %v315 = vld [vmem:[%s291 + $0x78] sm:$0xff]
        %v316 = vld [vmem:[%s291 + $0x80] sm:$0xff]
        %v317 = vld [vmem:[%s291 + $0x88] sm:$0xff]
        %v318 = vld [vmem:[%s291 + $0x90] sm:$0xff]
        %v319 = vld [vmem:[%s291 + $0x98] sm:$0xff]
        %v320 = vld [vmem:[%s291 + $0xa0] sm:$0xff]
        %v321 = vld [vmem:[%s291 + $0xa8] sm:$0xff]
        %v322 = vld [vmem:[%s291 + $0xb0] sm:$0xff]
        %v323 = vld [vmem:[%s291 + $0xb8] sm:$0xff]
        %v324 = vld [vmem:[%s291 + $0xc0] sm:$0xff]
        %v325 = vld [vmem:[%s291 + $0xc8] sm:$0xff]
        %v326 = vld [vmem:[%s291 + $0xd0] sm:$0xff]
        %v327 = vld [vmem:[%s291 + $0xd8] sm:$0xff]
        %v328 = vld [vmem:[%s291 + $0xe0] sm:$0xff]
        %v329 = vld [vmem:[%s291 + $0xe8] sm:$0xff]
        %v330 = vld [vmem:[%s291 + $0xf0] sm:$0xff]
        %v331 = vld [vmem:[%s291 + $0xf8] sm:$0xff]
        %vm332 = vcmask 64512
        %333 = vst.msk [vmem:[#allocation2] sm:$0xff] %vm332, 0.0
        %334 = vst.msk [vmem:[#allocation2 + $0x8] sm:$0xff] %vm332, 0.0
        %vm335 = vcmask 58368
        %336 = vst.msk [vmem:[#allocation2 + $0x10] sm:$0x3] %vm335, 0.0
        %s337 = scalar_lea.vmem [#allocation2], 408
        %338 = vst.msk [vmem:[%s337] sm:$0xff] %vm332, 0.0
        %339 = vst.msk [vmem:[%s337 + $0x8] sm:$0xff] %vm332, 0.0
        %340 = vst.msk [vmem:[%s337 + $0x10] sm:$0x3] %vm335, 0.0
        %s341 = scalar_lea.vmem [#allocation2], 24
        %vm342 = vcmask 57344
        %343 = vst.msk [vmem:[%s341] sm:$0x1] %vm342, 0.0
        %344 = vst.msk [vmem:[%s341 + $0x18] sm:$0x1] %vm342, 0.0
        %345 = vst.msk [vmem:[%s341 + $0x30] sm:$0x1] %vm342, 0.0
        %346 = vst.msk [vmem:[%s341 + $0x48] sm:$0x1] %vm342, 0.0
        %347 = vst.msk [vmem:[%s341 + $0x60] sm:$0x1] %vm342, 0.0
        %348 = vst.msk [vmem:[%s341 + $0x78] sm:$0x1] %vm342, 0.0
        %349 = vst.msk [vmem:[%s341 + $0x90] sm:$0x1] %vm342, 0.0
        %350 = vst.msk [vmem:[%s341 + $0xa8] sm:$0x1] %vm342, 0.0
        %351 = vst.msk [vmem:[%s341 + $0xc0] sm:$0x1] %vm342, 0.0
        %352 = vst.msk [vmem:[%s341 + $0xd8] sm:$0x1] %vm342, 0.0
        %353 = vst.msk [vmem:[%s341 + $0xf0] sm:$0x1] %vm342, 0.0
        %354 = vst.msk [vmem:[%s341 + $0x108] sm:$0x1] %vm342, 0.0
        %355 = vst.msk [vmem:[%s341 + $0x120] sm:$0x1] %vm342, 0.0
        %356 = vst.msk [vmem:[%s341 + $0x138] sm:$0x1] %vm342, 0.0
        %357 = vst.msk [vmem:[%s341 + $0x150] sm:$0x1] %vm342, 0.0
        %358 = vst.msk [vmem:[%s341 + $0x168] sm:$0x1] %vm342, 0.0
        %359 = vst.msk [vmem:[%s341 + $0x11] sm:$0x1] %vm342, 0.0
        %360 = vst.msk [vmem:[%s341 + $0x29] sm:$0x1] %vm342, 0.0
        %361 = vst.msk [vmem:[%s341 + $0x41] sm:$0x1] %vm342, 0.0
        %362 = vst.msk [vmem:[%s341 + $0x59] sm:$0x1] %vm342, 0.0
        %363 = vst.msk [vmem:[%s341 + $0x71] sm:$0x1] %vm342, 0.0
        %364 = vst.msk [vmem:[%s341 + $0x89] sm:$0x1] %vm342, 0.0
        %365 = vst.msk [vmem:[%s341 + $0xa1] sm:$0x1] %vm342, 0.0
        %366 = vst.msk [vmem:[%s341 + $0xb9] sm:$0x1] %vm342, 0.0
        %367 = vst.msk [vmem:[%s341 + $0xd1] sm:$0x1] %vm342, 0.0
        %368 = vst.msk [vmem:[%s341 + $0xe9] sm:$0x1] %vm342, 0.0
        %369 = vst.msk [vmem:[%s341 + $0x101] sm:$0x1] %vm342, 0.0
        %370 = vst.msk [vmem:[%s341 + $0x119] sm:$0x1] %vm342, 0.0
        %371 = vst.msk [vmem:[%s341 + $0x131] sm:$0x1] %vm342, 0.0
        %372 = vst.msk [vmem:[%s341 + $0x149] sm:$0x1] %vm342, 0.0
        %373 = vst.msk [vmem:[%s341 + $0x161] sm:$0x1] %vm342, 0.0
        %374 = vst.msk [vmem:[%s341 + $0x179] sm:$0x1] %vm342, 0.0
        %v375 = vlaneseq
        %v376 = vshrl.u32 %v375, 7
        %v377 = vsub.s32 0, %v376
        %v378 = vrot.slane %v298, %v377
        %v379 = vmul.f32 %v300, %v378
        %v380 = vmul.f32 %v301, %v378
        %v381 = vmul.f32 %v302, %v378
        %v382 = vmul.f32 %v303, %v378
        %v383 = vmul.f32 %v304, %v378
        %v384 = vmul.f32 %v305, %v378
        %v385 = vmul.f32 %v306, %v378
        %v386 = vmul.f32 %v307, %v378
        %v387 = vmul.f32 %v308, %v378
        %v388 = vmul.f32 %v309, %v378
        %v389 = vmul.f32 %v310, %v378
        %v390 = vmul.f32 %v311, %v378
        %v391 = vmul.f32 %v312, %v378
        %v392 = vmul.f32 %v313, %v378
        %v393 = vmul.f32 %v314, %v378
        %v394 = vmul.f32 %v315, %v378
        %v395 = vmul.f32 %v316, %v378
        %v396 = vmul.f32 %v317, %v378
        %v397 = vmul.f32 %v318, %v378
        %v398 = vmul.f32 %v319, %v378
        %v399 = vmul.f32 %v320, %v378
        %v400 = vmul.f32 %v321, %v378
        %v401 = vmul.f32 %v322, %v378
        %v402 = vmul.f32 %v323, %v378
        %v403 = vmul.f32 %v324, %v378
        %v404 = vmul.f32 %v325, %v378
        %v405 = vmul.f32 %v326, %v378
        %v406 = vmul.f32 %v327, %v378
        %v407 = vmul.f32 %v328, %v378
        %v408 = vmul.f32 %v329, %v378
        %v409 = vmul.f32 %v330, %v378
        %v410 = vmul.f32 %v331, %v378
        %v411 = vlaneseq
        %v412 = vshrl.u32 %v411, 7
        %v413 = vsub.s32 1, %v412
        %v414 = vrot.slane %v298, %v413
        %v415 = vadd.f32 %v379, %v414
        %v416 = vadd.f32 %v380, %v414
        %v417 = vadd.f32 %v381, %v414
        %v418 = vadd.f32 %v382, %v414
        %v419 = vadd.f32 %v383, %v414
        %v420 = vadd.f32 %v384, %v414
        %v421 = vadd.f32 %v385, %v414
        %v422 = vadd.f32 %v386, %v414
        %v423 = vadd.f32 %v387, %v414
        %v424 = vadd.f32 %v388, %v414
        %v425 = vadd.f32 %v389, %v414
        %v426 = vadd.f32 %v390, %v414
        %v427 = vadd.f32 %v391, %v414
        %v428 = vadd.f32 %v392, %v414
        %v429 = vadd.f32 %v393, %v414
        %v430 = vadd.f32 %v394, %v414
        %v431 = vadd.f32 %v395, %v414
        %v432 = vadd.f32 %v396, %v414
        %v433 = vadd.f32 %v397, %v414
        %v434 = vadd.f32 %v398, %v414
        %v435 = vadd.f32 %v399, %v414
        %v436 = vadd.f32 %v400, %v414
        %v437 = vadd.f32 %v401, %v414
        %v438 = vadd.f32 %v402, %v414
        %v439 = vadd.f32 %v403, %v414
        %v440 = vadd.f32 %v404, %v414
        %v441 = vadd.f32 %v405, %v414
        %v442 = vadd.f32 %v406, %v414
        %v443 = vadd.f32 %v407, %v414
        %v444 = vadd.f32 %v408, %v414
        %v445 = vadd.f32 %v409, %v414
        %v446 = vadd.f32 %v410, %v414
        %447 = vst.msk [vmem:[%s341 + $0x1] sm:$0xff] %vm332, %v415
        %448 = vst.msk [vmem:[%s341 + $0x9] sm:$0xff] %vm332, %v416
        %449 = vst.msk [vmem:[%s341 + $0x19] sm:$0xff] %vm332, %v417
        %450 = vst.msk [vmem:[%s341 + $0x21] sm:$0xff] %vm332, %v418
        %451 = vst.msk [vmem:[%s341 + $0x31] sm:$0xff] %vm332, %v419
        %452 = vst.msk [vmem:[%s341 + $0x39] sm:$0xff] %vm332, %v420
        %453 = vst.msk [vmem:[%s341 + $0x49] sm:$0xff] %vm332, %v421
        %454 = vst.msk [vmem:[%s341 + $0x51] sm:$0xff] %vm332, %v422
        %455 = vst.msk [vmem:[%s341 + $0x61] sm:$0xff] %vm332, %v423
        %456 = vst.msk [vmem:[%s341 + $0x69] sm:$0xff] %vm332, %v424
        %457 = vst.msk [vmem:[%s341 + $0x79] sm:$0xff] %vm332, %v425
        %458 = vst.msk [vmem:[%s341 + $0x81] sm:$0xff] %vm332, %v426
        %459 = vst.msk [vmem:[%s341 + $0x91] sm:$0xff] %vm332, %v427
        %460 = vst.msk [vmem:[%s341 + $0x99] sm:$0xff] %vm332, %v428
        %461 = vst.msk [vmem:[%s341 + $0xa9] sm:$0xff] %vm332, %v429
        %462 = vst.msk [vmem:[%s341 + $0xb1] sm:$0xff] %vm332, %v430
        %463 = vst.msk [vmem:[%s341 + $0xc1] sm:$0xff] %vm332, %v431
        %464 = vst.msk [vmem:[%s341 + $0xc9] sm:$0xff] %vm332, %v432
        %465 = vst.msk [vmem:[%s341 + $0xd9] sm:$0xff] %vm332, %v433
        %466 = vst.msk [vmem:[%s341 + $0xe1] sm:$0xff] %vm332, %v434
        %467 = vst.msk [vmem:[%s341 + $0xf1] sm:$0xff] %vm332, %v435
        %468 = vst.msk [vmem:[%s341 + $0xf9] sm:$0xff] %vm332, %v436
        %469 = vst.msk [vmem:[%s341 + $0x109] sm:$0xff] %vm332, %v437
        %470 = vst.msk [vmem:[%s341 + $0x111] sm:$0xff] %vm332, %v438
        %471 = vst.msk [vmem:[%s341 + $0x121] sm:$0xff] %vm332, %v439
        %472 = vst.msk [vmem:[%s341 + $0x129] sm:$0xff] %vm332, %v440
        %473 = vst.msk [vmem:[%s341 + $0x139] sm:$0xff] %vm332, %v441
        %474 = vst.msk [vmem:[%s341 + $0x141] sm:$0xff] %vm332, %v442
        %475 = vst.msk [vmem:[%s341 + $0x151] sm:$0xff] %vm332, %v443
        %476 = vst.msk [vmem:[%s341 + $0x159] sm:$0xff] %vm332, %v444
        %477 = vst.msk [vmem:[%s341 + $0x169] sm:$0xff] %vm332, %v445
        %478 = vst.msk [vmem:[%s341 + $0x171] sm:$0xff] %vm332, %v446
        %v479 = vld [vmem:[#allocation2] sm:$0xff]
        %v480 = vld [vmem:[#allocation2 + $0x8] sm:$0xff]
        %v481 = vld [vmem:[#allocation2 + $0x18] sm:$0xff]
        %v482 = vld [vmem:[#allocation2 + $0x20] sm:$0xff]
        %v483 = vld [vmem:[#allocation2 + $0x30] sm:$0xff]
        %v484 = vld [vmem:[#allocation2 + $0x38] sm:$0xff]
        %v485 = vld [vmem:[#allocation2 + $0x48] sm:$0xff]
        %v486 = vld [vmem:[#allocation2 + $0x50] sm:$0xff]
        %v487 = vld [vmem:[#allocation2 + $0x60] sm:$0xff]
        %v488 = vld [vmem:[#allocation2 + $0x68] sm:$0xff]
        %v489 = vld [vmem:[#allocation2 + $0x78] sm:$0xff]
        %v490 = vld [vmem:[#allocation2 + $0x80] sm:$0xff]
        %v491 = vld [vmem:[#allocation2 + $0x90] sm:$0xff]
        %v492 = vld [vmem:[#allocation2 + $0x98] sm:$0xff]
        %v493 = vld [vmem:[#allocation2 + $0xa8] sm:$0xff]
        %v494 = vld [vmem:[#allocation2 + $0xb0] sm:$0xff]
        %v495 = vld [vmem:[#allocation2 + $0xc0] sm:$0xff]
        %v496 = vld [vmem:[#allocation2 + $0xc8] sm:$0xff]
        %v497 = vld [vmem:[#allocation2 + $0xd8] sm:$0xff]
        %v498 = vld [vmem:[#allocation2 + $0xe0] sm:$0xff]
        %v499 = vld [vmem:[#allocation2 + $0xf0] sm:$0xff]
        %v500 = vld [vmem:[#allocation2 + $0xf8] sm:$0xff]
        %v501 = vld [vmem:[#allocation2 + $0x108] sm:$0xff]
        %v502 = vld [vmem:[#allocation2 + $0x110] sm:$0xff]
        %v503 = vld [vmem:[#allocation2 + $0x120] sm:$0xff]
        %v504 = vld [vmem:[#allocation2 + $0x128] sm:$0xff]
        %v505 = vld [vmem:[#allocation2 + $0x138] sm:$0xff]
        %v506 = vld [vmem:[#allocation2 + $0x140] sm:$0xff]
        %v507 = vld [vmem:[#allocation2 + $0x150] sm:$0xff]
        %v508 = vld [vmem:[#allocation2 + $0x158] sm:$0xff]
        %v509 = vld [vmem:[#allocation2 + $0x168] sm:$0xff]
        %v510 = vld [vmem:[#allocation2 + $0x170] sm:$0xff]
        %v511 = vld [vmem:[#allocation2 + $0x1] sm:$0xff]
        %v512 = vld [vmem:[#allocation2 + $0x9] sm:$0xff]
        %v513 = vld [vmem:[#allocation2 + $0x19] sm:$0xff]
        %v514 = vld [vmem:[#allocation2 + $0x21] sm:$0xff]
        %v515 = vld [vmem:[#allocation2 + $0x31] sm:$0xff]
        %v516 = vld [vmem:[#allocation2 + $0x39] sm:$0xff]
        %v517 = vld [vmem:[#allocation2 + $0x49] sm:$0xff]
        %v518 = vld [vmem:[#allocation2 + $0x51] sm:$0xff]
        %v519 = vld [vmem:[#allocation2 + $0x61] sm:$0xff]
        %v520 = vld [vmem:[#allocation2 + $0x69] sm:$0xff]
        %v521 = vld [vmem:[#allocation2 + $0x79] sm:$0xff]
        %v522 = vld [vmem:[#allocation2 + $0x81] sm:$0xff]
        %v523 = vld [vmem:[#allocation2 + $0x91] sm:$0xff]
        %v524 = vld [vmem:[#allocation2 + $0x99] sm:$0xff]
        %v525 = vld [vmem:[#allocation2 + $0xa9] sm:$0xff]
        %v526 = vld [vmem:[#allocation2 + $0xb1] sm:$0xff]
        %v527 = vld [vmem:[#allocation2 + $0xc1] sm:$0xff]
        %v528 = vld [vmem:[#allocation2 + $0xc9] sm:$0xff]
        %v529 = vld [vmem:[#allocation2 + $0xd9] sm:$0xff]
        %v530 = vld [vmem:[#allocation2 + $0xe1] sm:$0xff]
        %v531 = vld [vmem:[#allocation2 + $0xf1] sm:$0xff]
        %v532 = vld [vmem:[#allocation2 + $0xf9] sm:$0xff]
        %v533 = vld [vmem:[#allocation2 + $0x109] sm:$0xff]
        %v534 = vld [vmem:[#allocation2 + $0x111] sm:$0xff]
        %v535 = vld [vmem:[#allocation2 + $0x121] sm:$0xff]
        %v536 = vld [vmem:[#allocation2 + $0x129] sm:$0xff]
        %v537 = vld [vmem:[#allocation2 + $0x139] sm:$0xff]
        %v538 = vld [vmem:[#allocation2 + $0x141] sm:$0xff]
        %v539 = vld [vmem:[#allocation2 + $0x151] sm:$0xff]
        %v540 = vld [vmem:[#allocation2 + $0x159] sm:$0xff]
        %v541 = vld [vmem:[#allocation2 + $0x169] sm:$0xff]
        %v542 = vld [vmem:[#allocation2 + $0x171] sm:$0xff]
        %v543 = vld [vmem:[#allocation2 + $0x2] sm:$0xff]
        %v544 = vld [vmem:[#allocation2 + $0xa] sm:$0xff]
        %v545 = vld [vmem:[#allocation2 + $0x1a] sm:$0xff]
        %v546 = vld [vmem:[#allocation2 + $0x22] sm:$0xff]
        %v547 = vld [vmem:[#allocation2 + $0x32] sm:$0xff]
        %v548 = vld [vmem:[#allocation2 + $0x3a] sm:$0xff]
        %v549 = vld [vmem:[#allocation2 + $0x4a] sm:$0xff]
        %v550 = vld [vmem:[#allocation2 + $0x52] sm:$0xff]
        %v551 = vld [vmem:[#allocation2 + $0x62] sm:$0xff]
        %v552 = vld [vmem:[#allocation2 + $0x6a] sm:$0xff]
        %v553 = vld [vmem:[#allocation2 + $0x7a] sm:$0xff]
        %v554 = vld [vmem:[#allocation2 + $0x82] sm:$0xff]
        %v555 = vld [vmem:[#allocation2 + $0x92] sm:$0xff]
        %v556 = vld [vmem:[#allocation2 + $0x9a] sm:$0xff]
        %v557 = vld [vmem:[#allocation2 + $0xaa] sm:$0xff]
        %v558 = vld [vmem:[#allocation2 + $0xb2] sm:$0xff]
        %v559 = vld [vmem:[#allocation2 + $0xc2] sm:$0xff]
        %v560 = vld [vmem:[#allocation2 + $0xca] sm:$0xff]
        %v561 = vld [vmem:[#allocation2 + $0xda] sm:$0xff]
        %v562 = vld [vmem:[#allocation2 + $0xe2] sm:$0xff]
        %v563 = vld [vmem:[#allocation2 + $0xf2] sm:$0xff]
        %v564 = vld [vmem:[#allocation2 + $0xfa] sm:$0xff]
        %v565 = vld [vmem:[#allocation2 + $0x10a] sm:$0xff]
        %v566 = vld [vmem:[#allocation2 + $0x112] sm:$0xff]
        %v567 = vld [vmem:[#allocation2 + $0x122] sm:$0xff]
        %v568 = vld [vmem:[#allocation2 + $0x12a] sm:$0xff]
        %v569 = vld [vmem:[#allocation2 + $0x13a] sm:$0xff]
        %v570 = vld [vmem:[#allocation2 + $0x142] sm:$0xff]
        %v571 = vld [vmem:[#allocation2 + $0x152] sm:$0xff]
        %v572 = vld [vmem:[#allocation2 + $0x15a] sm:$0xff]
        %v573 = vld [vmem:[#allocation2 + $0x16a] sm:$0xff]
        %v574 = vld [vmem:[#allocation2 + $0x172] sm:$0xff]
        %v575 = vld [vmem:[%s2] sm:$0xf]
        %v576 = vld [vmem:[%s2 + $0x4] sm:$0xf]
        %v577 = vld [vmem:[%s2 + $0x8] sm:$0xf]
        %v578 = vpack.c.bf16 %v480, %v479
        %v579 = vpack.c.bf16 %v482, %v481
        %v580 = vpack.c.bf16 %v484, %v483
        %v581 = vpack.c.bf16 %v486, %v485
        %v582 = vpack.c.bf16 %v488, %v487
        %v583 = vpack.c.bf16 %v490, %v489
        %v584 = vpack.c.bf16 %v492, %v491
        %v585 = vpack.c.bf16 %v494, %v493
        %v586 = vpack.c.bf16 %v496, %v495
        %v587 = vpack.c.bf16 %v498, %v497
        %v588 = vpack.c.bf16 %v500, %v499
        %v589 = vpack.c.bf16 %v502, %v501
        %v590 = vpack.c.bf16 %v504, %v503
        %v591 = vpack.c.bf16 %v506, %v505
        %v592 = vpack.c.bf16 %v508, %v507
        %v593 = vpack.c.bf16 %v510, %v509
        %v594 = vpack.c.bf16 %v512, %v511
        %v595 = vpack.c.bf16 %v514, %v513
        %v596 = vpack.c.bf16 %v516, %v515
        %v597 = vpack.c.bf16 %v518, %v517
        %v598 = vpack.c.bf16 %v520, %v519
        %v599 = vpack.c.bf16 %v522, %v521
        %v600 = vpack.c.bf16 %v524, %v523
        %v601 = vpack.c.bf16 %v526, %v525
        %v602 = vpack.c.bf16 %v528, %v527
        %v603 = vpack.c.bf16 %v530, %v529
        %v604 = vpack.c.bf16 %v532, %v531
        %v605 = vpack.c.bf16 %v534, %v533
        %v606 = vpack.c.bf16 %v536, %v535
        %v607 = vpack.c.bf16 %v538, %v537
        %v608 = vpack.c.bf16 %v540, %v539
        %v609 = vpack.c.bf16 %v542, %v541
        %v611 = vsel %vm332, %v594, 0
        %v614 = vsel %vm332, %v595, 0
        %v617 = vsel %vm332, %v596, 0
        %v620 = vsel %vm332, %v597, 0
        %v623 = vsel %vm332, %v598, 0
        %v626 = vsel %vm332, %v599, 0
        %v629 = vsel %vm332, %v600, 0
        %v632 = vsel %vm332, %v601, 0
        %v635 = vsel %vm332, %v602, 0
        %v638 = vsel %vm332, %v603, 0
        %v641 = vsel %vm332, %v604, 0
        %v644 = vsel %vm332, %v605, 0
        %v647 = vsel %vm332, %v606, 0
        %v650 = vsel %vm332, %v607, 0
        %v653 = vsel %vm332, %v608, 0
        %v656 = vsel %vm332, %v609, 0
        %vm658 = vcmask 1043456
        %v660 = vsel %vm658, %v576, 0
        %662 = vmatprep.subr.bf16.mxu0 0
        %663 = vmatpush1.bf16.msra.mxu0 %v660
        %664 = vmatprep.subr.bf16.mxu0 0
        %665 = vmatpush1.bf16.msra.mxu0 0
        %666 = vmatprep.subr.bf16.mxu0 0
        %667 = vmatpush1.bf16.msra.mxu0 0
        %668 = vmatprep.subr.bf16.mxu0 0
        %669 = vmatpush1.bf16.msra.mxu0 0
        %670 = vmatprep.subr.bf16.mxu0 0
        %671 = vmatpush1.bf16.msra.mxu0 0
        %672 = vmatprep.subr.bf16.mxu0 0
        %673 = vmatpush1.bf16.msra.mxu0 0
        %674 = vmatprep.subr.bf16.mxu0 0
        %675 = vmatpush1.bf16.msra.mxu0 0
        %676 = vmatprep.subr.bf16.mxu0 0
        %677 = vmatpush1.bf16.msra.mxu0 0
        %678 = vmatprep.subr.bf16.mxu0 0
        %679 = vmatpush1.bf16.msra.mxu0 0
        %680 = vmatprep.subr.bf16.mxu0 0
        %681 = vmatpush1.bf16.msra.mxu0 0
        %682 = vmatprep.subr.bf16.mxu0 0
        %683 = vmatpush1.bf16.msra.mxu0 0
        %684 = vmatprep.subr.bf16.mxu0 0
        %685 = vmatpush1.bf16.msra.mxu0 0
        %686 = vmatprep.subr.bf16.mxu0 0
        %687 = vmatpush1.bf16.msra.mxu0 0
        %688 = vmatprep.subr.bf16.mxu0 0
        %689 = vmatpush1.bf16.msra.mxu0 0
        %690 = vmatprep.subr.bf16.mxu0 0
        %691 = vmatpush1.bf16.msra.mxu0 0
        %692 = vmatprep.subr.bf16.mxu0 0
        %693 = vmatpush1.bf16.msra.mxu0 0
        %694 = vmatprep.mubr.bf16.mxu0 0
        %695 = vmatmul.mubr.bf16.gmra.mrb[0].mxu0 %v611
        %v696 = vpop.f32.mrb[0].mxu0
        %v697 = vadd.f32 0.0, %v696
        %v698 = vpop.f32.mrb[0].mxu0
        %v699 = vpop.f32.mrb[0].mxu0
        %v700 = vadd.f32 0.0, %v699
        %v701 = vpop.f32.mrb[0].mxu0
        %702 = vmatprep.mubr.bf16.mxu0 0
        %703 = vmatmul.mubr.bf16.gmra.mrb[0].mxu0 %v614
        %v704 = vpop.f32.mrb[0].mxu0
        %v705 = vadd.f32 0.0, %v704
        %v706 = vpop.f32.mrb[0].mxu0
        %v707 = vpop.f32.mrb[0].mxu0
        %v708 = vadd.f32 0.0, %v707
        %v709 = vpop.f32.mrb[0].mxu0
        %710 = vmatprep.mubr.bf16.mxu0 0
        %711 = vmatmul.mubr.bf16.gmra.mrb[0].mxu0 %v617
        %v712 = vpop.f32.mrb[0].mxu0
        %v713 = vadd.f32 0.0, %v712
        %v714 = vpop.f32.mrb[0].mxu0
        %v715 = vpop.f32.mrb[0].mxu0
        %v716 = vadd.f32 0.0, %v715
        %v717 = vpop.f32.mrb[0].mxu0
        %718 = vmatprep.mubr.bf16.mxu0 0
        %719 = vmatmul.mubr.bf16.gmra.mrb[0].mxu0 %v620
        %v720 = vpop.f32.mrb[0].mxu0
        %v721 = vadd.f32 0.0, %v720
        %v722 = vpop.f32.mrb[0].mxu0
        %v723 = vpop.f32.mrb[0].mxu0
        %v724 = vadd.f32 0.0, %v723
        %v725 = vpop.f32.mrb[0].mxu0
        %726 = vmatprep.mubr.bf16.mxu0 0
        %727 = vmatmul.mubr.bf16.gmra.mrb[0].mxu0 %v623
        %v728 = vpop.f32.mrb[0].mxu0
        %v729 = vadd.f32 0.0, %v728
        %v730 = vpop.f32.mrb[0].mxu0
        %v731 = vpop.f32.mrb[0].mxu0
        %v732 = vadd.f32 0.0, %v731
        %v733 = vpop.f32.mrb[0].mxu0
        %734 = vmatprep.mubr.bf16.mxu0 0
        %735 = vmatmul.mubr.bf16.gmra.mrb[0].mxu0 %v626
        %v736 = vpop.f32.mrb[0].mxu0
        %v737 = vadd.f32 0.0, %v736
        %v738 = vpop.f32.mrb[0].mxu0
        %v739 = vpop.f32.mrb[0].mxu0
        %v740 = vadd.f32 0.0, %v739
        %v741 = vpop.f32.mrb[0].mxu0
        %742 = vmatprep.mubr.bf16.mxu0 0
        %743 = vmatmul.mubr.bf16.gmra.mrb[0].mxu0 %v629
        %v744 = vpop.f32.mrb[0].mxu0
        %v745 = vadd.f32 0.0, %v744
        %v746 = vpop.f32.mrb[0].mxu0
        %v747 = vpop.f32.mrb[0].mxu0
        %v748 = vadd.f32 0.0, %v747
        %v749 = vpop.f32.mrb[0].mxu0
        %750 = vmatprep.mubr.bf16.mxu0 0
        %751 = vmatmul.mubr.bf16.gmra.mrb[0].mxu0 %v632
        %v752 = vpop.f32.mrb[0].mxu0
        %v753 = vadd.f32 0.0, %v752
        %v754 = vpop.f32.mrb[0].mxu0
        %v755 = vpop.f32.mrb[0].mxu0
        %v756 = vadd.f32 0.0, %v755
        %v757 = vpop.f32.mrb[0].mxu0
        %758 = vmatprep.mubr.bf16.mxu0 0
        %759 = vmatmul.mubr.bf16.gmra.mrb[0].mxu0 %v635
        %v760 = vpop.f32.mrb[0].mxu0
        %v761 = vadd.f32 0.0, %v760
        %v762 = vpop.f32.mrb[0].mxu0
        %v763 = vpop.f32.mrb[0].mxu0
        %v764 = vadd.f32 0.0, %v763
        %v765 = vpop.f32.mrb[0].mxu0
        %766 = vmatprep.mubr.bf16.mxu0 0
        %767 = vmatmul.mubr.bf16.gmra.mrb[0].mxu0 %v638
        %v768 = vpop.f32.mrb[0].mxu0
        %v769 = vadd.f32 0.0, %v768
        %v770 = vpop.f32.mrb[0].mxu0
        %v771 = vpop.f32.mrb[0].mxu0
        %v772 = vadd.f32 0.0, %v771
        %v773 = vpop.f32.mrb[0].mxu0
        %774 = vmatprep.mubr.bf16.mxu0 0
        %775 = vmatmul.mubr.bf16.gmra.mrb[0].mxu0 %v641
        %v776 = vpop.f32.mrb[0].mxu0
        %v777 = vadd.f32 0.0, %v776
        %v778 = vpop.f32.mrb[0].mxu0
        %v779 = vpop.f32.mrb[0].mxu0
        %v780 = vadd.f32 0.0, %v779
        %v781 = vpop.f32.mrb[0].mxu0
        %782 = vmatprep.mubr.bf16.mxu0 0
        %783 = vmatmul.mubr.bf16.gmra.mrb[0].mxu0 %v644
        %v784 = vpop.f32.mrb[0].mxu0
        %v785 = vadd.f32 0.0, %v784
        %v786 = vpop.f32.mrb[0].mxu0
        %v787 = vpop.f32.mrb[0].mxu0
        %v788 = vadd.f32 0.0, %v787
        %v789 = vpop.f32.mrb[0].mxu0
        %790 = vmatprep.mubr.bf16.mxu0 0
        %791 = vmatmul.mubr.bf16.gmra.mrb[0].mxu0 %v647
        %v792 = vpop.f32.mrb[0].mxu0
        %v793 = vadd.f32 0.0, %v792
        %v794 = vpop.f32.mrb[0].mxu0
        %v795 = vpop.f32.mrb[0].mxu0
        %v796 = vadd.f32 0.0, %v795
        %v797 = vpop.f32.mrb[0].mxu0
        %798 = vmatprep.mubr.bf16.mxu0 0
        %799 = vmatmul.mubr.bf16.gmra.mrb[0].mxu0 %v650
        %v800 = vpop.f32.mrb[0].mxu0
        %v801 = vadd.f32 0.0, %v800
        %v802 = vpop.f32.mrb[0].mxu0
        %v803 = vpop.f32.mrb[0].mxu0
        %v804 = vadd.f32 0.0, %v803
        %v805 = vpop.f32.mrb[0].mxu0
        %806 = vmatprep.mubr.bf16.mxu0 0
        %807 = vmatmul.mubr.bf16.gmra.mrb[0].mxu0 %v653
        %v808 = vpop.f32.mrb[0].mxu0
        %v809 = vadd.f32 0.0, %v808
        %v810 = vpop.f32.mrb[0].mxu0
        %v811 = vpop.f32.mrb[0].mxu0
        %v812 = vadd.f32 0.0, %v811
        %v813 = vpop.f32.mrb[0].mxu0
        %814 = vmatprep.mubr.bf16.mxu0 0
        %815 = vmatmul.mubr.bf16.gmra.mrb[0].mxu0 %v656
        %v816 = vpop.f32.mrb[0].mxu0
        %v817 = vadd.f32 0.0, %v816
        %v818 = vpop.f32.mrb[0].mxu0
        %v819 = vpop.f32.mrb[0].mxu0
        %v820 = vadd.f32 0.0, %v819
        %v821 = vpop.f32.mrb[0].mxu0
        %822 = vdwg.mxu0
        %v824 = vsel %vm332, %v578, 0
        %v827 = vsel %vm332, %v579, 0
        %v830 = vsel %vm332, %v580, 0
        %v833 = vsel %vm332, %v581, 0
        %v836 = vsel %vm332, %v582, 0
        %v839 = vsel %vm332, %v583, 0
        %v842 = vsel %vm332, %v584, 0
        %v845 = vsel %vm332, %v585, 0
        %v848 = vsel %vm332, %v586, 0
        %v851 = vsel %vm332, %v587, 0
        %v854 = vsel %vm332, %v588, 0
        %v857 = vsel %vm332, %v589, 0
        %v860 = vsel %vm332, %v590, 0
        %v863 = vsel %vm332, %v591, 0
        %v866 = vsel %vm332, %v592, 0
        %v869 = vsel %vm332, %v593, 0
        %v872 = vsel %vm658, %v575, 0
        %874 = vmatprep.subr.bf16.mxu0 0
        %875 = vmatpush1.bf16.msra.mxu0 %v872
        %876 = vmatprep.subr.bf16.mxu0 0
        %877 = vmatpush1.bf16.msra.mxu0 0
        %878 = vmatprep.subr.bf16.mxu0 0
        %879 = vmatpush1.bf16.msra.mxu0 0
        %880 = vmatprep.subr.bf16.mxu0 0
        %881 = vmatpush1.bf16.msra.mxu0 0
        %882 = vmatprep.subr.bf16.mxu0 0
        %883 = vmatpush1.bf16.msra.mxu0 0
        %884 = vmatprep.subr.bf16.mxu0 0
        %885 = vmatpush1.bf16.msra.mxu0 0
        %886 = vmatprep.subr.bf16.mxu0 0
        %887 = vmatpush1.bf16.msra.mxu0 0
        %888 = vmatprep.subr.bf16.mxu0 0
        %889 = vmatpush1.bf16.msra.mxu0 0
        %890 = vmatprep.subr.bf16.mxu0 0
        %891 = vmatpush1.bf16.msra.mxu0 0
        %892 = vmatprep.subr.bf16.mxu0 0
        %893 = vmatpush1.bf16.msra.mxu0 0
        %894 = vmatprep.subr.bf16.mxu0 0
        %895 = vmatpush1.bf16.msra.mxu0 0
        %896 = vmatprep.subr.bf16.mxu0 0
        %897 = vmatpush1.bf16.msra.mxu0 0
        %898 = vmatprep.subr.bf16.mxu0 0
        %899 = vmatpush1.bf16.msra.mxu0 0
        %900 = vmatprep.subr.bf16.mxu0 0
        %901 = vmatpush1.bf16.msra.mxu0 0
        %902 = vmatprep.subr.bf16.mxu0 0
        %903 = vmatpush1.bf16.msra.mxu0 0
        %904 = vmatprep.subr.bf16.mxu0 0
        %905 = vmatpush1.bf16.msra.mxu0 0
        %906 = vmatprep.mubr.bf16.mxu0 0
        %907 = vmatmul.mubr.bf16.gmra.mrb[0].mxu0 %v824
        %v908 = vpop.f32.mrb[0].mxu0
        %v909 = vadd.f32 %v697, %v908
        %v910 = vpop.f32.mrb[0].mxu0
        %v911 = vpop.f32.mrb[0].mxu0
        %v912 = vadd.f32 %v700, %v911
        %v913 = vpop.f32.mrb[0].mxu0
        %914 = vmatprep.mubr.bf16.mxu0 0
        %915 = vmatmul.mubr.bf16.gmra.mrb[0].mxu0 %v827
        %v916 = vpop.f32.mrb[0].mxu0
        %v917 = vadd.f32 %v705, %v916
        %v918 = vpop.f32.mrb[0].mxu0
        %v919 = vpop.f32.mrb[0].mxu0
        %v920 = vadd.f32 %v708, %v919
        %v921 = vpop.f32.mrb[0].mxu0
        %922 = vmatprep.mubr.bf16.mxu0 0
        %923 = vmatmul.mubr.bf16.gmra.mrb[0].mxu0 %v830
        %v924 = vpop.f32.mrb[0].mxu0
        %v925 = vadd.f32 %v713, %v924
        %v926 = vpop.f32.mrb[0].mxu0
        %v927 = vpop.f32.mrb[0].mxu0
        %v928 = vadd.f32 %v716, %v927
        %v929 = vpop.f32.mrb[0].mxu0
        %930 = vmatprep.mubr.bf16.mxu0 0
        %931 = vmatmul.mubr.bf16.gmra.mrb[0].mxu0 %v833
        %v932 = vpop.f32.mrb[0].mxu0
        %v933 = vadd.f32 %v721, %v932
        %v934 = vpop.f32.mrb[0].mxu0
        %v935 = vpop.f32.mrb[0].mxu0
        %v936 = vadd.f32 %v724, %v935
        %v937 = vpop.f32.mrb[0].mxu0
        %938 = vmatprep.mubr.bf16.mxu0 0
        %939 = vmatmul.mubr.bf16.gmra.mrb[0].mxu0 %v836
        %v940 = vpop.f32.mrb[0].mxu0
        %v941 = vadd.f32 %v729, %v940
        %v942 = vpop.f32.mrb[0].mxu0
        %v943 = vpop.f32.mrb[0].mxu0
        %v944 = vadd.f32 %v732, %v943
        %v945 = vpop.f32.mrb[0].mxu0
        %946 = vmatprep.mubr.bf16.mxu0 0
        %947 = vmatmul.mubr.bf16.gmra.mrb[0].mxu0 %v839
        %v948 = vpop.f32.mrb[0].mxu0
        %v949 = vadd.f32 %v737, %v948
        %v950 = vpop.f32.mrb[0].mxu0
        %v951 = vpop.f32.mrb[0].mxu0
        %v952 = vadd.f32 %v740, %v951
        %v953 = vpop.f32.mrb[0].mxu0
        %954 = vmatprep.mubr.bf16.mxu0 0
        %955 = vmatmul.mubr.bf16.gmra.mrb[0].mxu0 %v842
        %v956 = vpop.f32.mrb[0].mxu0
        %v957 = vadd.f32 %v745, %v956
        %v958 = vpop.f32.mrb[0].mxu0
        %v959 = vpop.f32.mrb[0].mxu0
        %v960 = vadd.f32 %v748, %v959
        %v961 = vpop.f32.mrb[0].mxu0
        %962 = vmatprep.mubr.bf16.mxu0 0
        %963 = vmatmul.mubr.bf16.gmra.mrb[0].mxu0 %v845
        %v964 = vpop.f32.mrb[0].mxu0
        %v965 = vadd.f32 %v753, %v964
        %v966 = vpop.f32.mrb[0].mxu0
        %v967 = vpop.f32.mrb[0].mxu0
        %v968 = vadd.f32 %v756, %v967
        %v969 = vpop.f32.mrb[0].mxu0
        %970 = vmatprep.mubr.bf16.mxu0 0
        %971 = vmatmul.mubr.bf16.gmra.mrb[0].mxu0 %v848
        %v972 = vpop.f32.mrb[0].mxu0
        %v973 = vadd.f32 %v761, %v972
        %v974 = vpop.f32.mrb[0].mxu0
        %v975 = vpop.f32.mrb[0].mxu0
        %v976 = vadd.f32 %v764, %v975
        %v977 = vpop.f32.mrb[0].mxu0
        %978 = vmatprep.mubr.bf16.mxu0 0
        %979 = vmatmul.mubr.bf16.gmra.mrb[0].mxu0 %v851
        %v980 = vpop.f32.mrb[0].mxu0
        %v981 = vadd.f32 %v769, %v980
        %v982 = vpop.f32.mrb[0].mxu0
        %v983 = vpop.f32.mrb[0].mxu0
        %v984 = vadd.f32 %v772, %v983
        %v985 = vpop.f32.mrb[0].mxu0
        %986 = vmatprep.mubr.bf16.mxu0 0
        %987 = vmatmul.mubr.bf16.gmra.mrb[0].mxu0 %v854
        %v988 = vpop.f32.mrb[0].mxu0
        %v989 = vadd.f32 %v777, %v988
        %v990 = vpop.f32.mrb[0].mxu0
        %v991 = vpop.f32.mrb[0].mxu0
        %v992 = vadd.f32 %v780, %v991
        %v993 = vpop.f32.mrb[0].mxu0
        %994 = vmatprep.mubr.bf16.mxu0 0
        %995 = vmatmul.mubr.bf16.gmra.mrb[0].mxu0 %v857
        %v996 = vpop.f32.mrb[0].mxu0
        %v997 = vadd.f32 %v785, %v996
        %v998 = vpop.f32.mrb[0].mxu0
        %v999 = vpop.f32.mrb[0].mxu0
        %v1000 = vadd.f32 %v788, %v999
        %v1001 = vpop.f32.mrb[0].mxu0
        %1002 = vmatprep.mubr.bf16.mxu0 0
        %1003 = vmatmul.mubr.bf16.gmra.mrb[0].mxu0 %v860
        %v1004 = vpop.f32.mrb[0].mxu0
        %v1005 = vadd.f32 %v793, %v1004
        %v1006 = vpop.f32.mrb[0].mxu0
        %v1007 = vpop.f32.mrb[0].mxu0
        %v1008 = vadd.f32 %v796, %v1007
        %v1009 = vpop.f32.mrb[0].mxu0
        %1010 = vmatprep.mubr.bf16.mxu0 0
        %1011 = vmatmul.mubr.bf16.gmra.mrb[0].mxu0 %v863
        %v1012 = vpop.f32.mrb[0].mxu0
        %v1013 = vadd.f32 %v801, %v1012
        %v1014 = vpop.f32.mrb[0].mxu0
        %v1015 = vpop.f32.mrb[0].mxu0
        %v1016 = vadd.f32 %v804, %v1015
        %v1017 = vpop.f32.mrb[0].mxu0
        %1018 = vmatprep.mubr.bf16.mxu0 0
        %1019 = vmatmul.mubr.bf16.gmra.mrb[0].mxu0 %v866
        %v1020 = vpop.f32.mrb[0].mxu0
        %v1021 = vadd.f32 %v809, %v1020
        %v1022 = vpop.f32.mrb[0].mxu0
        %v1023 = vpop.f32.mrb[0].mxu0
        %v1024 = vadd.f32 %v812, %v1023
        %v1025 = vpop.f32.mrb[0].mxu0
        %1026 = vmatprep.mubr.bf16.mxu0 0
        %1027 = vmatmul.mubr.bf16.gmra.mrb[0].mxu0 %v869
        %v1028 = vpop.f32.mrb[0].mxu0
        %v1029 = vadd.f32 %v817, %v1028
        %v1030 = vpop.f32.mrb[0].mxu0
        %v1031 = vpop.f32.mrb[0].mxu0
        %v1032 = vadd.f32 %v820, %v1031
        %v1033 = vpop.f32.mrb[0].mxu0
        %1034 = vdwg.mxu0
        %v1035 = vpack.c.bf16 %v544, %v543
        %v1036 = vpack.c.bf16 %v546, %v545
        %v1037 = vpack.c.bf16 %v548, %v547
        %v1038 = vpack.c.bf16 %v550, %v549
        %v1039 = vpack.c.bf16 %v552, %v551
        %v1040 = vpack.c.bf16 %v554, %v553
        %v1041 = vpack.c.bf16 %v556, %v555
        %v1042 = vpack.c.bf16 %v558, %v557
        %v1043 = vpack.c.bf16 %v560, %v559
        %v1044 = vpack.c.bf16 %v562, %v561
        %v1045 = vpack.c.bf16 %v564, %v563
        %v1046 = vpack.c.bf16 %v566, %v565
        %v1047 = vpack.c.bf16 %v568, %v567
        %v1048 = vpack.c.bf16 %v570, %v569
        %v1049 = vpack.c.bf16 %v572, %v571
        %v1050 = vpack.c.bf16 %v574, %v573
        %v1052 = vsel %vm332, %v1035, 0
        %v1055 = vsel %vm332, %v1036, 0
        %v1058 = vsel %vm332, %v1037, 0
        %v1061 = vsel %vm332, %v1038, 0
        %v1064 = vsel %vm332, %v1039, 0
        %v1067 = vsel %vm332, %v1040, 0
        %v1070 = vsel %vm332, %v1041, 0
        %v1073 = vsel %vm332, %v1042, 0
        %v1076 = vsel %vm332, %v1043, 0
        %v1079 = vsel %vm332, %v1044, 0
        %v1082 = vsel %vm332, %v1045, 0
        %v1085 = vsel %vm332, %v1046, 0
        %v1088 = vsel %vm332, %v1047, 0
        %v1091 = vsel %vm332, %v1048, 0
        %v1094 = vsel %vm332, %v1049, 0
        %v1097 = vsel %vm332, %v1050, 0
        %v1100 = vsel %vm658, %v577, 0
        %1102 = vmatprep.subr.bf16.mxu0 0
        %1103 = vmatpush1.bf16.msra.mxu0 %v1100
        %1104 = vmatprep.subr.bf16.mxu0 0
        %1105 = vmatpush1.bf16.msra.mxu0 0
        %1106 = vmatprep.subr.bf16.mxu0 0
        %1107 = vmatpush1.bf16.msra.mxu0 0
        %1108 = vmatprep.subr.bf16.mxu0 0
        %1109 = vmatpush1.bf16.msra.mxu0 0
        %1110 = vmatprep.subr.bf16.mxu0 0
        %1111 = vmatpush1.bf16.msra.mxu0 0
        %1112 = vmatprep.subr.bf16.mxu0 0
        %1113 = vmatpush1.bf16.msra.mxu0 0
        %1114 = vmatprep.subr.bf16.mxu0 0
        %1115 = vmatpush1.bf16.msra.mxu0 0
        %1116 = vmatprep.subr.bf16.mxu0 0
        %1117 = vmatpush1.bf16.msra.mxu0 0
        %1118 = vmatprep.subr.bf16.mxu0 0
        %1119 = vmatpush1.bf16.msra.mxu0 0
        %1120 = vmatprep.subr.bf16.mxu0 0
        %1121 = vmatpush1.bf16.msra.mxu0 0
        %1122 = vmatprep.subr.bf16.mxu0 0
        %1123 = vmatpush1.bf16.msra.mxu0 0
        %1124 = vmatprep.subr.bf16.mxu0 0
        %1125 = vmatpush1.bf16.msra.mxu0 0
        %1126 = vmatprep.subr.bf16.mxu0 0
        %1127 = vmatpush1.bf16.msra.mxu0 0
        %1128 = vmatprep.subr.bf16.mxu0 0
        %1129 = vmatpush1.bf16.msra.mxu0 0
        %1130 = vmatprep.subr.bf16.mxu0 0
        %1131 = vmatpush1.bf16.msra.mxu0 0
        %1132 = vmatprep.subr.bf16.mxu0 0
        %1133 = vmatpush1.bf16.msra.mxu0 0
        %1134 = vmatprep.mubr.bf16.mxu0 0
        %1135 = vmatmul.mubr.bf16.gmra.mrb[0].mxu0 %v1052
        %v1136 = vpop.f32.mrb[0].mxu0
        %v1137 = vadd.f32 0.0, %v1136
        %v1138 = vpop.f32.mrb[0].mxu0
        %v1139 = vpop.f32.mrb[0].mxu0
        %v1140 = vadd.f32 0.0, %v1139
        %v1141 = vpop.f32.mrb[0].mxu0
        %1142 = vmatprep.mubr.bf16.mxu0 0
        %1143 = vmatmul.mubr.bf16.gmra.mrb[0].mxu0 %v1055
        %v1144 = vpop.f32.mrb[0].mxu0
        %v1145 = vadd.f32 0.0, %v1144
        %v1146 = vpop.f32.mrb[0].mxu0
        %v1147 = vpop.f32.mrb[0].mxu0
        %v1148 = vadd.f32 0.0, %v1147
        %v1149 = vpop.f32.mrb[0].mxu0
        %1150 = vmatprep.mubr.bf16.mxu0 0
        %1151 = vmatmul.mubr.bf16.gmra.mrb[0].mxu0 %v1058
        %v1152 = vpop.f32.mrb[0].mxu0
        %v1153 = vadd.f32 0.0, %v1152
        %v1154 = vpop.f32.mrb[0].mxu0
        %v1155 = vpop.f32.mrb[0].mxu0
        %v1156 = vadd.f32 0.0, %v1155
        %v1157 = vpop.f32.mrb[0].mxu0
        %1158 = vmatprep.mubr.bf16.mxu0 0
        %1159 = vmatmul.mubr.bf16.gmra.mrb[0].mxu0 %v1061
        %v1160 = vpop.f32.mrb[0].mxu0
        %v1161 = vadd.f32 0.0, %v1160
        %v1162 = vpop.f32.mrb[0].mxu0
        %v1163 = vpop.f32.mrb[0].mxu0
        %v1164 = vadd.f32 0.0, %v1163
        %v1165 = vpop.f32.mrb[0].mxu0
        %1166 = vmatprep.mubr.bf16.mxu0 0
        %1167 = vmatmul.mubr.bf16.gmra.mrb[0].mxu0 %v1064
        %v1168 = vpop.f32.mrb[0].mxu0
        %v1169 = vadd.f32 0.0, %v1168
        %v1170 = vpop.f32.mrb[0].mxu0
        %v1171 = vpop.f32.mrb[0].mxu0
        %v1172 = vadd.f32 0.0, %v1171
        %v1173 = vpop.f32.mrb[0].mxu0
        %1174 = vmatprep.mubr.bf16.mxu0 0
        %1175 = vmatmul.mubr.bf16.gmra.mrb[0].mxu0 %v1067
        %v1176 = vpop.f32.mrb[0].mxu0
        %v1177 = vadd.f32 0.0, %v1176
        %v1178 = vpop.f32.mrb[0].mxu0
        %v1179 = vpop.f32.mrb[0].mxu0
        %v1180 = vadd.f32 0.0, %v1179
        %v1181 = vpop.f32.mrb[0].mxu0
        %1182 = vmatprep.mubr.bf16.mxu0 0
        %1183 = vmatmul.mubr.bf16.gmra.mrb[0].mxu0 %v1070
        %v1184 = vpop.f32.mrb[0].mxu0
        %v1185 = vadd.f32 0.0, %v1184
        %v1186 = vpop.f32.mrb[0].mxu0
        %v1187 = vpop.f32.mrb[0].mxu0
        %v1188 = vadd.f32 0.0, %v1187
        %v1189 = vpop.f32.mrb[0].mxu0
        %1190 = vmatprep.mubr.bf16.mxu0 0
        %1191 = vmatmul.mubr.bf16.gmra.mrb[0].mxu0 %v1073
        %v1192 = vpop.f32.mrb[0].mxu0
        %v1193 = vadd.f32 0.0, %v1192
        %v1194 = vpop.f32.mrb[0].mxu0
        %v1195 = vpop.f32.mrb[0].mxu0
        %v1196 = vadd.f32 0.0, %v1195
        %v1197 = vpop.f32.mrb[0].mxu0
        %1198 = vmatprep.mubr.bf16.mxu0 0
        %1199 = vmatmul.mubr.bf16.gmra.mrb[0].mxu0 %v1076
        %v1200 = vpop.f32.mrb[0].mxu0
        %v1201 = vadd.f32 0.0, %v1200
        %v1202 = vpop.f32.mrb[0].mxu0
        %v1203 = vpop.f32.mrb[0].mxu0
        %v1204 = vadd.f32 0.0, %v1203
        %v1205 = vpop.f32.mrb[0].mxu0
        %1206 = vmatprep.mubr.bf16.mxu0 0
        %1207 = vmatmul.mubr.bf16.gmra.mrb[0].mxu0 %v1079
        %v1208 = vpop.f32.mrb[0].mxu0
        %v1209 = vadd.f32 0.0, %v1208
        %v1210 = vpop.f32.mrb[0].mxu0
        %v1211 = vpop.f32.mrb[0].mxu0
        %v1212 = vadd.f32 0.0, %v1211
        %v1213 = vpop.f32.mrb[0].mxu0
        %1214 = vmatprep.mubr.bf16.mxu0 0
        %1215 = vmatmul.mubr.bf16.gmra.mrb[0].mxu0 %v1082
        %v1216 = vpop.f32.mrb[0].mxu0
        %v1217 = vadd.f32 0.0, %v1216
        %v1218 = vpop.f32.mrb[0].mxu0
        %v1219 = vpop.f32.mrb[0].mxu0
        %v1220 = vadd.f32 0.0, %v1219
        %v1221 = vpop.f32.mrb[0].mxu0
        %1222 = vmatprep.mubr.bf16.mxu0 0
        %1223 = vmatmul.mubr.bf16.gmra.mrb[0].mxu0 %v1085
        %v1224 = vpop.f32.mrb[0].mxu0
        %v1225 = vadd.f32 0.0, %v1224
        %v1226 = vpop.f32.mrb[0].mxu0
        %v1227 = vpop.f32.mrb[0].mxu0
        %v1228 = vadd.f32 0.0, %v1227
        %v1229 = vpop.f32.mrb[0].mxu0
        %1230 = vmatprep.mubr.bf16.mxu0 0
        %1231 = vmatmul.mubr.bf16.gmra.mrb[0].mxu0 %v1088
        %v1232 = vpop.f32.mrb[0].mxu0
        %v1233 = vadd.f32 0.0, %v1232
        %v1234 = vpop.f32.mrb[0].mxu0
        %v1235 = vpop.f32.mrb[0].mxu0
        %v1236 = vadd.f32 0.0, %v1235
        %v1237 = vpop.f32.mrb[0].mxu0
        %1238 = vmatprep.mubr.bf16.mxu0 0
        %1239 = vmatmul.mubr.bf16.gmra.mrb[0].mxu0 %v1091
        %v1240 = vpop.f32.mrb[0].mxu0
        %v1241 = vadd.f32 0.0, %v1240
        %v1242 = vpop.f32.mrb[0].mxu0
        %v1243 = vpop.f32.mrb[0].mxu0
        %v1244 = vadd.f32 0.0, %v1243
        %v1245 = vpop.f32.mrb[0].mxu0
        %1246 = vmatprep.mubr.bf16.mxu0 0
        %1247 = vmatmul.mubr.bf16.gmra.mrb[0].mxu0 %v1094
        %v1248 = vpop.f32.mrb[0].mxu0
        %v1249 = vadd.f32 0.0, %v1248
        %v1250 = vpop.f32.mrb[0].mxu0
        %v1251 = vpop.f32.mrb[0].mxu0
        %v1252 = vadd.f32 0.0, %v1251
        %v1253 = vpop.f32.mrb[0].mxu0
        %1254 = vmatprep.mubr.bf16.mxu0 0
        %1255 = vmatmul.mubr.bf16.gmra.mrb[0].mxu0 %v1097
        %v1256 = vpop.f32.mrb[0].mxu0
        %v1257 = vadd.f32 0.0, %v1256
        %v1258 = vpop.f32.mrb[0].mxu0
        %v1259 = vpop.f32.mrb[0].mxu0
        %v1260 = vadd.f32 0.0, %v1259
        %v1261 = vpop.f32.mrb[0].mxu0
        %1262 = vdwg.mxu0
        %v1263 = vadd.f32 %v909, %v1137
        %v1264 = vadd.f32 %v912, %v1140
        %v1265 = vadd.f32 %v917, %v1145
        %v1266 = vadd.f32 %v920, %v1148
        %v1267 = vadd.f32 %v925, %v1153
        %v1268 = vadd.f32 %v928, %v1156
        %v1269 = vadd.f32 %v933, %v1161
        %v1270 = vadd.f32 %v936, %v1164
        %v1271 = vadd.f32 %v941, %v1169
        %v1272 = vadd.f32 %v944, %v1172
        %v1273 = vadd.f32 %v949, %v1177
        %v1274 = vadd.f32 %v952, %v1180
        %v1275 = vadd.f32 %v957, %v1185
        %v1276 = vadd.f32 %v960, %v1188
        %v1277 = vadd.f32 %v965, %v1193
        %v1278 = vadd.f32 %v968, %v1196
        %v1279 = vadd.f32 %v973, %v1201
        %v1280 = vadd.f32 %v976, %v1204
        %v1281 = vadd.f32 %v981, %v1209
        %v1282 = vadd.f32 %v984, %v1212
        %v1283 = vadd.f32 %v989, %v1217
        %v1284 = vadd.f32 %v992, %v1220
        %v1285 = vadd.f32 %v997, %v1225
        %v1286 = vadd.f32 %v1000, %v1228
        %v1287 = vadd.f32 %v1005, %v1233
        %v1288 = vadd.f32 %v1008, %v1236
        %v1289 = vadd.f32 %v1013, %v1241
        %v1290 = vadd.f32 %v1016, %v1244
        %v1291 = vadd.f32 %v1021, %v1249
        %v1292 = vadd.f32 %v1024, %v1252
        %v1293 = vadd.f32 %v1029, %v1257
        %v1294 = vadd.f32 %v1032, %v1260
        %v1295 = vld [vmem:[%s341] sm:$0xff]
        %v1296 = vld [vmem:[%s341 + $0x8] sm:$0xff]
        %v1297 = vld [vmem:[%s341 + $0x18] sm:$0xff]
        %v1298 = vld [vmem:[%s341 + $0x20] sm:$0xff]
        %v1299 = vld [vmem:[%s341 + $0x30] sm:$0xff]
        %v1300 = vld [vmem:[%s341 + $0x38] sm:$0xff]
        %v1301 = vld [vmem:[%s341 + $0x48] sm:$0xff]
        %v1302 = vld [vmem:[%s341 + $0x50] sm:$0xff]
        %v1303 = vld [vmem:[%s341 + $0x60] sm:$0xff]
        %v1304 = vld [vmem:[%s341 + $0x68] sm:$0xff]
        %v1305 = vld [vmem:[%s341 + $0x78] sm:$0xff]
        %v1306 = vld [vmem:[%s341 + $0x80] sm:$0xff]
        %v1307 = vld [vmem:[%s341 + $0x90] sm:$0xff]
        %v1308 = vld [vmem:[%s341 + $0x98] sm:$0xff]
        %v1309 = vld [vmem:[%s341 + $0xa8] sm:$0xff]
        %v1310 = vld [vmem:[%s341 + $0xb0] sm:$0xff]
        %v1311 = vld [vmem:[%s341 + $0xc0] sm:$0xff]
        %v1312 = vld [vmem:[%s341 + $0xc8] sm:$0xff]
        %v1313 = vld [vmem:[%s341 + $0xd8] sm:$0xff]
        %v1314 = vld [vmem:[%s341 + $0xe0] sm:$0xff]
        %v1315 = vld [vmem:[%s341 + $0xf0] sm:$0xff]
        %v1316 = vld [vmem:[%s341 + $0xf8] sm:$0xff]
        %v1317 = vld [vmem:[%s341 + $0x108] sm:$0xff]
        %v1318 = vld [vmem:[%s341 + $0x110] sm:$0xff]
        %v1319 = vld [vmem:[%s341 + $0x120] sm:$0xff]
        %v1320 = vld [vmem:[%s341 + $0x128] sm:$0xff]
        %v1321 = vld [vmem:[%s341 + $0x138] sm:$0xff]
        %v1322 = vld [vmem:[%s341 + $0x140] sm:$0xff]
        %v1323 = vld [vmem:[%s341 + $0x150] sm:$0xff]
        %v1324 = vld [vmem:[%s341 + $0x158] sm:$0xff]
        %v1325 = vld [vmem:[%s341 + $0x168] sm:$0xff]
        %v1326 = vld [vmem:[%s341 + $0x170] sm:$0xff]
        %v1327 = vld [vmem:[%s341 + $0x1] sm:$0xff]
        %v1328 = vld [vmem:[%s341 + $0x9] sm:$0xff]
        %v1329 = vld [vmem:[%s341 + $0x19] sm:$0xff]
        %v1330 = vld [vmem:[%s341 + $0x21] sm:$0xff]
        %v1331 = vld [vmem:[%s341 + $0x31] sm:$0xff]
        %v1332 = vld [vmem:[%s341 + $0x39] sm:$0xff]
        %v1333 = vld [vmem:[%s341 + $0x49] sm:$0xff]
        %v1334 = vld [vmem:[%s341 + $0x51] sm:$0xff]
        %v1335 = vld [vmem:[%s341 + $0x61] sm:$0xff]
        %v1336 = vld [vmem:[%s341 + $0x69] sm:$0xff]
        %v1337 = vld [vmem:[%s341 + $0x79] sm:$0xff]
        %v1338 = vld [vmem:[%s341 + $0x81] sm:$0xff]
        %v1339 = vld [vmem:[%s341 + $0x91] sm:$0xff]
        %v1340 = vld [vmem:[%s341 + $0x99] sm:$0xff]
        %v1341 = vld [vmem:[%s341 + $0xa9] sm:$0xff]
        %v1342 = vld [vmem:[%s341 + $0xb1] sm:$0xff]
        %v1343 = vld [vmem:[%s341 + $0xc1] sm:$0xff]
        %v1344 = vld [vmem:[%s341 + $0xc9] sm:$0xff]
        %v1345 = vld [vmem:[%s341 + $0xd9] sm:$0xff]
        %v1346 = vld [vmem:[%s341 + $0xe1] sm:$0xff]
        %v1347 = vld [vmem:[%s341 + $0xf1] sm:$0xff]
        %v1348 = vld [vmem:[%s341 + $0xf9] sm:$0xff]
        %v1349 = vld [vmem:[%s341 + $0x109] sm:$0xff]
        %v1350 = vld [vmem:[%s341 + $0x111] sm:$0xff]
        %v1351 = vld [vmem:[%s341 + $0x121] sm:$0xff]
        %v1352 = vld [vmem:[%s341 + $0x129] sm:$0xff]
        %v1353 = vld [vmem:[%s341 + $0x139] sm:$0xff]
        %v1354 = vld [vmem:[%s341 + $0x141] sm:$0xff]
        %v1355 = vld [vmem:[%s341 + $0x151] sm:$0xff]
        %v1356 = vld [vmem:[%s341 + $0x159] sm:$0xff]
        %v1357 = vld [vmem:[%s341 + $0x169] sm:$0xff]
        %v1358 = vld [vmem:[%s341 + $0x171] sm:$0xff]
        %v1359 = vld [vmem:[%s341 + $0x2] sm:$0xff]
        %v1360 = vld [vmem:[%s341 + $0xa] sm:$0xff]
        %v1361 = vld [vmem:[%s341 + $0x1a] sm:$0xff]
        %v1362 = vld [vmem:[%s341 + $0x22] sm:$0xff]
        %v1363 = vld [vmem:[%s341 + $0x32] sm:$0xff]
        %v1364 = vld [vmem:[%s341 + $0x3a] sm:$0xff]
        %v1365 = vld [vmem:[%s341 + $0x4a] sm:$0xff]
        %v1366 = vld [vmem:[%s341 + $0x52] sm:$0xff]
        %v1367 = vld [vmem:[%s341 + $0x62] sm:$0xff]
        %v1368 = vld [vmem:[%s341 + $0x6a] sm:$0xff]
        %v1369 = vld [vmem:[%s341 + $0x7a] sm:$0xff]
        %v1370 = vld [vmem:[%s341 + $0x82] sm:$0xff]
        %v1371 = vld [vmem:[%s341 + $0x92] sm:$0xff]
        %v1372 = vld [vmem:[%s341 + $0x9a] sm:$0xff]
        %v1373 = vld [vmem:[%s341 + $0xaa] sm:$0xff]
        %v1374 = vld [vmem:[%s341 + $0xb2] sm:$0xff]
        %v1375 = vld [vmem:[%s341 + $0xc2] sm:$0xff]
        %v1376 = vld [vmem:[%s341 + $0xca] sm:$0xff]
        %v1377 = vld [vmem:[%s341 + $0xda] sm:$0xff]
        %v1378 = vld [vmem:[%s341 + $0xe2] sm:$0xff]
        %v1379 = vld [vmem:[%s341 + $0xf2] sm:$0xff]
        %v1380 = vld [vmem:[%s341 + $0xfa] sm:$0xff]
        %v1381 = vld [vmem:[%s341 + $0x10a] sm:$0xff]
        %v1382 = vld [vmem:[%s341 + $0x112] sm:$0xff]
        %v1383 = vld [vmem:[%s341 + $0x122] sm:$0xff]
        %v1384 = vld [vmem:[%s341 + $0x12a] sm:$0xff]
        %v1385 = vld [vmem:[%s341 + $0x13a] sm:$0xff]
        %v1386 = vld [vmem:[%s341 + $0x142] sm:$0xff]
        %v1387 = vld [vmem:[%s341 + $0x152] sm:$0xff]
        %v1388 = vld [vmem:[%s341 + $0x15a] sm:$0xff]
        %v1389 = vld [vmem:[%s341 + $0x16a] sm:$0xff]
        %v1390 = vld [vmem:[%s341 + $0x172] sm:$0xff]
        %s1391 = scalar_lea.vmem %s2, 12
        %v1392 = vld [vmem:[%s1391] sm:$0xf]
        %v1393 = vld [vmem:[%s1391 + $0x4] sm:$0xf]
        %v1394 = vld [vmem:[%s1391 + $0x8] sm:$0xf]
        %v1395 = vpack.c.bf16 %v1296, %v1295
        %v1396 = vpack.c.bf16 %v1298, %v1297
        %v1397 = vpack.c.bf16 %v1300, %v1299
        %v1398 = vpack.c.bf16 %v1302, %v1301
        %v1399 = vpack.c.bf16 %v1304, %v1303
        %v1400 = vpack.c.bf16 %v1306, %v1305
        %v1401 = vpack.c.bf16 %v1308, %v1307
        %v1402 = vpack.c.bf16 %v1310, %v1309
        %v1403 = vpack.c.bf16 %v1312, %v1311
        %v1404 = vpack.c.bf16 %v1314, %v1313
        %v1405 = vpack.c.bf16 %v1316, %v1315
        %v1406 = vpack.c.bf16 %v1318, %v1317
        %v1407 = vpack.c.bf16 %v1320, %v1319
        %v1408 = vpack.c.bf16 %v1322, %v1321
        %v1409 = vpack.c.bf16 %v1324, %v1323
        %v1410 = vpack.c.bf16 %v1326, %v1325
        %v1411 = vpack.c.bf16 %v1328, %v1327
        %v1412 = vpack.c.bf16 %v1330, %v1329
        %v1413 = vpack.c.bf16 %v1332, %v1331
        %v1414 = vpack.c.bf16 %v1334, %v1333
        %v1415 = vpack.c.bf16 %v1336, %v1335
        %v1416 = vpack.c.bf16 %v1338, %v1337
        %v1417 = vpack.c.bf16 %v1340, %v1339
        %v1418 = vpack.c.bf16 %v1342, %v1341
        %v1419 = vpack.c.bf16 %v1344, %v1343
        %v1420 = vpack.c.bf16 %v1346, %v1345
        %v1421 = vpack.c.bf16 %v1348, %v1347
        %v1422 = vpack.c.bf16 %v1350, %v1349
        %v1423 = vpack.c.bf16 %v1352, %v1351
        %v1424 = vpack.c.bf16 %v1354, %v1353
        %v1425 = vpack.c.bf16 %v1356, %v1355
        %v1426 = vpack.c.bf16 %v1358, %v1357
        %v1428 = vsel %vm332, %v1411, 0
        %v1431 = vsel %vm332, %v1412, 0
        %v1434 = vsel %vm332, %v1413, 0
        %v1437 = vsel %vm332, %v1414, 0
        %v1440 = vsel %vm332, %v1415, 0
        %v1443 = vsel %vm332, %v1416, 0
        %v1446 = vsel %vm332, %v1417, 0
        %v1449 = vsel %vm332, %v1418, 0
        %v1452 = vsel %vm332, %v1419, 0
        %v1455 = vsel %vm332, %v1420, 0
        %v1458 = vsel %vm332, %v1421, 0
        %v1461 = vsel %vm332, %v1422, 0
        %v1464 = vsel %vm332, %v1423, 0
        %v1467 = vsel %vm332, %v1424, 0
        %v1470 = vsel %vm332, %v1425, 0
        %v1473 = vsel %vm332, %v1426, 0
        %v1476 = vsel %vm658, %v1393, 0
        %1478 = vmatprep.subr.bf16.mxu0 0
        %1479 = vmatpush1.bf16.msra.mxu0 %v1476
        %1480 = vmatprep.subr.bf16.mxu0 0
        %1481 = vmatpush1.bf16.msra.mxu0 0
        %1482 = vmatprep.subr.bf16.mxu0 0
        %1483 = vmatpush1.bf16.msra.mxu0 0
        %1484 = vmatprep.subr.bf16.mxu0 0
        %1485 = vmatpush1.bf16.msra.mxu0 0
        %1486 = vmatprep.subr.bf16.mxu0 0
        %1487 = vmatpush1.bf16.msra.mxu0 0
        %1488 = vmatprep.subr.bf16.mxu0 0
        %1489 = vmatpush1.bf16.msra.mxu0 0
        %1490 = vmatprep.subr.bf16.mxu0 0
        %1491 = vmatpush1.bf16.msra.mxu0 0
        %1492 = vmatprep.subr.bf16.mxu0 0
        %1493 = vmatpush1.bf16.msra.mxu0 0
        %1494 = vmatprep.subr.bf16.mxu0 0
        %1495 = vmatpush1.bf16.msra.mxu0 0
        %1496 = vmatprep.subr.bf16.mxu0 0
        %1497 = vmatpush1.bf16.msra.mxu0 0
        %1498 = vmatprep.subr.bf16.mxu0 0
        %1499 = vmatpush1.bf16.msra.mxu0 0
        %1500 = vmatprep.subr.bf16.mxu0 0
        %1501 = vmatpush1.bf16.msra.mxu0 0
        %1502 = vmatprep.subr.bf16.mxu0 0
        %1503 = vmatpush1.bf16.msra.mxu0 0
        %1504 = vmatprep.subr.bf16.mxu0 0
        %1505 = vmatpush1.bf16.msra.mxu0 0
        %1506 = vmatprep.subr.bf16.mxu0 0
        %1507 = vmatpush1.bf16.msra.mxu0 0
        %1508 = vmatprep.subr.bf16.mxu0 0
        %1509 = vmatpush1.bf16.msra.mxu0 0
        %1510 = vmatprep.mubr.bf16.mxu0 0
        %1511 = vmatmul.mubr.bf16.gmra.mrb[0].mxu0 %v1428
        %v1512 = vpop.f32.mrb[0].mxu0
        %v1513 = vadd.f32 0.0, %v1512
        %v1514 = vpop.f32.mrb[0].mxu0
        %v1515 = vpop.f32.mrb[0].mxu0
        %v1516 = vadd.f32 0.0, %v1515
        %v1517 = vpop.f32.mrb[0].mxu0
        %1518 = vmatprep.mubr.bf16.mxu0 0
        %1519 = vmatmul.mubr.bf16.gmra.mrb[0].mxu0 %v1431
        %v1520 = vpop.f32.mrb[0].mxu0
        %v1521 = vadd.f32 0.0, %v1520
        %v1522 = vpop.f32.mrb[0].mxu0
        %v1523 = vpop.f32.mrb[0].mxu0
        %v1524 = vadd.f32 0.0, %v1523
        %v1525 = vpop.f32.mrb[0].mxu0
        %1526 = vmatprep.mubr.bf16.mxu0 0
        %1527 = vmatmul.mubr.bf16.gmra.mrb[0].mxu0 %v1434
        %v1528 = vpop.f32.mrb[0].mxu0
        %v1529 = vadd.f32 0.0, %v1528
        %v1530 = vpop.f32.mrb[0].mxu0
        %v1531 = vpop.f32.mrb[0].mxu0
        %v1532 = vadd.f32 0.0, %v1531
        %v1533 = vpop.f32.mrb[0].mxu0
        %1534 = vmatprep.mubr.bf16.mxu0 0
        %1535 = vmatmul.mubr.bf16.gmra.mrb[0].mxu0 %v1437
        %v1536 = vpop.f32.mrb[0].mxu0
        %v1537 = vadd.f32 0.0, %v1536
        %v1538 = vpop.f32.mrb[0].mxu0
        %v1539 = vpop.f32.mrb[0].mxu0
        %v1540 = vadd.f32 0.0, %v1539
        %v1541 = vpop.f32.mrb[0].mxu0
        %1542 = vmatprep.mubr.bf16.mxu0 0
        %1543 = vmatmul.mubr.bf16.gmra.mrb[0].mxu0 %v1440
        %v1544 = vpop.f32.mrb[0].mxu0
        %v1545 = vadd.f32 0.0, %v1544
        %v1546 = vpop.f32.mrb[0].mxu0
        %v1547 = vpop.f32.mrb[0].mxu0
        %v1548 = vadd.f32 0.0, %v1547
        %v1549 = vpop.f32.mrb[0].mxu0
        %1550 = vmatprep.mubr.bf16.mxu0 0
        %1551 = vmatmul.mubr.bf16.gmra.mrb[0].mxu0 %v1443
        %v1552 = vpop.f32.mrb[0].mxu0
        %v1553 = vadd.f32 0.0, %v1552
        %v1554 = vpop.f32.mrb[0].mxu0
        %v1555 = vpop.f32.mrb[0].mxu0
        %v1556 = vadd.f32 0.0, %v1555
        %v1557 = vpop.f32.mrb[0].mxu0
        %1558 = vmatprep.mubr.bf16.mxu0 0
        %1559 = vmatmul.mubr.bf16.gmra.mrb[0].mxu0 %v1446
        %v1560 = vpop.f32.mrb[0].mxu0
        %v1561 = vadd.f32 0.0, %v1560
        %v1562 = vpop.f32.mrb[0].mxu0
        %v1563 = vpop.f32.mrb[0].mxu0
        %v1564 = vadd.f32 0.0, %v1563
        %v1565 = vpop.f32.mrb[0].mxu0
        %1566 = vmatprep.mubr.bf16.mxu0 0
        %1567 = vmatmul.mubr.bf16.gmra.mrb[0].mxu0 %v1449
        %v1568 = vpop.f32.mrb[0].mxu0
        %v1569 = vadd.f32 0.0, %v1568
        %v1570 = vpop.f32.mrb[0].mxu0
        %v1571 = vpop.f32.mrb[0].mxu0
        %v1572 = vadd.f32 0.0, %v1571
        %v1573 = vpop.f32.mrb[0].mxu0
        %1574 = vmatprep.mubr.bf16.mxu0 0
        %1575 = vmatmul.mubr.bf16.gmra.mrb[0].mxu0 %v1452
        %v1576 = vpop.f32.mrb[0].mxu0
        %v1577 = vadd.f32 0.0, %v1576
        %v1578 = vpop.f32.mrb[0].mxu0
        %v1579 = vpop.f32.mrb[0].mxu0
        %v1580 = vadd.f32 0.0, %v1579
        %v1581 = vpop.f32.mrb[0].mxu0
        %1582 = vmatprep.mubr.bf16.mxu0 0
        %1583 = vmatmul.mubr.bf16.gmra.mrb[0].mxu0 %v1455
        %v1584 = vpop.f32.mrb[0].mxu0
        %v1585 = vadd.f32 0.0, %v1584
        %v1586 = vpop.f32.mrb[0].mxu0
        %v1587 = vpop.f32.mrb[0].mxu0
        %v1588 = vadd.f32 0.0, %v1587
        %v1589 = vpop.f32.mrb[0].mxu0
        %1590 = vmatprep.mubr.bf16.mxu0 0
        %1591 = vmatmul.mubr.bf16.gmra.mrb[0].mxu0 %v1458
        %v1592 = vpop.f32.mrb[0].mxu0
        %v1593 = vadd.f32 0.0, %v1592
        %v1594 = vpop.f32.mrb[0].mxu0
        %v1595 = vpop.f32.mrb[0].mxu0
        %v1596 = vadd.f32 0.0, %v1595
        %v1597 = vpop.f32.mrb[0].mxu0
        %1598 = vmatprep.mubr.bf16.mxu0 0
        %1599 = vmatmul.mubr.bf16.gmra.mrb[0].mxu0 %v1461
        %v1600 = vpop.f32.mrb[0].mxu0
        %v1601 = vadd.f32 0.0, %v1600
        %v1602 = vpop.f32.mrb[0].mxu0
        %v1603 = vpop.f32.mrb[0].mxu0
        %v1604 = vadd.f32 0.0, %v1603
        %v1605 = vpop.f32.mrb[0].mxu0
        %1606 = vmatprep.mubr.bf16.mxu0 0
        %1607 = vmatmul.mubr.bf16.gmra.mrb[0].mxu0 %v1464
        %v1608 = vpop.f32.mrb[0].mxu0
        %v1609 = vadd.f32 0.0, %v1608
        %v1610 = vpop.f32.mrb[0].mxu0
        %v1611 = vpop.f32.mrb[0].mxu0
        %v1612 = vadd.f32 0.0, %v1611
        %v1613 = vpop.f32.mrb[0].mxu0
        %1614 = vmatprep.mubr.bf16.mxu0 0
        %1615 = vmatmul.mubr.bf16.gmra.mrb[0].mxu0 %v1467
        %v1616 = vpop.f32.mrb[0].mxu0
        %v1617 = vadd.f32 0.0, %v1616
        %v1618 = vpop.f32.mrb[0].mxu0
        %v1619 = vpop.f32.mrb[0].mxu0
        %v1620 = vadd.f32 0.0, %v1619
        %v1621 = vpop.f32.mrb[0].mxu0
        %1622 = vmatprep.mubr.bf16.mxu0 0
        %1623 = vmatmul.mubr.bf16.gmra.mrb[0].mxu0 %v1470
        %v1624 = vpop.f32.mrb[0].mxu0
        %v1625 = vadd.f32 0.0, %v1624
        %v1626 = vpop.f32.mrb[0].mxu0
        %v1627 = vpop.f32.mrb[0].mxu0
        %v1628 = vadd.f32 0.0, %v1627
        %v1629 = vpop.f32.mrb[0].mxu0
        %1630 = vmatprep.mubr.bf16.mxu0 0
        %1631 = vmatmul.mubr.bf16.gmra.mrb[0].mxu0 %v1473
        %v1632 = vpop.f32.mrb[0].mxu0
        %v1633 = vadd.f32 0.0, %v1632
        %v1634 = vpop.f32.mrb[0].mxu0
        %v1635 = vpop.f32.mrb[0].mxu0
        %v1636 = vadd.f32 0.0, %v1635
        %v1637 = vpop.f32.mrb[0].mxu0
        %1638 = vdwg.mxu0
        %v1640 = vsel %vm332, %v1395, 0
        %v1643 = vsel %vm332, %v1396, 0
        %v1646 = vsel %vm332, %v1397, 0
        %v1649 = vsel %vm332, %v1398, 0
        %v1652 = vsel %vm332, %v1399, 0
        %v1655 = vsel %vm332, %v1400, 0
        %v1658 = vsel %vm332, %v1401, 0
        %v1661 = vsel %vm332, %v1402, 0
        %v1664 = vsel %vm332, %v1403, 0
        %v1667 = vsel %vm332, %v1404, 0
        %v1670 = vsel %vm332, %v1405, 0
        %v1673 = vsel %vm332, %v1406, 0
        %v1676 = vsel %vm332, %v1407, 0
        %v1679 = vsel %vm332, %v1408, 0
        %v1682 = vsel %vm332, %v1409, 0
        %v1685 = vsel %vm332, %v1410, 0
        %v1688 = vsel %vm658, %v1392, 0
        %1690 = vmatprep.subr.bf16.mxu0 0
        %1691 = vmatpush1.bf16.msra.mxu0 %v1688
        %1692 = vmatprep.subr.bf16.mxu0 0
        %1693 = vmatpush1.bf16.msra.mxu0 0
        %1694 = vmatprep.subr.bf16.mxu0 0
        %1695 = vmatpush1.bf16.msra.mxu0 0
        %1696 = vmatprep.subr.bf16.mxu0 0
        %1697 = vmatpush1.bf16.msra.mxu0 0
        %1698 = vmatprep.subr.bf16.mxu0 0
        %1699 = vmatpush1.bf16.msra.mxu0 0
        %1700 = vmatprep.subr.bf16.mxu0 0
        %1701 = vmatpush1.bf16.msra.mxu0 0
        %1702 = vmatprep.subr.bf16.mxu0 0
        %1703 = vmatpush1.bf16.msra.mxu0 0
        %1704 = vmatprep.subr.bf16.mxu0 0
        %1705 = vmatpush1.bf16.msra.mxu0 0
        %1706 = vmatprep.subr.bf16.mxu0 0
        %1707 = vmatpush1.bf16.msra.mxu0 0
        %1708 = vmatprep.subr.bf16.mxu0 0
        %1709 = vmatpush1.bf16.msra.mxu0 0
        %1710 = vmatprep.subr.bf16.mxu0 0
        %1711 = vmatpush1.bf16.msra.mxu0 0
        %1712 = vmatprep.subr.bf16.mxu0 0
        %1713 = vmatpush1.bf16.msra.mxu0 0
        %1714 = vmatprep.subr.bf16.mxu0 0
        %1715 = vmatpush1.bf16.msra.mxu0 0
        %1716 = vmatprep.subr.bf16.mxu0 0
        %1717 = vmatpush1.bf16.msra.mxu0 0
        %1718 = vmatprep.subr.bf16.mxu0 0
        %1719 = vmatpush1.bf16.msra.mxu0 0
        %1720 = vmatprep.subr.bf16.mxu0 0
        %1721 = vmatpush1.bf16.msra.mxu0 0
        %1722 = vmatprep.mubr.bf16.mxu0 0
        %1723 = vmatmul.mubr.bf16.gmra.mrb[0].mxu0 %v1640
        %v1724 = vpop.f32.mrb[0].mxu0
        %v1725 = vadd.f32 %v1513, %v1724
        %v1726 = vpop.f32.mrb[0].mxu0
        %v1727 = vpop.f32.mrb[0].mxu0
        %v1728 = vadd.f32 %v1516, %v1727
        %v1729 = vpop.f32.mrb[0].mxu0
        %1730 = vmatprep.mubr.bf16.mxu0 0
        %1731 = vmatmul.mubr.bf16.gmra.mrb[0].mxu0 %v1643
        %v1732 = vpop.f32.mrb[0].mxu0
        %v1733 = vadd.f32 %v1521, %v1732
        %v1734 = vpop.f32.mrb[0].mxu0
        %v1735 = vpop.f32.mrb[0].mxu0
        %v1736 = vadd.f32 %v1524, %v1735
        %v1737 = vpop.f32.mrb[0].mxu0
        %1738 = vmatprep.mubr.bf16.mxu0 0
        %1739 = vmatmul.mubr.bf16.gmra.mrb[0].mxu0 %v1646
        %v1740 = vpop.f32.mrb[0].mxu0
        %v1741 = vadd.f32 %v1529, %v1740
        %v1742 = vpop.f32.mrb[0].mxu0
        %v1743 = vpop.f32.mrb[0].mxu0
        %v1744 = vadd.f32 %v1532, %v1743
        %v1745 = vpop.f32.mrb[0].mxu0
        %1746 = vmatprep.mubr.bf16.mxu0 0
        %1747 = vmatmul.mubr.bf16.gmra.mrb[0].mxu0 %v1649
        %v1748 = vpop.f32.mrb[0].mxu0
        %v1749 = vadd.f32 %v1537, %v1748
        %v1750 = vpop.f32.mrb[0].mxu0
        %v1751 = vpop.f32.mrb[0].mxu0
        %v1752 = vadd.f32 %v1540, %v1751
        %v1753 = vpop.f32.mrb[0].mxu0
        %1754 = vmatprep.mubr.bf16.mxu0 0
        %1755 = vmatmul.mubr.bf16.gmra.mrb[0].mxu0 %v1652
        %v1756 = vpop.f32.mrb[0].mxu0
        %v1757 = vadd.f32 %v1545, %v1756
        %v1758 = vpop.f32.mrb[0].mxu0
        %v1759 = vpop.f32.mrb[0].mxu0
        %v1760 = vadd.f32 %v1548, %v1759
        %v1761 = vpop.f32.mrb[0].mxu0
        %1762 = vmatprep.mubr.bf16.mxu0 0
        %1763 = vmatmul.mubr.bf16.gmra.mrb[0].mxu0 %v1655
        %v1764 = vpop.f32.mrb[0].mxu0
        %v1765 = vadd.f32 %v1553, %v1764
        %v1766 = vpop.f32.mrb[0].mxu0
        %v1767 = vpop.f32.mrb[0].mxu0
        %v1768 = vadd.f32 %v1556, %v1767
        %v1769 = vpop.f32.mrb[0].mxu0
        %1770 = vmatprep.mubr.bf16.mxu0 0
        %1771 = vmatmul.mubr.bf16.gmra.mrb[0].mxu0 %v1658
        %v1772 = vpop.f32.mrb[0].mxu0
        %v1773 = vadd.f32 %v1561, %v1772
        %v1774 = vpop.f32.mrb[0].mxu0
        %v1775 = vpop.f32.mrb[0].mxu0
        %v1776 = vadd.f32 %v1564, %v1775
        %v1777 = vpop.f32.mrb[0].mxu0
        %1778 = vmatprep.mubr.bf16.mxu0 0
        %1779 = vmatmul.mubr.bf16.gmra.mrb[0].mxu0 %v1661
        %v1780 = vpop.f32.mrb[0].mxu0
        %v1781 = vadd.f32 %v1569, %v1780
        %v1782 = vpop.f32.mrb[0].mxu0
        %v1783 = vpop.f32.mrb[0].mxu0
        %v1784 = vadd.f32 %v1572, %v1783
        %v1785 = vpop.f32.mrb[0].mxu0
        %1786 = vmatprep.mubr.bf16.mxu0 0
        %1787 = vmatmul.mubr.bf16.gmra.mrb[0].mxu0 %v1664
        %v1788 = vpop.f32.mrb[0].mxu0
        %v1789 = vadd.f32 %v1577, %v1788
        %v1790 = vpop.f32.mrb[0].mxu0
        %v1791 = vpop.f32.mrb[0].mxu0
        %v1792 = vadd.f32 %v1580, %v1791
        %v1793 = vpop.f32.mrb[0].mxu0
        %1794 = vmatprep.mubr.bf16.mxu0 0
        %1795 = vmatmul.mubr.bf16.gmra.mrb[0].mxu0 %v1667
        %v1796 = vpop.f32.mrb[0].mxu0
        %v1797 = vadd.f32 %v1585, %v1796
        %v1798 = vpop.f32.mrb[0].mxu0
        %v1799 = vpop.f32.mrb[0].mxu0
        %v1800 = vadd.f32 %v1588, %v1799
        %v1801 = vpop.f32.mrb[0].mxu0
        %1802 = vmatprep.mubr.bf16.mxu0 0
        %1803 = vmatmul.mubr.bf16.gmra.mrb[0].mxu0 %v1670
        %v1804 = vpop.f32.mrb[0].mxu0
        %v1805 = vadd.f32 %v1593, %v1804
        %v1806 = vpop.f32.mrb[0].mxu0
        %v1807 = vpop.f32.mrb[0].mxu0
        %v1808 = vadd.f32 %v1596, %v1807
        %v1809 = vpop.f32.mrb[0].mxu0
        %1810 = vmatprep.mubr.bf16.mxu0 0
        %1811 = vmatmul.mubr.bf16.gmra.mrb[0].mxu0 %v1673
        %v1812 = vpop.f32.mrb[0].mxu0
        %v1813 = vadd.f32 %v1601, %v1812
        %v1814 = vpop.f32.mrb[0].mxu0
        %v1815 = vpop.f32.mrb[0].mxu0
        %v1816 = vadd.f32 %v1604, %v1815
        %v1817 = vpop.f32.mrb[0].mxu0
        %1818 = vmatprep.mubr.bf16.mxu0 0
        %1819 = vmatmul.mubr.bf16.gmra.mrb[0].mxu0 %v1676
        %v1820 = vpop.f32.mrb[0].mxu0
        %v1821 = vadd.f32 %v1609, %v1820
        %v1822 = vpop.f32.mrb[0].mxu0
        %v1823 = vpop.f32.mrb[0].mxu0
        %v1824 = vadd.f32 %v1612, %v1823
        %v1825 = vpop.f32.mrb[0].mxu0
        %1826 = vmatprep.mubr.bf16.mxu0 0
        %1827 = vmatmul.mubr.bf16.gmra.mrb[0].mxu0 %v1679
        %v1828 = vpop.f32.mrb[0].mxu0
        %v1829 = vadd.f32 %v1617, %v1828
        %v1830 = vpop.f32.mrb[0].mxu0
        %v1831 = vpop.f32.mrb[0].mxu0
        %v1832 = vadd.f32 %v1620, %v1831
        %v1833 = vpop.f32.mrb[0].mxu0
        %1834 = vmatprep.mubr.bf16.mxu0 0
        %1835 = vmatmul.mubr.bf16.gmra.mrb[0].mxu0 %v1682
        %v1836 = vpop.f32.mrb[0].mxu0
        %v1837 = vadd.f32 %v1625, %v1836
        %v1838 = vpop.f32.mrb[0].mxu0
        %v1839 = vpop.f32.mrb[0].mxu0
        %v1840 = vadd.f32 %v1628, %v1839
        %v1841 = vpop.f32.mrb[0].mxu0
        %1842 = vmatprep.mubr.bf16.mxu0 0
        %1843 = vmatmul.mubr.bf16.gmra.mrb[0].mxu0 %v1685
        %v1844 = vpop.f32.mrb[0].mxu0
        %v1845 = vadd.f32 %v1633, %v1844
        %v1846 = vpop.f32.mrb[0].mxu0
        %v1847 = vpop.f32.mrb[0].mxu0
        %v1848 = vadd.f32 %v1636, %v1847
        %v1849 = vpop.f32.mrb[0].mxu0
        %1850 = vdwg.mxu0
        %v1851 = vpack.c.bf16 %v1360, %v1359
        %v1852 = vpack.c.bf16 %v1362, %v1361
        %v1853 = vpack.c.bf16 %v1364, %v1363
        %v1854 = vpack.c.bf16 %v1366, %v1365
        %v1855 = vpack.c.bf16 %v1368, %v1367
        %v1856 = vpack.c.bf16 %v1370, %v1369
        %v1857 = vpack.c.bf16 %v1372, %v1371
        %v1858 = vpack.c.bf16 %v1374, %v1373
        %v1859 = vpack.c.bf16 %v1376, %v1375
        %v1860 = vpack.c.bf16 %v1378, %v1377
        %v1861 = vpack.c.bf16 %v1380, %v1379
        %v1862 = vpack.c.bf16 %v1382, %v1381
        %v1863 = vpack.c.bf16 %v1384, %v1383
        %v1864 = vpack.c.bf16 %v1386, %v1385
        %v1865 = vpack.c.bf16 %v1388, %v1387
        %v1866 = vpack.c.bf16 %v1390, %v1389
        %v1868 = vsel %vm332, %v1851, 0
        %v1871 = vsel %vm332, %v1852, 0
        %v1874 = vsel %vm332, %v1853, 0
        %v1877 = vsel %vm332, %v1854, 0
        %v1880 = vsel %vm332, %v1855, 0
        %v1883 = vsel %vm332, %v1856, 0
        %v1886 = vsel %vm332, %v1857, 0
        %v1889 = vsel %vm332, %v1858, 0
        %v1892 = vsel %vm332, %v1859, 0
        %v1895 = vsel %vm332, %v1860, 0
        %v1898 = vsel %vm332, %v1861, 0
        %v1901 = vsel %vm332, %v1862, 0
        %v1904 = vsel %vm332, %v1863, 0
        %v1907 = vsel %vm332, %v1864, 0
        %v1910 = vsel %vm332, %v1865, 0
        %v1913 = vsel %vm332, %v1866, 0
        %v1916 = vsel %vm658, %v1394, 0
        %1918 = vmatprep.subr.bf16.mxu0 0
        %1919 = vmatpush1.bf16.msra.mxu0 %v1916
        %1920 = vmatprep.subr.bf16.mxu0 0
        %1921 = vmatpush1.bf16.msra.mxu0 0
        %1922 = vmatprep.subr.bf16.mxu0 0
        %1923 = vmatpush1.bf16.msra.mxu0 0
        %1924 = vmatprep.subr.bf16.mxu0 0
        %1925 = vmatpush1.bf16.msra.mxu0 0
        %1926 = vmatprep.subr.bf16.mxu0 0
        %1927 = vmatpush1.bf16.msra.mxu0 0
        %1928 = vmatprep.subr.bf16.mxu0 0
        %1929 = vmatpush1.bf16.msra.mxu0 0
        %1930 = vmatprep.subr.bf16.mxu0 0
        %1931 = vmatpush1.bf16.msra.mxu0 0
        %1932 = vmatprep.subr.bf16.mxu0 0
        %1933 = vmatpush1.bf16.msra.mxu0 0
        %1934 = vmatprep.subr.bf16.mxu0 0
        %1935 = vmatpush1.bf16.msra.mxu0 0
        %1936 = vmatprep.subr.bf16.mxu0 0
        %1937 = vmatpush1.bf16.msra.mxu0 0
        %1938 = vmatprep.subr.bf16.mxu0 0
        %1939 = vmatpush1.bf16.msra.mxu0 0
        %1940 = vmatprep.subr.bf16.mxu0 0
        %1941 = vmatpush1.bf16.msra.mxu0 0
        %1942 = vmatprep.subr.bf16.mxu0 0
        %1943 = vmatpush1.bf16.msra.mxu0 0
        %1944 = vmatprep.subr.bf16.mxu0 0
        %1945 = vmatpush1.bf16.msra.mxu0 0
        %1946 = vmatprep.subr.bf16.mxu0 0
        %1947 = vmatpush1.bf16.msra.mxu0 0
        %1948 = vmatprep.subr.bf16.mxu0 0
        %1949 = vmatpush1.bf16.msra.mxu0 0
        %1950 = vmatprep.mubr.bf16.mxu0 0
        %1951 = vmatmul.mubr.bf16.gmra.mrb[0].mxu0 %v1868
        %v1952 = vpop.f32.mrb[0].mxu0
        %v1953 = vadd.f32 0.0, %v1952
        %v1954 = vpop.f32.mrb[0].mxu0
        %v1955 = vpop.f32.mrb[0].mxu0
        %v1956 = vadd.f32 0.0, %v1955
        %v1957 = vpop.f32.mrb[0].mxu0
        %1958 = vmatprep.mubr.bf16.mxu0 0
        %1959 = vmatmul.mubr.bf16.gmra.mrb[0].mxu0 %v1871
        %v1960 = vpop.f32.mrb[0].mxu0
        %v1961 = vadd.f32 0.0, %v1960
        %v1962 = vpop.f32.mrb[0].mxu0
        %v1963 = vpop.f32.mrb[0].mxu0
        %v1964 = vadd.f32 0.0, %v1963
        %v1965 = vpop.f32.mrb[0].mxu0
        %1966 = vmatprep.mubr.bf16.mxu0 0
        %1967 = vmatmul.mubr.bf16.gmra.mrb[0].mxu0 %v1874
        %v1968 = vpop.f32.mrb[0].mxu0
        %v1969 = vadd.f32 0.0, %v1968
        %v1970 = vpop.f32.mrb[0].mxu0
        %v1971 = vpop.f32.mrb[0].mxu0
        %v1972 = vadd.f32 0.0, %v1971
        %v1973 = vpop.f32.mrb[0].mxu0
        %1974 = vmatprep.mubr.bf16.mxu0 0
        %1975 = vmatmul.mubr.bf16.gmra.mrb[0].mxu0 %v1877
        %v1976 = vpop.f32.mrb[0].mxu0
        %v1977 = vadd.f32 0.0, %v1976
        %v1978 = vpop.f32.mrb[0].mxu0
        %v1979 = vpop.f32.mrb[0].mxu0
        %v1980 = vadd.f32 0.0, %v1979
        %v1981 = vpop.f32.mrb[0].mxu0
        %1982 = vmatprep.mubr.bf16.mxu0 0
        %1983 = vmatmul.mubr.bf16.gmra.mrb[0].mxu0 %v1880
        %v1984 = vpop.f32.mrb[0].mxu0
        %v1985 = vadd.f32 0.0, %v1984
        %v1986 = vpop.f32.mrb[0].mxu0
        %v1987 = vpop.f32.mrb[0].mxu0
        %v1988 = vadd.f32 0.0, %v1987
        %v1989 = vpop.f32.mrb[0].mxu0
        %1990 = vmatprep.mubr.bf16.mxu0 0
        %1991 = vmatmul.mubr.bf16.gmra.mrb[0].mxu0 %v1883
        %v1992 = vpop.f32.mrb[0].mxu0
        %v1993 = vadd.f32 0.0, %v1992
        %v1994 = vpop.f32.mrb[0].mxu0
        %v1995 = vpop.f32.mrb[0].mxu0
        %v1996 = vadd.f32 0.0, %v1995
        %v1997 = vpop.f32.mrb[0].mxu0
        %1998 = vmatprep.mubr.bf16.mxu0 0
        %1999 = vmatmul.mubr.bf16.gmra.mrb[0].mxu0 %v1886
        %v2000 = vpop.f32.mrb[0].mxu0
        %v2001 = vadd.f32 0.0, %v2000
        %v2002 = vpop.f32.mrb[0].mxu0
        %v2003 = vpop.f32.mrb[0].mxu0
        %v2004 = vadd.f32 0.0, %v2003
        %v2005 = vpop.f32.mrb[0].mxu0
        %2006 = vmatprep.mubr.bf16.mxu0 0
        %2007 = vmatmul.mubr.bf16.gmra.mrb[0].mxu0 %v1889
        %v2008 = vpop.f32.mrb[0].mxu0
        %v2009 = vadd.f32 0.0, %v2008
        %v2010 = vpop.f32.mrb[0].mxu0
        %v2011 = vpop.f32.mrb[0].mxu0
        %v2012 = vadd.f32 0.0, %v2011
        %v2013 = vpop.f32.mrb[0].mxu0
        %2014 = vmatprep.mubr.bf16.mxu0 0
        %2015 = vmatmul.mubr.bf16.gmra.mrb[0].mxu0 %v1892
        %v2016 = vpop.f32.mrb[0].mxu0
        %v2017 = vadd.f32 0.0, %v2016
        %v2018 = vpop.f32.mrb[0].mxu0
        %v2019 = vpop.f32.mrb[0].mxu0
        %v2020 = vadd.f32 0.0, %v2019
        %v2021 = vpop.f32.mrb[0].mxu0
        %2022 = vmatprep.mubr.bf16.mxu0 0
        %2023 = vmatmul.mubr.bf16.gmra.mrb[0].mxu0 %v1895
        %v2024 = vpop.f32.mrb[0].mxu0
        %v2025 = vadd.f32 0.0, %v2024
        %v2026 = vpop.f32.mrb[0].mxu0
        %v2027 = vpop.f32.mrb[0].mxu0
        %v2028 = vadd.f32 0.0, %v2027
        %v2029 = vpop.f32.mrb[0].mxu0
        %2030 = vmatprep.mubr.bf16.mxu0 0
        %2031 = vmatmul.mubr.bf16.gmra.mrb[0].mxu0 %v1898
        %v2032 = vpop.f32.mrb[0].mxu0
        %v2033 = vadd.f32 0.0, %v2032
        %v2034 = vpop.f32.mrb[0].mxu0
        %v2035 = vpop.f32.mrb[0].mxu0
        %v2036 = vadd.f32 0.0, %v2035
        %v2037 = vpop.f32.mrb[0].mxu0
        %2038 = vmatprep.mubr.bf16.mxu0 0
        %2039 = vmatmul.mubr.bf16.gmra.mrb[0].mxu0 %v1901
        %v2040 = vpop.f32.mrb[0].mxu0
        %v2041 = vadd.f32 0.0, %v2040
        %v2042 = vpop.f32.mrb[0].mxu0
        %v2043 = vpop.f32.mrb[0].mxu0
        %v2044 = vadd.f32 0.0, %v2043
        %v2045 = vpop.f32.mrb[0].mxu0
        %2046 = vmatprep.mubr.bf16.mxu0 0
        %2047 = vmatmul.mubr.bf16.gmra.mrb[0].mxu0 %v1904
        %v2048 = vpop.f32.mrb[0].mxu0
        %v2049 = vadd.f32 0.0, %v2048
        %v2050 = vpop.f32.mrb[0].mxu0
        %v2051 = vpop.f32.mrb[0].mxu0
        %v2052 = vadd.f32 0.0, %v2051
        %v2053 = vpop.f32.mrb[0].mxu0
        %2054 = vmatprep.mubr.bf16.mxu0 0
        %2055 = vmatmul.mubr.bf16.gmra.mrb[0].mxu0 %v1907
        %v2056 = vpop.f32.mrb[0].mxu0
        %v2057 = vadd.f32 0.0, %v2056
        %v2058 = vpop.f32.mrb[0].mxu0
        %v2059 = vpop.f32.mrb[0].mxu0
        %v2060 = vadd.f32 0.0, %v2059
        %v2061 = vpop.f32.mrb[0].mxu0
        %2062 = vmatprep.mubr.bf16.mxu0 0
        %2063 = vmatmul.mubr.bf16.gmra.mrb[0].mxu0 %v1910
        %v2064 = vpop.f32.mrb[0].mxu0
        %v2065 = vadd.f32 0.0, %v2064
        %v2066 = vpop.f32.mrb[0].mxu0
        %v2067 = vpop.f32.mrb[0].mxu0
        %v2068 = vadd.f32 0.0, %v2067
        %v2069 = vpop.f32.mrb[0].mxu0
        %2070 = vmatprep.mubr.bf16.mxu0 0
        %2071 = vmatmul.mubr.bf16.gmra.mrb[0].mxu0 %v1913
        %v2072 = vpop.f32.mrb[0].mxu0
        %v2073 = vadd.f32 0.0, %v2072
        %v2074 = vpop.f32.mrb[0].mxu0
        %v2075 = vpop.f32.mrb[0].mxu0
        %v2076 = vadd.f32 0.0, %v2075
        %v2077 = vpop.f32.mrb[0].mxu0
        %2078 = vdwg.mxu0
        %v2079 = vadd.f32 %v1725, %v1953
        %v2080 = vadd.f32 %v1728, %v1956
        %v2081 = vadd.f32 %v1733, %v1961
        %v2082 = vadd.f32 %v1736, %v1964
        %v2083 = vadd.f32 %v1741, %v1969
        %v2084 = vadd.f32 %v1744, %v1972
        %v2085 = vadd.f32 %v1749, %v1977
        %v2086 = vadd.f32 %v1752, %v1980
        %v2087 = vadd.f32 %v1757, %v1985
        %v2088 = vadd.f32 %v1760, %v1988
        %v2089 = vadd.f32 %v1765, %v1993
        %v2090 = vadd.f32 %v1768, %v1996
        %v2091 = vadd.f32 %v1773, %v2001
        %v2092 = vadd.f32 %v1776, %v2004
        %v2093 = vadd.f32 %v1781, %v2009
        %v2094 = vadd.f32 %v1784, %v2012
        %v2095 = vadd.f32 %v1789, %v2017
        %v2096 = vadd.f32 %v1792, %v2020
        %v2097 = vadd.f32 %v1797, %v2025
        %v2098 = vadd.f32 %v1800, %v2028
        %v2099 = vadd.f32 %v1805, %v2033
        %v2100 = vadd.f32 %v1808, %v2036
        %v2101 = vadd.f32 %v1813, %v2041
        %v2102 = vadd.f32 %v1816, %v2044
        %v2103 = vadd.f32 %v1821, %v2049
        %v2104 = vadd.f32 %v1824, %v2052
        %v2105 = vadd.f32 %v1829, %v2057
        %v2106 = vadd.f32 %v1832, %v2060
        %v2107 = vadd.f32 %v1837, %v2065
        %v2108 = vadd.f32 %v1840, %v2068
        %v2109 = vadd.f32 %v1845, %v2073
        %v2110 = vadd.f32 %v1848, %v2076
        %v2111 = vadd.f32 %v1263, %v2079
        %v2112 = vadd.f32 %v1264, %v2080
        %v2113 = vadd.f32 %v1265, %v2081
        %v2114 = vadd.f32 %v1266, %v2082
        %v2115 = vadd.f32 %v1267, %v2083
        %v2116 = vadd.f32 %v1268, %v2084
        %v2117 = vadd.f32 %v1269, %v2085
        %v2118 = vadd.f32 %v1270, %v2086
        %v2119 = vadd.f32 %v1271, %v2087
        %v2120 = vadd.f32 %v1272, %v2088
        %v2121 = vadd.f32 %v1273, %v2089
        %v2122 = vadd.f32 %v1274, %v2090
        %v2123 = vadd.f32 %v1275, %v2091
        %v2124 = vadd.f32 %v1276, %v2092
        %v2125 = vadd.f32 %v1277, %v2093
        %v2126 = vadd.f32 %v1278, %v2094
        %v2127 = vadd.f32 %v1279, %v2095
        %v2128 = vadd.f32 %v1280, %v2096
        %v2129 = vadd.f32 %v1281, %v2097
        %v2130 = vadd.f32 %v1282, %v2098
        %v2131 = vadd.f32 %v1283, %v2099
        %v2132 = vadd.f32 %v1284, %v2100
        %v2133 = vadd.f32 %v1285, %v2101
        %v2134 = vadd.f32 %v1286, %v2102
        %v2135 = vadd.f32 %v1287, %v2103
        %v2136 = vadd.f32 %v1288, %v2104
        %v2137 = vadd.f32 %v1289, %v2105
        %v2138 = vadd.f32 %v1290, %v2106
        %v2139 = vadd.f32 %v1291, %v2107
        %v2140 = vadd.f32 %v1292, %v2108
        %v2141 = vadd.f32 %v1293, %v2109
        %v2142 = vadd.f32 %v1294, %v2110
        %s2143 = scalar_lea.vmem [#allocation2], 48
        %v2144 = vld [vmem:[%s2143] sm:$0xff]
        %v2145 = vld [vmem:[%s2143 + $0x8] sm:$0xff]
        %v2146 = vld [vmem:[%s2143 + $0x18] sm:$0xff]
        %v2147 = vld [vmem:[%s2143 + $0x20] sm:$0xff]
        %v2148 = vld [vmem:[%s2143 + $0x30] sm:$0xff]
        %v2149 = vld [vmem:[%s2143 + $0x38] sm:$0xff]
        %v2150 = vld [vmem:[%s2143 + $0x48] sm:$0xff]
        %v2151 = vld [vmem:[%s2143 + $0x50] sm:$0xff]
        %v2152 = vld [vmem:[%s2143 + $0x60] sm:$0xff]
        %v2153 = vld [vmem:[%s2143 + $0x68] sm:$0xff]
        %v2154 = vld [vmem:[%s2143 + $0x78] sm:$0xff]
        %v2155 = vld [vmem:[%s2143 + $0x80] sm:$0xff]
        %v2156 = vld [vmem:[%s2143 + $0x90] sm:$0xff]
        %v2157 = vld [vmem:[%s2143 + $0x98] sm:$0xff]
        %v2158 = vld [vmem:[%s2143 + $0xa8] sm:$0xff]
        %v2159 = vld [vmem:[%s2143 + $0xb0] sm:$0xff]
        %v2160 = vld [vmem:[%s2143 + $0xc0] sm:$0xff]
        %v2161 = vld [vmem:[%s2143 + $0xc8] sm:$0xff]
        %v2162 = vld [vmem:[%s2143 + $0xd8] sm:$0xff]
        %v2163 = vld [vmem:[%s2143 + $0xe0] sm:$0xff]
        %v2164 = vld [vmem:[%s2143 + $0xf0] sm:$0xff]
        %v2165 = vld [vmem:[%s2143 + $0xf8] sm:$0xff]
        %v2166 = vld [vmem:[%s2143 + $0x108] sm:$0xff]
        %v2167 = vld [vmem:[%s2143 + $0x110] sm:$0xff]
        %v2168 = vld [vmem:[%s2143 + $0x120] sm:$0xff]
        %v2169 = vld [vmem:[%s2143 + $0x128] sm:$0xff]
        %v2170 = vld [vmem:[%s2143 + $0x138] sm:$0xff]
        %v2171 = vld [vmem:[%s2143 + $0x140] sm:$0xff]
        %v2172 = vld [vmem:[%s2143 + $0x150] sm:$0xff]
        %v2173 = vld [vmem:[%s2143 + $0x158] sm:$0xff]
        %v2174 = vld [vmem:[%s2143 + $0x168] sm:$0xff]
        %v2175 = vld [vmem:[%s2143 + $0x170] sm:$0xff]
        %v2176 = vld [vmem:[%s2143 + $0x1] sm:$0xff]
        %v2177 = vld [vmem:[%s2143 + $0x9] sm:$0xff]
        %v2178 = vld [vmem:[%s2143 + $0x19] sm:$0xff]
        %v2179 = vld [vmem:[%s2143 + $0x21] sm:$0xff]
        %v2180 = vld [vmem:[%s2143 + $0x31] sm:$0xff]
        %v2181 = vld [vmem:[%s2143 + $0x39] sm:$0xff]
        %v2182 = vld [vmem:[%s2143 + $0x49] sm:$0xff]
        %v2183 = vld [vmem:[%s2143 + $0x51] sm:$0xff]
        %v2184 = vld [vmem:[%s2143 + $0x61] sm:$0xff]
        %v2185 = vld [vmem:[%s2143 + $0x69] sm:$0xff]
        %v2186 = vld [vmem:[%s2143 + $0x79] sm:$0xff]
        %v2187 = vld [vmem:[%s2143 + $0x81] sm:$0xff]
        %v2188 = vld [vmem:[%s2143 + $0x91] sm:$0xff]
        %v2189 = vld [vmem:[%s2143 + $0x99] sm:$0xff]
        %v2190 = vld [vmem:[%s2143 + $0xa9] sm:$0xff]
        %v2191 = vld [vmem:[%s2143 + $0xb1] sm:$0xff]
        %v2192 = vld [vmem:[%s2143 + $0xc1] sm:$0xff]
        %v2193 = vld [vmem:[%s2143 + $0xc9] sm:$0xff]
        %v2194 = vld [vmem:[%s2143 + $0xd9] sm:$0xff]
        %v2195 = vld [vmem:[%s2143 + $0xe1] sm:$0xff]
        %v2196 = vld [vmem:[%s2143 + $0xf1] sm:$0xff]
        %v2197 = vld [vmem:[%s2143 + $0xf9] sm:$0xff]
        %v2198 = vld [vmem:[%s2143 + $0x109] sm:$0xff]
        %v2199 = vld [vmem:[%s2143 + $0x111] sm:$0xff]
        %v2200 = vld [vmem:[%s2143 + $0x121] sm:$0xff]
        %v2201 = vld [vmem:[%s2143 + $0x129] sm:$0xff]
        %v2202 = vld [vmem:[%s2143 + $0x139] sm:$0xff]
        %v2203 = vld [vmem:[%s2143 + $0x141] sm:$0xff]
        %v2204 = vld [vmem:[%s2143 + $0x151] sm:$0xff]
        %v2205 = vld [vmem:[%s2143 + $0x159] sm:$0xff]
        %v2206 = vld [vmem:[%s2143 + $0x169] sm:$0xff]
        %v2207 = vld [vmem:[%s2143 + $0x171] sm:$0xff]
        %v2208 = vld [vmem:[%s2143 + $0x2] sm:$0xff]
        %v2209 = vld [vmem:[%s2143 + $0xa] sm:$0xff]
        %v2210 = vld [vmem:[%s2143 + $0x1a] sm:$0xff]
        %v2211 = vld [vmem:[%s2143 + $0x22] sm:$0xff]
        %v2212 = vld [vmem:[%s2143 + $0x32] sm:$0xff]
        %v2213 = vld [vmem:[%s2143 + $0x3a] sm:$0xff]
        %v2214 = vld [vmem:[%s2143 + $0x4a] sm:$0xff]
        %v2215 = vld [vmem:[%s2143 + $0x52] sm:$0xff]
        %v2216 = vld [vmem:[%s2143 + $0x62] sm:$0xff]
        %v2217 = vld [vmem:[%s2143 + $0x6a] sm:$0xff]
        %v2218 = vld [vmem:[%s2143 + $0x7a] sm:$0xff]
        %v2219 = vld [vmem:[%s2143 + $0x82] sm:$0xff]
        %v2220 = vld [vmem:[%s2143 + $0x92] sm:$0xff]
        %v2221 = vld [vmem:[%s2143 + $0x9a] sm:$0xff]
        %v2222 = vld [vmem:[%s2143 + $0xaa] sm:$0xff]
        %v2223 = vld [vmem:[%s2143 + $0xb2] sm:$0xff]
        %v2224 = vld [vmem:[%s2143 + $0xc2] sm:$0xff]
        %v2225 = vld [vmem:[%s2143 + $0xca] sm:$0xff]
        %v2226 = vld [vmem:[%s2143 + $0xda] sm:$0xff]
        %v2227 = vld [vmem:[%s2143 + $0xe2] sm:$0xff]
        %v2228 = vld [vmem:[%s2143 + $0xf2] sm:$0xff]
        %v2229 = vld [vmem:[%s2143 + $0xfa] sm:$0xff]
        %v2230 = vld [vmem:[%s2143 + $0x10a] sm:$0xff]
        %v2231 = vld [vmem:[%s2143 + $0x112] sm:$0xff]
        %v2232 = vld [vmem:[%s2143 + $0x122] sm:$0xff]
        %v2233 = vld [vmem:[%s2143 + $0x12a] sm:$0xff]
        %v2234 = vld [vmem:[%s2143 + $0x13a] sm:$0xff]
        %v2235 = vld [vmem:[%s2143 + $0x142] sm:$0xff]
        %v2236 = vld [vmem:[%s2143 + $0x152] sm:$0xff]
        %v2237 = vld [vmem:[%s2143 + $0x15a] sm:$0xff]
        %v2238 = vld [vmem:[%s2143 + $0x16a] sm:$0xff]
        %v2239 = vld [vmem:[%s2143 + $0x172] sm:$0xff]
        %s2240 = scalar_lea.vmem %s2, 24
        %v2241 = vld [vmem:[%s2240] sm:$0xf]
        %v2242 = vld [vmem:[%s2240 + $0x4] sm:$0xf]
        %v2243 = vld [vmem:[%s2240 + $0x8] sm:$0xf]
        %v2244 = vpack.c.bf16 %v2145, %v2144
        %v2245 = vpack.c.bf16 %v2147, %v2146
        %v2246 = vpack.c.bf16 %v2149, %v2148
        %v2247 = vpack.c.bf16 %v2151, %v2150
        %v2248 = vpack.c.bf16 %v2153, %v2152
        %v2249 = vpack.c.bf16 %v2155, %v2154
        %v2250 = vpack.c.bf16 %v2157, %v2156
        %v2251 = vpack.c.bf16 %v2159, %v2158
        %v2252 = vpack.c.bf16 %v2161, %v2160
        %v2253 = vpack.c.bf16 %v2163, %v2162
        %v2254 = vpack.c.bf16 %v2165, %v2164
        %v2255 = vpack.c.bf16 %v2167, %v2166
        %v2256 = vpack.c.bf16 %v2169, %v2168
        %v2257 = vpack.c.bf16 %v2171, %v2170
        %v2258 = vpack.c.bf16 %v2173, %v2172
        %v2259 = vpack.c.bf16 %v2175, %v2174
        %v2260 = vpack.c.bf16 %v2177, %v2176
        %v2261 = vpack.c.bf16 %v2179, %v2178
        %v2262 = vpack.c.bf16 %v2181, %v2180
        %v2263 = vpack.c.bf16 %v2183, %v2182
        %v2264 = vpack.c.bf16 %v2185, %v2184
        %v2265 = vpack.c.bf16 %v2187, %v2186
        %v2266 = vpack.c.bf16 %v2189, %v2188
        %v2267 = vpack.c.bf16 %v2191, %v2190
        %v2268 = vpack.c.bf16 %v2193, %v2192
        %v2269 = vpack.c.bf16 %v2195, %v2194
        %v2270 = vpack.c.bf16 %v2197, %v2196
        %v2271 = vpack.c.bf16 %v2199, %v2198
        %v2272 = vpack.c.bf16 %v2201, %v2200
        %v2273 = vpack.c.bf16 %v2203, %v2202
        %v2274 = vpack.c.bf16 %v2205, %v2204
        %v2275 = vpack.c.bf16 %v2207, %v2206
        %v2277 = vsel %vm332, %v2260, 0
        %v2280 = vsel %vm332, %v2261, 0
        %v2283 = vsel %vm332, %v2262, 0
        %v2286 = vsel %vm332, %v2263, 0
        %v2289 = vsel %vm332, %v2264, 0
        %v2292 = vsel %vm332, %v2265, 0
        %v2295 = vsel %vm332, %v2266, 0
        %v2298 = vsel %vm332, %v2267, 0
        %v2301 = vsel %vm332, %v2268, 0
        %v2304 = vsel %vm332, %v2269, 0
        %v2307 = vsel %vm332, %v2270, 0
        %v2310 = vsel %vm332, %v2271, 0
        %v2313 = vsel %vm332, %v2272, 0
        %v2316 = vsel %vm332, %v2273, 0
        %v2319 = vsel %vm332, %v2274, 0
        %v2322 = vsel %vm332, %v2275, 0
        %v2325 = vsel %vm658, %v2242, 0
        %2327 = vmatprep.subr.bf16.mxu0 0
        %2328 = vmatpush1.bf16.msra.mxu0 %v2325
        %2329 = vmatprep.subr.bf16.mxu0 0
        %2330 = vmatpush1.bf16.msra.mxu0 0
        %2331 = vmatprep.subr.bf16.mxu0 0
        %2332 = vmatpush1.bf16.msra.mxu0 0
        %2333 = vmatprep.subr.bf16.mxu0 0
        %2334 = vmatpush1.bf16.msra.mxu0 0
        %2335 = vmatprep.subr.bf16.mxu0 0
        %2336 = vmatpush1.bf16.msra.mxu0 0
        %2337 = vmatprep.subr.bf16.mxu0 0
        %2338 = vmatpush1.bf16.msra.mxu0 0
        %2339 = vmatprep.subr.bf16.mxu0 0
        %2340 = vmatpush1.bf16.msra.mxu0 0
        %2341 = vmatprep.subr.bf16.mxu0 0
        %2342 = vmatpush1.bf16.msra.mxu0 0
        %2343 = vmatprep.subr.bf16.mxu0 0
        %2344 = vmatpush1.bf16.msra.mxu0 0
        %2345 = vmatprep.subr.bf16.mxu0 0
        %2346 = vmatpush1.bf16.msra.mxu0 0
        %2347 = vmatprep.subr.bf16.mxu0 0
        %2348 = vmatpush1.bf16.msra.mxu0 0
        %2349 = vmatprep.subr.bf16.mxu0 0
        %2350 = vmatpush1.bf16.msra.mxu0 0
        %2351 = vmatprep.subr.bf16.mxu0 0
        %2352 = vmatpush1.bf16.msra.mxu0 0
        %2353 = vmatprep.subr.bf16.mxu0 0
        %2354 = vmatpush1.bf16.msra.mxu0 0
        %2355 = vmatprep.subr.bf16.mxu0 0
        %2356 = vmatpush1.bf16.msra.mxu0 0
        %2357 = vmatprep.subr.bf16.mxu0 0
        %2358 = vmatpush1.bf16.msra.mxu0 0
        %2359 = vmatprep.mubr.bf16.mxu0 0
        %2360 = vmatmul.mubr.bf16.gmra.mrb[0].mxu0 %v2277
        %v2361 = vpop.f32.mrb[0].mxu0
        %v2362 = vadd.f32 0.0, %v2361
        %v2363 = vpop.f32.mrb[0].mxu0
        %v2364 = vpop.f32.mrb[0].mxu0
        %v2365 = vadd.f32 0.0, %v2364
        %v2366 = vpop.f32.mrb[0].mxu0
        %2367 = vmatprep.mubr.bf16.mxu0 0
        %2368 = vmatmul.mubr.bf16.gmra.mrb[0].mxu0 %v2280
        %v2369 = vpop.f32.mrb[0].mxu0
        %v2370 = vadd.f32 0.0, %v2369
        %v2371 = vpop.f32.mrb[0].mxu0
        %v2372 = vpop.f32.mrb[0].mxu0
        %v2373 = vadd.f32 0.0, %v2372
        %v2374 = vpop.f32.mrb[0].mxu0
        %2375 = vmatprep.mubr.bf16.mxu0 0
        %2376 = vmatmul.mubr.bf16.gmra.mrb[0].mxu0 %v2283
        %v2377 = vpop.f32.mrb[0].mxu0
        %v2378 = vadd.f32 0.0, %v2377
        %v2379 = vpop.f32.mrb[0].mxu0
        %v2380 = vpop.f32.mrb[0].mxu0
        %v2381 = vadd.f32 0.0, %v2380
        %v2382 = vpop.f32.mrb[0].mxu0
        %2383 = vmatprep.mubr.bf16.mxu0 0
        %2384 = vmatmul.mubr.bf16.gmra.mrb[0].mxu0 %v2286
        %v2385 = vpop.f32.mrb[0].mxu0
        %v2386 = vadd.f32 0.0, %v2385
        %v2387 = vpop.f32.mrb[0].mxu0
        %v2388 = vpop.f32.mrb[0].mxu0
        %v2389 = vadd.f32 0.0, %v2388
        %v2390 = vpop.f32.mrb[0].mxu0
        %2391 = vmatprep.mubr.bf16.mxu0 0
        %2392 = vmatmul.mubr.bf16.gmra.mrb[0].mxu0 %v2289
        %v2393 = vpop.f32.mrb[0].mxu0
        %v2394 = vadd.f32 0.0, %v2393
        %v2395 = vpop.f32.mrb[0].mxu0
        %v2396 = vpop.f32.mrb[0].mxu0
        %v2397 = vadd.f32 0.0, %v2396
        %v2398 = vpop.f32.mrb[0].mxu0
        %2399 = vmatprep.mubr.bf16.mxu0 0
        %2400 = vmatmul.mubr.bf16.gmra.mrb[0].mxu0 %v2292
        %v2401 = vpop.f32.mrb[0].mxu0
        %v2402 = vadd.f32 0.0, %v2401
        %v2403 = vpop.f32.mrb[0].mxu0
        %v2404 = vpop.f32.mrb[0].mxu0
        %v2405 = vadd.f32 0.0, %v2404
        %v2406 = vpop.f32.mrb[0].mxu0
        %2407 = vmatprep.mubr.bf16.mxu0 0
        %2408 = vmatmul.mubr.bf16.gmra.mrb[0].mxu0 %v2295
        %v2409 = vpop.f32.mrb[0].mxu0
        %v2410 = vadd.f32 0.0, %v2409
        %v2411 = vpop.f32.mrb[0].mxu0
        %v2412 = vpop.f32.mrb[0].mxu0
        %v2413 = vadd.f32 0.0, %v2412
        %v2414 = vpop.f32.mrb[0].mxu0
        %2415 = vmatprep.mubr.bf16.mxu0 0
        %2416 = vmatmul.mubr.bf16.gmra.mrb[0].mxu0 %v2298
        %v2417 = vpop.f32.mrb[0].mxu0
        %v2418 = vadd.f32 0.0, %v2417
        %v2419 = vpop.f32.mrb[0].mxu0
        %v2420 = vpop.f32.mrb[0].mxu0
        %v2421 = vadd.f32 0.0, %v2420
        %v2422 = vpop.f32.mrb[0].mxu0
        %2423 = vmatprep.mubr.bf16.mxu0 0
        %2424 = vmatmul.mubr.bf16.gmra.mrb[0].mxu0 %v2301
        %v2425 = vpop.f32.mrb[0].mxu0
        %v2426 = vadd.f32 0.0, %v2425
        %v2427 = vpop.f32.mrb[0].mxu0
        %v2428 = vpop.f32.mrb[0].mxu0
        %v2429 = vadd.f32 0.0, %v2428
        %v2430 = vpop.f32.mrb[0].mxu0
        %2431 = vmatprep.mubr.bf16.mxu0 0
        %2432 = vmatmul.mubr.bf16.gmra.mrb[0].mxu0 %v2304
        %v2433 = vpop.f32.mrb[0].mxu0
        %v2434 = vadd.f32 0.0, %v2433
        %v2435 = vpop.f32.mrb[0].mxu0
        %v2436 = vpop.f32.mrb[0].mxu0
        %v2437 = vadd.f32 0.0, %v2436
        %v2438 = vpop.f32.mrb[0].mxu0
        %2439 = vmatprep.mubr.bf16.mxu0 0
        %2440 = vmatmul.mubr.bf16.gmra.mrb[0].mxu0 %v2307
        %v2441 = vpop.f32.mrb[0].mxu0
        %v2442 = vadd.f32 0.0, %v2441
        %v2443 = vpop.f32.mrb[0].mxu0
        %v2444 = vpop.f32.mrb[0].mxu0
        %v2445 = vadd.f32 0.0, %v2444
        %v2446 = vpop.f32.mrb[0].mxu0
        %2447 = vmatprep.mubr.bf16.mxu0 0
        %2448 = vmatmul.mubr.bf16.gmra.mrb[0].mxu0 %v2310
        %v2449 = vpop.f32.mrb[0].mxu0
        %v2450 = vadd.f32 0.0, %v2449
        %v2451 = vpop.f32.mrb[0].mxu0
        %v2452 = vpop.f32.mrb[0].mxu0
        %v2453 = vadd.f32 0.0, %v2452
        %v2454 = vpop.f32.mrb[0].mxu0
        %2455 = vmatprep.mubr.bf16.mxu0 0
        %2456 = vmatmul.mubr.bf16.gmra.mrb[0].mxu0 %v2313
        %v2457 = vpop.f32.mrb[0].mxu0
        %v2458 = vadd.f32 0.0, %v2457
        %v2459 = vpop.f32.mrb[0].mxu0
        %v2460 = vpop.f32.mrb[0].mxu0
        %v2461 = vadd.f32 0.0, %v2460
        %v2462 = vpop.f32.mrb[0].mxu0
        %2463 = vmatprep.mubr.bf16.mxu0 0
        %2464 = vmatmul.mubr.bf16.gmra.mrb[0].mxu0 %v2316
        %v2465 = vpop.f32.mrb[0].mxu0
        %v2466 = vadd.f32 0.0, %v2465
        %v2467 = vpop.f32.mrb[0].mxu0
        %v2468 = vpop.f32.mrb[0].mxu0
        %v2469 = vadd.f32 0.0, %v2468
        %v2470 = vpop.f32.mrb[0].mxu0
        %2471 = vmatprep.mubr.bf16.mxu0 0
        %2472 = vmatmul.mubr.bf16.gmra.mrb[0].mxu0 %v2319
        %v2473 = vpop.f32.mrb[0].mxu0
        %v2474 = vadd.f32 0.0, %v2473
        %v2475 = vpop.f32.mrb[0].mxu0
        %v2476 = vpop.f32.mrb[0].mxu0
        %v2477 = vadd.f32 0.0, %v2476
        %v2478 = vpop.f32.mrb[0].mxu0
        %2479 = vmatprep.mubr.bf16.mxu0 0
        %2480 = vmatmul.mubr.bf16.gmra.mrb[0].mxu0 %v2322
        %v2481 = vpop.f32.mrb[0].mxu0
        %v2482 = vadd.f32 0.0, %v2481
        %v2483 = vpop.f32.mrb[0].mxu0
        %v2484 = vpop.f32.mrb[0].mxu0
        %v2485 = vadd.f32 0.0, %v2484
        %v2486 = vpop.f32.mrb[0].mxu0
        %2487 = vdwg.mxu0
        %v2489 = vsel %vm332, %v2244, 0
        %v2492 = vsel %vm332, %v2245, 0
        %v2495 = vsel %vm332, %v2246, 0
        %v2498 = vsel %vm332, %v2247, 0
        %v2501 = vsel %vm332, %v2248, 0
        %v2504 = vsel %vm332, %v2249, 0
        %v2507 = vsel %vm332, %v2250, 0
        %v2510 = vsel %vm332, %v2251, 0
        %v2513 = vsel %vm332, %v2252, 0
        %v2516 = vsel %vm332, %v2253, 0
        %v2519 = vsel %vm332, %v2254, 0
        %v2522 = vsel %vm332, %v2255, 0
        %v2525 = vsel %vm332, %v2256, 0
        %v2528 = vsel %vm332, %v2257, 0
        %v2531 = vsel %vm332, %v2258, 0
        %v2534 = vsel %vm332, %v2259, 0
        %v2537 = vsel %vm658, %v2241, 0
        %2539 = vmatprep.subr.bf16.mxu0 0
        %2540 = vmatpush1.bf16.msra.mxu0 %v2537
        %2541 = vmatprep.subr.bf16.mxu0 0
        %2542 = vmatpush1.bf16.msra.mxu0 0
        %2543 = vmatprep.subr.bf16.mxu0 0
        %2544 = vmatpush1.bf16.msra.mxu0 0
        %2545 = vmatprep.subr.bf16.mxu0 0
        %2546 = vmatpush1.bf16.msra.mxu0 0
        %2547 = vmatprep.subr.bf16.mxu0 0
        %2548 = vmatpush1.bf16.msra.mxu0 0
        %2549 = vmatprep.subr.bf16.mxu0 0
        %2550 = vmatpush1.bf16.msra.mxu0 0
        %2551 = vmatprep.subr.bf16.mxu0 0
        %2552 = vmatpush1.bf16.msra.mxu0 0
        %2553 = vmatprep.subr.bf16.mxu0 0
        %2554 = vmatpush1.bf16.msra.mxu0 0
        %2555 = vmatprep.subr.bf16.mxu0 0
        %2556 = vmatpush1.bf16.msra.mxu0 0
        %2557 = vmatprep.subr.bf16.mxu0 0
        %2558 = vmatpush1.bf16.msra.mxu0 0
        %2559 = vmatprep.subr.bf16.mxu0 0
        %2560 = vmatpush1.bf16.msra.mxu0 0
        %2561 = vmatprep.subr.bf16.mxu0 0
        %2562 = vmatpush1.bf16.msra.mxu0 0
        %2563 = vmatprep.subr.bf16.mxu0 0
        %2564 = vmatpush1.bf16.msra.mxu0 0
        %2565 = vmatprep.subr.bf16.mxu0 0
        %2566 = vmatpush1.bf16.msra.mxu0 0
        %2567 = vmatprep.subr.bf16.mxu0 0
        %2568 = vmatpush1.bf16.msra.mxu0 0
        %2569 = vmatprep.subr.bf16.mxu0 0
        %2570 = vmatpush1.bf16.msra.mxu0 0
        %2571 = vmatprep.mubr.bf16.mxu0 0
        %2572 = vmatmul.mubr.bf16.gmra.mrb[0].mxu0 %v2489
        %v2573 = vpop.f32.mrb[0].mxu0
        %v2574 = vadd.f32 %v2362, %v2573
        %v2575 = vpop.f32.mrb[0].mxu0
        %v2576 = vpop.f32.mrb[0].mxu0
        %v2577 = vadd.f32 %v2365, %v2576
        %v2578 = vpop.f32.mrb[0].mxu0
        %2579 = vmatprep.mubr.bf16.mxu0 0
        %2580 = vmatmul.mubr.bf16.gmra.mrb[0].mxu0 %v2492
        %v2581 = vpop.f32.mrb[0].mxu0
        %v2582 = vadd.f32 %v2370, %v2581
        %v2583 = vpop.f32.mrb[0].mxu0
        %v2584 = vpop.f32.mrb[0].mxu0
        %v2585 = vadd.f32 %v2373, %v2584
        %v2586 = vpop.f32.mrb[0].mxu0
        %2587 = vmatprep.mubr.bf16.mxu0 0
        %2588 = vmatmul.mubr.bf16.gmra.mrb[0].mxu0 %v2495
        %v2589 = vpop.f32.mrb[0].mxu0
        %v2590 = vadd.f32 %v2378, %v2589
        %v2591 = vpop.f32.mrb[0].mxu0
        %v2592 = vpop.f32.mrb[0].mxu0
        %v2593 = vadd.f32 %v2381, %v2592
        %v2594 = vpop.f32.mrb[0].mxu0
        %2595 = vmatprep.mubr.bf16.mxu0 0
        %2596 = vmatmul.mubr.bf16.gmra.mrb[0].mxu0 %v2498
        %v2597 = vpop.f32.mrb[0].mxu0
        %v2598 = vadd.f32 %v2386, %v2597
        %v2599 = vpop.f32.mrb[0].mxu0
        %v2600 = vpop.f32.mrb[0].mxu0
        %v2601 = vadd.f32 %v2389, %v2600
        %v2602 = vpop.f32.mrb[0].mxu0
        %2603 = vmatprep.mubr.bf16.mxu0 0
        %2604 = vmatmul.mubr.bf16.gmra.mrb[0].mxu0 %v2501
        %v2605 = vpop.f32.mrb[0].mxu0
        %v2606 = vadd.f32 %v2394, %v2605
        %v2607 = vpop.f32.mrb[0].mxu0
        %v2608 = vpop.f32.mrb[0].mxu0
        %v2609 = vadd.f32 %v2397, %v2608
        %v2610 = vpop.f32.mrb[0].mxu0
        %2611 = vmatprep.mubr.bf16.mxu0 0
        %2612 = vmatmul.mubr.bf16.gmra.mrb[0].mxu0 %v2504
        %v2613 = vpop.f32.mrb[0].mxu0
        %v2614 = vadd.f32 %v2402, %v2613
        %v2615 = vpop.f32.mrb[0].mxu0
        %v2616 = vpop.f32.mrb[0].mxu0
        %v2617 = vadd.f32 %v2405, %v2616
        %v2618 = vpop.f32.mrb[0].mxu0
        %2619 = vmatprep.mubr.bf16.mxu0 0
        %2620 = vmatmul.mubr.bf16.gmra.mrb[0].mxu0 %v2507
        %v2621 = vpop.f32.mrb[0].mxu0
        %v2622 = vadd.f32 %v2410, %v2621
        %v2623 = vpop.f32.mrb[0].mxu0
        %v2624 = vpop.f32.mrb[0].mxu0
        %v2625 = vadd.f32 %v2413, %v2624
        %v2626 = vpop.f32.mrb[0].mxu0
        %2627 = vmatprep.mubr.bf16.mxu0 0
        %2628 = vmatmul.mubr.bf16.gmra.mrb[0].mxu0 %v2510
        %v2629 = vpop.f32.mrb[0].mxu0
        %v2630 = vadd.f32 %v2418, %v2629
        %v2631 = vpop.f32.mrb[0].mxu0
        %v2632 = vpop.f32.mrb[0].mxu0
        %v2633 = vadd.f32 %v2421, %v2632
        %v2634 = vpop.f32.mrb[0].mxu0
        %2635 = vmatprep.mubr.bf16.mxu0 0
        %2636 = vmatmul.mubr.bf16.gmra.mrb[0].mxu0 %v2513
        %v2637 = vpop.f32.mrb[0].mxu0
        %v2638 = vadd.f32 %v2426, %v2637
        %v2639 = vpop.f32.mrb[0].mxu0
        %v2640 = vpop.f32.mrb[0].mxu0
        %v2641 = vadd.f32 %v2429, %v2640
        %v2642 = vpop.f32.mrb[0].mxu0
        %2643 = vmatprep.mubr.bf16.mxu0 0
        %2644 = vmatmul.mubr.bf16.gmra.mrb[0].mxu0 %v2516
        %v2645 = vpop.f32.mrb[0].mxu0
        %v2646 = vadd.f32 %v2434, %v2645
        %v2647 = vpop.f32.mrb[0].mxu0
        %v2648 = vpop.f32.mrb[0].mxu0
        %v2649 = vadd.f32 %v2437, %v2648
        %v2650 = vpop.f32.mrb[0].mxu0
        %2651 = vmatprep.mubr.bf16.mxu0 0
        %2652 = vmatmul.mubr.bf16.gmra.mrb[0].mxu0 %v2519
        %v2653 = vpop.f32.mrb[0].mxu0
        %v2654 = vadd.f32 %v2442, %v2653
        %v2655 = vpop.f32.mrb[0].mxu0
        %v2656 = vpop.f32.mrb[0].mxu0
        %v2657 = vadd.f32 %v2445, %v2656
        %v2658 = vpop.f32.mrb[0].mxu0
        %2659 = vmatprep.mubr.bf16.mxu0 0
        %2660 = vmatmul.mubr.bf16.gmra.mrb[0].mxu0 %v2522
        %v2661 = vpop.f32.mrb[0].mxu0
        %v2662 = vadd.f32 %v2450, %v2661
        %v2663 = vpop.f32.mrb[0].mxu0
        %v2664 = vpop.f32.mrb[0].mxu0
        %v2665 = vadd.f32 %v2453, %v2664
        %v2666 = vpop.f32.mrb[0].mxu0
        %2667 = vmatprep.mubr.bf16.mxu0 0
        %2668 = vmatmul.mubr.bf16.gmra.mrb[0].mxu0 %v2525
        %v2669 = vpop.f32.mrb[0].mxu0
        %v2670 = vadd.f32 %v2458, %v2669
        %v2671 = vpop.f32.mrb[0].mxu0
        %v2672 = vpop.f32.mrb[0].mxu0
        %v2673 = vadd.f32 %v2461, %v2672
        %v2674 = vpop.f32.mrb[0].mxu0
        %2675 = vmatprep.mubr.bf16.mxu0 0
        %2676 = vmatmul.mubr.bf16.gmra.mrb[0].mxu0 %v2528
        %v2677 = vpop.f32.mrb[0].mxu0
        %v2678 = vadd.f32 %v2466, %v2677
        %v2679 = vpop.f32.mrb[0].mxu0
        %v2680 = vpop.f32.mrb[0].mxu0
        %v2681 = vadd.f32 %v2469, %v2680
        %v2682 = vpop.f32.mrb[0].mxu0
        %2683 = vmatprep.mubr.bf16.mxu0 0
        %2684 = vmatmul.mubr.bf16.gmra.mrb[0].mxu0 %v2531
        %v2685 = vpop.f32.mrb[0].mxu0
        %v2686 = vadd.f32 %v2474, %v2685
        %v2687 = vpop.f32.mrb[0].mxu0
        %v2688 = vpop.f32.mrb[0].mxu0
        %v2689 = vadd.f32 %v2477, %v2688
        %v2690 = vpop.f32.mrb[0].mxu0
        %2691 = vmatprep.mubr.bf16.mxu0 0
        %2692 = vmatmul.mubr.bf16.gmra.mrb[0].mxu0 %v2534
        %v2693 = vpop.f32.mrb[0].mxu0
        %v2694 = vadd.f32 %v2482, %v2693
        %v2695 = vpop.f32.mrb[0].mxu0
        %v2696 = vpop.f32.mrb[0].mxu0
        %v2697 = vadd.f32 %v2485, %v2696
        %v2698 = vpop.f32.mrb[0].mxu0
        %2699 = vdwg.mxu0
        %v2700 = vpack.c.bf16 %v2209, %v2208
        %v2701 = vpack.c.bf16 %v2211, %v2210
        %v2702 = vpack.c.bf16 %v2213, %v2212
        %v2703 = vpack.c.bf16 %v2215, %v2214
        %v2704 = vpack.c.bf16 %v2217, %v2216
        %v2705 = vpack.c.bf16 %v2219, %v2218
        %v2706 = vpack.c.bf16 %v2221, %v2220
        %v2707 = vpack.c.bf16 %v2223, %v2222
        %v2708 = vpack.c.bf16 %v2225, %v2224
        %v2709 = vpack.c.bf16 %v2227, %v2226
        %v2710 = vpack.c.bf16 %v2229, %v2228
        %v2711 = vpack.c.bf16 %v2231, %v2230
        %v2712 = vpack.c.bf16 %v2233, %v2232
        %v2713 = vpack.c.bf16 %v2235, %v2234
        %v2714 = vpack.c.bf16 %v2237, %v2236
        %v2715 = vpack.c.bf16 %v2239, %v2238
        %v2717 = vsel %vm332, %v2700, 0
        %v2720 = vsel %vm332, %v2701, 0
        %v2723 = vsel %vm332, %v2702, 0
        %v2726 = vsel %vm332, %v2703, 0
        %v2729 = vsel %vm332, %v2704, 0
        %v2732 = vsel %vm332, %v2705, 0
        %v2735 = vsel %vm332, %v2706, 0
        %v2738 = vsel %vm332, %v2707, 0
        %v2741 = vsel %vm332, %v2708, 0
        %v2744 = vsel %vm332, %v2709, 0
        %v2747 = vsel %vm332, %v2710, 0
        %v2750 = vsel %vm332, %v2711, 0
        %v2753 = vsel %vm332, %v2712, 0
        %v2756 = vsel %vm332, %v2713, 0
        %v2759 = vsel %vm332, %v2714, 0
        %v2762 = vsel %vm332, %v2715, 0
        %v2765 = vsel %vm658, %v2243, 0
        %2767 = vmatprep.subr.bf16.mxu0 0
        %2768 = vmatpush1.bf16.msra.mxu0 %v2765
        %2769 = vmatprep.subr.bf16.mxu0 0
        %2770 = vmatpush1.bf16.msra.mxu0 0
        %2771 = vmatprep.subr.bf16.mxu0 0
        %2772 = vmatpush1.bf16.msra.mxu0 0
        %2773 = vmatprep.subr.bf16.mxu0 0
        %2774 = vmatpush1.bf16.msra.mxu0 0
        %2775 = vmatprep.subr.bf16.mxu0 0
        %2776 = vmatpush1.bf16.msra.mxu0 0
        %2777 = vmatprep.subr.bf16.mxu0 0
        %2778 = vmatpush1.bf16.msra.mxu0 0
        %2779 = vmatprep.subr.bf16.mxu0 0
        %2780 = vmatpush1.bf16.msra.mxu0 0
        %2781 = vmatprep.subr.bf16.mxu0 0
        %2782 = vmatpush1.bf16.msra.mxu0 0
        %2783 = vmatprep.subr.bf16.mxu0 0
        %2784 = vmatpush1.bf16.msra.mxu0 0
        %2785 = vmatprep.subr.bf16.mxu0 0
        %2786 = vmatpush1.bf16.msra.mxu0 0
        %2787 = vmatprep.subr.bf16.mxu0 0
        %2788 = vmatpush1.bf16.msra.mxu0 0
        %2789 = vmatprep.subr.bf16.mxu0 0
        %2790 = vmatpush1.bf16.msra.mxu0 0
        %2791 = vmatprep.subr.bf16.mxu0 0
        %2792 = vmatpush1.bf16.msra.mxu0 0
        %2793 = vmatprep.subr.bf16.mxu0 0
        %2794 = vmatpush1.bf16.msra.mxu0 0
        %2795 = vmatprep.subr.bf16.mxu0 0
        %2796 = vmatpush1.bf16.msra.mxu0 0
        %2797 = vmatprep.subr.bf16.mxu0 0
        %2798 = vmatpush1.bf16.msra.mxu0 0
        %2799 = vmatprep.mubr.bf16.mxu0 0
        %2800 = vmatmul.mubr.bf16.gmra.mrb[0].mxu0 %v2717
        %v2801 = vpop.f32.mrb[0].mxu0
        %v2802 = vadd.f32 0.0, %v2801
        %v2803 = vpop.f32.mrb[0].mxu0
        %v2804 = vpop.f32.mrb[0].mxu0
        %v2805 = vadd.f32 0.0, %v2804
        %v2806 = vpop.f32.mrb[0].mxu0
        %2807 = vmatprep.mubr.bf16.mxu0 0
        %2808 = vmatmul.mubr.bf16.gmra.mrb[0].mxu0 %v2720
        %v2809 = vpop.f32.mrb[0].mxu0
        %v2810 = vadd.f32 0.0, %v2809
        %v2811 = vpop.f32.mrb[0].mxu0
        %v2812 = vpop.f32.mrb[0].mxu0
        %v2813 = vadd.f32 0.0, %v2812
        %v2814 = vpop.f32.mrb[0].mxu0
        %2815 = vmatprep.mubr.bf16.mxu0 0
        %2816 = vmatmul.mubr.bf16.gmra.mrb[0].mxu0 %v2723
        %v2817 = vpop.f32.mrb[0].mxu0
        %v2818 = vadd.f32 0.0, %v2817
        %v2819 = vpop.f32.mrb[0].mxu0
        %v2820 = vpop.f32.mrb[0].mxu0
        %v2821 = vadd.f32 0.0, %v2820
        %v2822 = vpop.f32.mrb[0].mxu0
        %2823 = vmatprep.mubr.bf16.mxu0 0
        %2824 = vmatmul.mubr.bf16.gmra.mrb[0].mxu0 %v2726
        %v2825 = vpop.f32.mrb[0].mxu0
        %v2826 = vadd.f32 0.0, %v2825
        %v2827 = vpop.f32.mrb[0].mxu0
        %v2828 = vpop.f32.mrb[0].mxu0
        %v2829 = vadd.f32 0.0, %v2828
        %v2830 = vpop.f32.mrb[0].mxu0
        %2831 = vmatprep.mubr.bf16.mxu0 0
        %2832 = vmatmul.mubr.bf16.gmra.mrb[0].mxu0 %v2729
        %v2833 = vpop.f32.mrb[0].mxu0
        %v2834 = vadd.f32 0.0, %v2833
        %v2835 = vpop.f32.mrb[0].mxu0
        %v2836 = vpop.f32.mrb[0].mxu0
        %v2837 = vadd.f32 0.0, %v2836
        %v2838 = vpop.f32.mrb[0].mxu0
        %2839 = vmatprep.mubr.bf16.mxu0 0
        %2840 = vmatmul.mubr.bf16.gmra.mrb[0].mxu0 %v2732
        %v2841 = vpop.f32.mrb[0].mxu0
        %v2842 = vadd.f32 0.0, %v2841
        %v2843 = vpop.f32.mrb[0].mxu0
        %v2844 = vpop.f32.mrb[0].mxu0
        %v2845 = vadd.f32 0.0, %v2844
        %v2846 = vpop.f32.mrb[0].mxu0
        %2847 = vmatprep.mubr.bf16.mxu0 0
        %2848 = vmatmul.mubr.bf16.gmra.mrb[0].mxu0 %v2735
        %v2849 = vpop.f32.mrb[0].mxu0
        %v2850 = vadd.f32 0.0, %v2849
        %v2851 = vpop.f32.mrb[0].mxu0
        %v2852 = vpop.f32.mrb[0].mxu0
        %v2853 = vadd.f32 0.0, %v2852
        %v2854 = vpop.f32.mrb[0].mxu0
        %2855 = vmatprep.mubr.bf16.mxu0 0
        %2856 = vmatmul.mubr.bf16.gmra.mrb[0].mxu0 %v2738
        %v2857 = vpop.f32.mrb[0].mxu0
        %v2858 = vadd.f32 0.0, %v2857
        %v2859 = vpop.f32.mrb[0].mxu0
        %v2860 = vpop.f32.mrb[0].mxu0
        %v2861 = vadd.f32 0.0, %v2860
        %v2862 = vpop.f32.mrb[0].mxu0
        %2863 = vmatprep.mubr.bf16.mxu0 0
        %2864 = vmatmul.mubr.bf16.gmra.mrb[0].mxu0 %v2741
        %v2865 = vpop.f32.mrb[0].mxu0
        %v2866 = vadd.f32 0.0, %v2865
        %v2867 = vpop.f32.mrb[0].mxu0
        %v2868 = vpop.f32.mrb[0].mxu0
        %v2869 = vadd.f32 0.0, %v2868
        %v2870 = vpop.f32.mrb[0].mxu0
        %2871 = vmatprep.mubr.bf16.mxu0 0
        %2872 = vmatmul.mubr.bf16.gmra.mrb[0].mxu0 %v2744
        %v2873 = vpop.f32.mrb[0].mxu0
        %v2874 = vadd.f32 0.0, %v2873
        %v2875 = vpop.f32.mrb[0].mxu0
        %v2876 = vpop.f32.mrb[0].mxu0
        %v2877 = vadd.f32 0.0, %v2876
        %v2878 = vpop.f32.mrb[0].mxu0
        %2879 = vmatprep.mubr.bf16.mxu0 0
        %2880 = vmatmul.mubr.bf16.gmra.mrb[0].mxu0 %v2747
        %v2881 = vpop.f32.mrb[0].mxu0
        %v2882 = vadd.f32 0.0, %v2881
        %v2883 = vpop.f32.mrb[0].mxu0
        %v2884 = vpop.f32.mrb[0].mxu0
        %v2885 = vadd.f32 0.0, %v2884
        %v2886 = vpop.f32.mrb[0].mxu0
        %2887 = vmatprep.mubr.bf16.mxu0 0
        %2888 = vmatmul.mubr.bf16.gmra.mrb[0].mxu0 %v2750
        %v2889 = vpop.f32.mrb[0].mxu0
        %v2890 = vadd.f32 0.0, %v2889
        %v2891 = vpop.f32.mrb[0].mxu0
        %v2892 = vpop.f32.mrb[0].mxu0
        %v2893 = vadd.f32 0.0, %v2892
        %v2894 = vpop.f32.mrb[0].mxu0
        %2895 = vmatprep.mubr.bf16.mxu0 0
        %2896 = vmatmul.mubr.bf16.gmra.mrb[0].mxu0 %v2753
        %v2897 = vpop.f32.mrb[0].mxu0
        %v2898 = vadd.f32 0.0, %v2897
        %v2899 = vpop.f32.mrb[0].mxu0
        %v2900 = vpop.f32.mrb[0].mxu0
        %v2901 = vadd.f32 0.0, %v2900
        %v2902 = vpop.f32.mrb[0].mxu0
        %2903 = vmatprep.mubr.bf16.mxu0 0
        %2904 = vmatmul.mubr.bf16.gmra.mrb[0].mxu0 %v2756
        %v2905 = vpop.f32.mrb[0].mxu0
        %v2906 = vadd.f32 0.0, %v2905
        %v2907 = vpop.f32.mrb[0].mxu0
        %v2908 = vpop.f32.mrb[0].mxu0
        %v2909 = vadd.f32 0.0, %v2908
        %v2910 = vpop.f32.mrb[0].mxu0
        %2911 = vmatprep.mubr.bf16.mxu0 0
        %2912 = vmatmul.mubr.bf16.gmra.mrb[0].mxu0 %v2759
        %v2913 = vpop.f32.mrb[0].mxu0
        %v2914 = vadd.f32 0.0, %v2913
        %v2915 = vpop.f32.mrb[0].mxu0
        %v2916 = vpop.f32.mrb[0].mxu0
        %v2917 = vadd.f32 0.0, %v2916
        %v2918 = vpop.f32.mrb[0].mxu0
        %2919 = vmatprep.mubr.bf16.mxu0 0
        %2920 = vmatmul.mubr.bf16.gmra.mrb[0].mxu0 %v2762
        %v2921 = vpop.f32.mrb[0].mxu0
        %v2922 = vadd.f32 0.0, %v2921
        %v2923 = vpop.f32.mrb[0].mxu0
        %v2924 = vpop.f32.mrb[0].mxu0
        %v2925 = vadd.f32 0.0, %v2924
        %v2926 = vpop.f32.mrb[0].mxu0
        %2927 = vdwg.mxu0
        %v2928 = vadd.f32 %v2574, %v2802
        %v2929 = vadd.f32 %v2577, %v2805
        %v2930 = vadd.f32 %v2582, %v2810
        %v2931 = vadd.f32 %v2585, %v2813
        %v2932 = vadd.f32 %v2590, %v2818
        %v2933 = vadd.f32 %v2593, %v2821
        %v2934 = vadd.f32 %v2598, %v2826
        %v2935 = vadd.f32 %v2601, %v2829
        %v2936 = vadd.f32 %v2606, %v2834
        %v2937 = vadd.f32 %v2609, %v2837
        %v2938 = vadd.f32 %v2614, %v2842
        %v2939 = vadd.f32 %v2617, %v2845
        %v2940 = vadd.f32 %v2622, %v2850
        %v2941 = vadd.f32 %v2625, %v2853
        %v2942 = vadd.f32 %v2630, %v2858
        %v2943 = vadd.f32 %v2633, %v2861
        %v2944 = vadd.f32 %v2638, %v2866
        %v2945 = vadd.f32 %v2641, %v2869
        %v2946 = vadd.f32 %v2646, %v2874
        %v2947 = vadd.f32 %v2649, %v2877
        %v2948 = vadd.f32 %v2654, %v2882
        %v2949 = vadd.f32 %v2657, %v2885
        %v2950 = vadd.f32 %v2662, %v2890
        %v2951 = vadd.f32 %v2665, %v2893
        %v2952 = vadd.f32 %v2670, %v2898
        %v2953 = vadd.f32 %v2673, %v2901
        %v2954 = vadd.f32 %v2678, %v2906
        %v2955 = vadd.f32 %v2681, %v2909
        %v2956 = vadd.f32 %v2686, %v2914
        %v2957 = vadd.f32 %v2689, %v2917
        %v2958 = vadd.f32 %v2694, %v2922
        %v2959 = vadd.f32 %v2697, %v2925
        %v2960 = vadd.f32 %v2111, %v2928
        %v2961 = vadd.f32 %v2112, %v2929
        %v2962 = vadd.f32 %v2113, %v2930
        %v2963 = vadd.f32 %v2114, %v2931
        %v2964 = vadd.f32 %v2115, %v2932
        %v2965 = vadd.f32 %v2116, %v2933
        %v2966 = vadd.f32 %v2117, %v2934
        %v2967 = vadd.f32 %v2118, %v2935
        %v2968 = vadd.f32 %v2119, %v2936
        %v2969 = vadd.f32 %v2120, %v2937
        %v2970 = vadd.f32 %v2121, %v2938
        %v2971 = vadd.f32 %v2122, %v2939
        %v2972 = vadd.f32 %v2123, %v2940
        %v2973 = vadd.f32 %v2124, %v2941
        %v2974 = vadd.f32 %v2125, %v2942
        %v2975 = vadd.f32 %v2126, %v2943
        %v2976 = vadd.f32 %v2127, %v2944
        %v2977 = vadd.f32 %v2128, %v2945
        %v2978 = vadd.f32 %v2129, %v2946
        %v2979 = vadd.f32 %v2130, %v2947
        %v2980 = vadd.f32 %v2131, %v2948
        %v2981 = vadd.f32 %v2132, %v2949
        %v2982 = vadd.f32 %v2133, %v2950
        %v2983 = vadd.f32 %v2134, %v2951
        %v2984 = vadd.f32 %v2135, %v2952
        %v2985 = vadd.f32 %v2136, %v2953
        %v2986 = vadd.f32 %v2137, %v2954
        %v2987 = vadd.f32 %v2138, %v2955
        %v2988 = vadd.f32 %v2139, %v2956
        %v2989 = vadd.f32 %v2140, %v2957
        %v2990 = vadd.f32 %v2141, %v2958
        %v2991 = vadd.f32 %v2142, %v2959
        %v2992 = vlaneseq
        %v2993 = vshrl.u32 %v2992, 7
        %v2994 = vsub.s32 0, %v2993
        %v2995 = vrot.slane %v299, %v2994
        %v2996 = vadd.f32 %v2960, %v2995
        %v2997 = vadd.f32 %v2961, %v2995
        %v2998 = vadd.f32 %v2962, %v2995
        %v2999 = vadd.f32 %v2963, %v2995
        %v3000 = vadd.f32 %v2964, %v2995
        %v3001 = vadd.f32 %v2965, %v2995
        %v3002 = vadd.f32 %v2966, %v2995
        %v3003 = vadd.f32 %v2967, %v2995
        %v3004 = vadd.f32 %v2968, %v2995
        %v3005 = vadd.f32 %v2969, %v2995
        %v3006 = vadd.f32 %v2970, %v2995
        %v3007 = vadd.f32 %v2971, %v2995
        %v3008 = vadd.f32 %v2972, %v2995
        %v3009 = vadd.f32 %v2973, %v2995
        %v3010 = vadd.f32 %v2974, %v2995
        %v3011 = vadd.f32 %v2975, %v2995
        %v3012 = vadd.f32 %v2976, %v2995
        %v3013 = vadd.f32 %v2977, %v2995
        %v3014 = vadd.f32 %v2978, %v2995
        %v3015 = vadd.f32 %v2979, %v2995
        %v3016 = vadd.f32 %v2980, %v2995
        %v3017 = vadd.f32 %v2981, %v2995
        %v3018 = vadd.f32 %v2982, %v2995
        %v3019 = vadd.f32 %v2983, %v2995
        %v3020 = vadd.f32 %v2984, %v2995
        %v3021 = vadd.f32 %v2985, %v2995
        %v3022 = vadd.f32 %v2986, %v2995
        %v3023 = vadd.f32 %v2987, %v2995
        %v3024 = vadd.f32 %v2988, %v2995
        %v3025 = vadd.f32 %v2989, %v2995
        %v3026 = vadd.f32 %v2990, %v2995
        %v3027 = vadd.f32 %v2991, %v2995
        %vm3028 = vcmp.gt.f32.partialorder %v2996, 0.0
        %vm3029 = vcmp.gt.f32.partialorder %v2997, 0.0
        %vm3030 = vcmp.gt.f32.partialorder %v2998, 0.0
        %vm3031 = vcmp.gt.f32.partialorder %v2999, 0.0
        %vm3032 = vcmp.gt.f32.partialorder %v3000, 0.0
        %vm3033 = vcmp.gt.f32.partialorder %v3001, 0.0
        %vm3034 = vcmp.gt.f32.partialorder %v3002, 0.0
        %vm3035 = vcmp.gt.f32.partialorder %v3003, 0.0
        %vm3036 = vcmp.gt.f32.partialorder %v3004, 0.0
        %vm3037 = vcmp.gt.f32.partialorder %v3005, 0.0
        %vm3038 = vcmp.gt.f32.partialorder %v3006, 0.0
        %vm3039 = vcmp.gt.f32.partialorder %v3007, 0.0
        %vm3040 = vcmp.gt.f32.partialorder %v3008, 0.0
        %vm3041 = vcmp.gt.f32.partialorder %v3009, 0.0
        %vm3042 = vcmp.gt.f32.partialorder %v3010, 0.0
        %vm3043 = vcmp.gt.f32.partialorder %v3011, 0.0
        %vm3044 = vcmp.gt.f32.partialorder %v3012, 0.0
        %vm3045 = vcmp.gt.f32.partialorder %v3013, 0.0
        %vm3046 = vcmp.gt.f32.partialorder %v3014, 0.0
        %vm3047 = vcmp.gt.f32.partialorder %v3015, 0.0
        %vm3048 = vcmp.gt.f32.partialorder %v3016, 0.0
        %vm3049 = vcmp.gt.f32.partialorder %v3017, 0.0
        %vm3050 = vcmp.gt.f32.partialorder %v3018, 0.0
        %vm3051 = vcmp.gt.f32.partialorder %v3019, 0.0
        %vm3052 = vcmp.gt.f32.partialorder %v3020, 0.0
        %vm3053 = vcmp.gt.f32.partialorder %v3021, 0.0
        %vm3054 = vcmp.gt.f32.partialorder %v3022, 0.0
        %vm3055 = vcmp.gt.f32.partialorder %v3023, 0.0
        %vm3056 = vcmp.gt.f32.partialorder %v3024, 0.0
        %vm3057 = vcmp.gt.f32.partialorder %v3025, 0.0
        %vm3058 = vcmp.gt.f32.partialorder %v3026, 0.0
        %vm3059 = vcmp.gt.f32.partialorder %v3027, 0.0
        %v3060 = vlaneseq
        %v3061 = vshrl.u32 %v3060, 7
        %v3062 = vsub.s32 1, %v3061
        %v3063 = vrot.slane %v299, %v3062
        %v3064 = vmul.f32 %v2996, %v3063
        %v3065 = vmul.f32 %v2997, %v3063
        %v3066 = vmul.f32 %v2998, %v3063
        %v3067 = vmul.f32 %v2999, %v3063
        %v3068 = vmul.f32 %v3000, %v3063
        %v3069 = vmul.f32 %v3001, %v3063
        %v3070 = vmul.f32 %v3002, %v3063
        %v3071 = vmul.f32 %v3003, %v3063
        %v3072 = vmul.f32 %v3004, %v3063
        %v3073 = vmul.f32 %v3005, %v3063
        %v3074 = vmul.f32 %v3006, %v3063
        %v3075 = vmul.f32 %v3007, %v3063
        %v3076 = vmul.f32 %v3008, %v3063
        %v3077 = vmul.f32 %v3009, %v3063
        %v3078 = vmul.f32 %v3010, %v3063
        %v3079 = vmul.f32 %v3011, %v3063
        %v3080 = vmul.f32 %v3012, %v3063
        %v3081 = vmul.f32 %v3013, %v3063
        %v3082 = vmul.f32 %v3014, %v3063
        %v3083 = vmul.f32 %v3015, %v3063
        %v3084 = vmul.f32 %v3016, %v3063
        %v3085 = vmul.f32 %v3017, %v3063
        %v3086 = vmul.f32 %v3018, %v3063
        %v3087 = vmul.f32 %v3019, %v3063
        %v3088 = vmul.f32 %v3020, %v3063
        %v3089 = vmul.f32 %v3021, %v3063
        %v3090 = vmul.f32 %v3022, %v3063
        %v3091 = vmul.f32 %v3023, %v3063
        %v3092 = vmul.f32 %v3024, %v3063
        %v3093 = vmul.f32 %v3025, %v3063
        %v3094 = vmul.f32 %v3026, %v3063
        %v3095 = vmul.f32 %v3027, %v3063
        %v3096 = vsel %vm3028, %v2996, %v3064
        %v3097 = vsel %vm3029, %v2997, %v3065
        %v3098 = vsel %vm3030, %v2998, %v3066
        %v3099 = vsel %vm3031, %v2999, %v3067
        %v3100 = vsel %vm3032, %v3000, %v3068
        %v3101 = vsel %vm3033, %v3001, %v3069
        %v3102 = vsel %vm3034, %v3002, %v3070
        %v3103 = vsel %vm3035, %v3003, %v3071
        %v3104 = vsel %vm3036, %v3004, %v3072
        %v3105 = vsel %vm3037, %v3005, %v3073
        %v3106 = vsel %vm3038, %v3006, %v3074
        %v3107 = vsel %vm3039, %v3007, %v3075
        %v3108 = vsel %vm3040, %v3008, %v3076
        %v3109 = vsel %vm3041, %v3009, %v3077
        %v3110 = vsel %vm3042, %v3010, %v3078
        %v3111 = vsel %vm3043, %v3011, %v3079
        %v3112 = vsel %vm3044, %v3012, %v3080
        %v3113 = vsel %vm3045, %v3013, %v3081
        %v3114 = vsel %vm3046, %v3014, %v3082
        %v3115 = vsel %vm3047, %v3015, %v3083
        %v3116 = vsel %vm3048, %v3016, %v3084
        %v3117 = vsel %vm3049, %v3017, %v3085
        %v3118 = vsel %vm3050, %v3018, %v3086
        %v3119 = vsel %vm3051, %v3019, %v3087
        %v3120 = vsel %vm3052, %v3020, %v3088
        %v3121 = vsel %vm3053, %v3021, %v3089
        %v3122 = vsel %vm3054, %v3022, %v3090
        %v3123 = vsel %vm3055, %v3023, %v3091
        %v3124 = vsel %vm3056, %v3024, %v3092
        %v3125 = vsel %vm3057, %v3025, %v3093
        %v3126 = vsel %vm3058, %v3026, %v3094
        %v3127 = vsel %vm3059, %v3027, %v3095
        %vm3128 = vcmask 130048
        %3129 = vst.msk [vmem:[#allocation3] sm:$0xff] %vm3128, 0.0
        %3130 = vst.msk [vmem:[#allocation3 + $0x8] sm:$0xff] %vm3128, 0.0
        %vm3131 = vcmask 123904
        %3132 = vst.msk [vmem:[#allocation3 + $0x10] sm:$0x3] %vm3131, 0.0
        %s3133 = scalar_lea.vmem [#allocation3], 408
        %3134 = vst.msk [vmem:[%s3133] sm:$0xff] %vm3128, 0.0
        %3135 = vst.msk [vmem:[%s3133 + $0x8] sm:$0xff] %vm3128, 0.0
        %3136 = vst.msk [vmem:[%s3133 + $0x10] sm:$0x3] %vm3131, 0.0
        %s3137 = scalar_lea.vmem [#allocation3], 24
        %vm3138 = vcmask 122880
        %3139 = vst.msk [vmem:[%s3137] sm:$0x1] %vm3138, 0.0
        %3140 = vst.msk [vmem:[%s3137 + $0x18] sm:$0x1] %vm3138, 0.0
        %3141 = vst.msk [vmem:[%s3137 + $0x30] sm:$0x1] %vm3138, 0.0
        %3142 = vst.msk [vmem:[%s3137 + $0x48] sm:$0x1] %vm3138, 0.0
        %3143 = vst.msk [vmem:[%s3137 + $0x60] sm:$0x1] %vm3138, 0.0
        %3144 = vst.msk [vmem:[%s3137 + $0x78] sm:$0x1] %vm3138, 0.0
        %3145 = vst.msk [vmem:[%s3137 + $0x90] sm:$0x1] %vm3138, 0.0
        %3146 = vst.msk [vmem:[%s3137 + $0xa8] sm:$0x1] %vm3138, 0.0
        %3147 = vst.msk [vmem:[%s3137 + $0xc0] sm:$0x1] %vm3138, 0.0
        %3148 = vst.msk [vmem:[%s3137 + $0xd8] sm:$0x1] %vm3138, 0.0
        %3149 = vst.msk [vmem:[%s3137 + $0xf0] sm:$0x1] %vm3138, 0.0
        %3150 = vst.msk [vmem:[%s3137 + $0x108] sm:$0x1] %vm3138, 0.0
        %3151 = vst.msk [vmem:[%s3137 + $0x120] sm:$0x1] %vm3138, 0.0
        %3152 = vst.msk [vmem:[%s3137 + $0x138] sm:$0x1] %vm3138, 0.0
        %3153 = vst.msk [vmem:[%s3137 + $0x150] sm:$0x1] %vm3138, 0.0
        %3154 = vst.msk [vmem:[%s3137 + $0x168] sm:$0x1] %vm3138, 0.0
        %3155 = vst.msk [vmem:[%s3137 + $0x11] sm:$0x1] %vm3138, 0.0
        %3156 = vst.msk [vmem:[%s3137 + $0x29] sm:$0x1] %vm3138, 0.0
        %3157 = vst.msk [vmem:[%s3137 + $0x41] sm:$0x1] %vm3138, 0.0
        %3158 = vst.msk [vmem:[%s3137 + $0x59] sm:$0x1] %vm3138, 0.0
        %3159 = vst.msk [vmem:[%s3137 + $0x71] sm:$0x1] %vm3138, 0.0
        %3160 = vst.msk [vmem:[%s3137 + $0x89] sm:$0x1] %vm3138, 0.0
        %3161 = vst.msk [vmem:[%s3137 + $0xa1] sm:$0x1] %vm3138, 0.0
        %3162 = vst.msk [vmem:[%s3137 + $0xb9] sm:$0x1] %vm3138, 0.0
        %3163 = vst.msk [vmem:[%s3137 + $0xd1] sm:$0x1] %vm3138, 0.0
        %3164 = vst.msk [vmem:[%s3137 + $0xe9] sm:$0x1] %vm3138, 0.0
        %3165 = vst.msk [vmem:[%s3137 + $0x101] sm:$0x1] %vm3138, 0.0
        %3166 = vst.msk [vmem:[%s3137 + $0x119] sm:$0x1] %vm3138, 0.0
        %3167 = vst.msk [vmem:[%s3137 + $0x131] sm:$0x1] %vm3138, 0.0
        %3168 = vst.msk [vmem:[%s3137 + $0x149] sm:$0x1] %vm3138, 0.0
        %3169 = vst.msk [vmem:[%s3137 + $0x161] sm:$0x1] %vm3138, 0.0
        %3170 = vst.msk [vmem:[%s3137 + $0x179] sm:$0x1] %vm3138, 0.0
        %3171 = vst.msk [vmem:[%s3137 + $0x1] sm:$0xff] %vm3128, %v3096
        %3172 = vst.msk [vmem:[%s3137 + $0x9] sm:$0xff] %vm3128, %v3097
        %3173 = vst.msk [vmem:[%s3137 + $0x19] sm:$0xff] %vm3128, %v3098
        %3174 = vst.msk [vmem:[%s3137 + $0x21] sm:$0xff] %vm3128, %v3099
        %3175 = vst.msk [vmem:[%s3137 + $0x31] sm:$0xff] %vm3128, %v3100
        %3176 = vst.msk [vmem:[%s3137 + $0x39] sm:$0xff] %vm3128, %v3101
        %3177 = vst.msk [vmem:[%s3137 + $0x49] sm:$0xff] %vm3128, %v3102
        %3178 = vst.msk [vmem:[%s3137 + $0x51] sm:$0xff] %vm3128, %v3103
        %3179 = vst.msk [vmem:[%s3137 + $0x61] sm:$0xff] %vm3128, %v3104
        %3180 = vst.msk [vmem:[%s3137 + $0x69] sm:$0xff] %vm3128, %v3105
        %3181 = vst.msk [vmem:[%s3137 + $0x79] sm:$0xff] %vm3128, %v3106
        %3182 = vst.msk [vmem:[%s3137 + $0x81] sm:$0xff] %vm3128, %v3107
        %3183 = vst.msk [vmem:[%s3137 + $0x91] sm:$0xff] %vm3128, %v3108
        %3184 = vst.msk [vmem:[%s3137 + $0x99] sm:$0xff] %vm3128, %v3109
        %3185 = vst.msk [vmem:[%s3137 + $0xa9] sm:$0xff] %vm3128, %v3110
        %3186 = vst.msk [vmem:[%s3137 + $0xb1] sm:$0xff] %vm3128, %v3111
        %3187 = vst.msk [vmem:[%s3137 + $0xc1] sm:$0xff] %vm3128, %v3112
        %3188 = vst.msk [vmem:[%s3137 + $0xc9] sm:$0xff] %vm3128, %v3113
        %3189 = vst.msk [vmem:[%s3137 + $0xd9] sm:$0xff] %vm3128, %v3114
        %3190 = vst.msk [vmem:[%s3137 + $0xe1] sm:$0xff] %vm3128, %v3115
        %3191 = vst.msk [vmem:[%s3137 + $0xf1] sm:$0xff] %vm3128, %v3116
        %3192 = vst.msk [vmem:[%s3137 + $0xf9] sm:$0xff] %vm3128, %v3117
        %3193 = vst.msk [vmem:[%s3137 + $0x109] sm:$0xff] %vm3128, %v3118
        %3194 = vst.msk [vmem:[%s3137 + $0x111] sm:$0xff] %vm3128, %v3119
        %3195 = vst.msk [vmem:[%s3137 + $0x121] sm:$0xff] %vm3128, %v3120
        %3196 = vst.msk [vmem:[%s3137 + $0x129] sm:$0xff] %vm3128, %v3121
        %3197 = vst.msk [vmem:[%s3137 + $0x139] sm:$0xff] %vm3128, %v3122
        %3198 = vst.msk [vmem:[%s3137 + $0x141] sm:$0xff] %vm3128, %v3123
        %3199 = vst.msk [vmem:[%s3137 + $0x151] sm:$0xff] %vm3128, %v3124
        %3200 = vst.msk [vmem:[%s3137 + $0x159] sm:$0xff] %vm3128, %v3125
        %3201 = vst.msk [vmem:[%s3137 + $0x169] sm:$0xff] %vm3128, %v3126
        %3202 = vst.msk [vmem:[%s3137 + $0x171] sm:$0xff] %vm3128, %v3127
        %v3203 = vld [vmem:[#allocation3] sm:$0xff]
        %v3204 = vld [vmem:[#allocation3 + $0x8] sm:$0xff]
        %v3205 = vld [vmem:[#allocation3 + $0x10] sm:$0x3]
        %v3206 = vld [vmem:[#allocation3 + $0x30] sm:$0xff]
        %v3207 = vld [vmem:[#allocation3 + $0x38] sm:$0xff]
        %v3208 = vld [vmem:[#allocation3 + $0x40] sm:$0x3]
        %v3209 = vld [vmem:[#allocation3 + $0x60] sm:$0xff]
        %v3210 = vld [vmem:[#allocation3 + $0x68] sm:$0xff]
        %v3211 = vld [vmem:[#allocation3 + $0x70] sm:$0x3]
        %v3212 = vld [vmem:[#allocation3 + $0x90] sm:$0xff]
        %v3213 = vld [vmem:[#allocation3 + $0x98] sm:$0xff]
        %v3214 = vld [vmem:[#allocation3 + $0xa0] sm:$0x3]
        %v3215 = vld [vmem:[#allocation3 + $0xc0] sm:$0xff]
        %v3216 = vld [vmem:[#allocation3 + $0xc8] sm:$0xff]
        %v3217 = vld [vmem:[#allocation3 + $0xd0] sm:$0x3]
        %v3218 = vld [vmem:[#allocation3 + $0xf0] sm:$0xff]
        %v3219 = vld [vmem:[#allocation3 + $0xf8] sm:$0xff]
        %v3220 = vld [vmem:[#allocation3 + $0x100] sm:$0x3]
        %v3221 = vld [vmem:[#allocation3 + $0x120] sm:$0xff]
        %v3222 = vld [vmem:[#allocation3 + $0x128] sm:$0xff]
        %v3223 = vld [vmem:[#allocation3 + $0x130] sm:$0x3]
        %v3224 = vld [vmem:[#allocation3 + $0x150] sm:$0xff]
        %v3225 = vld [vmem:[#allocation3 + $0x158] sm:$0xff]
        %v3226 = vld [vmem:[#allocation3 + $0x160] sm:$0x3]
        %v3227 = vld [vmem:[#allocation3 + $0x180] sm:$0xff]
        %v3228 = vld [vmem:[#allocation3 + $0x188] sm:$0xff]
        %v3229 = vld [vmem:[#allocation3 + $0x190] sm:$0x3]
        %3230 = vst.msk [vmem:[#allocation4] sm:$0xff] %vm3128, %v3203
        %3231 = vst.msk [vmem:[#allocation4 + $0x8] sm:$0xff] %vm3128, %v3204
        %3232 = vst.msk [vmem:[#allocation4 + $0x10] sm:$0x3] %vm3131, %v3205
        %3233 = vst.msk [vmem:[#allocation4 + $0x18] sm:$0xff] %vm3128, %v3206
        %3234 = vst.msk [vmem:[#allocation4 + $0x20] sm:$0xff] %vm3128, %v3207
        %3235 = vst.msk [vmem:[#allocation4 + $0x28] sm:$0x3] %vm3131, %v3208
        %3236 = vst.msk [vmem:[#allocation4 + $0x30] sm:$0xff] %vm3128, %v3209
        %3237 = vst.msk [vmem:[#allocation4 + $0x38] sm:$0xff] %vm3128, %v3210
        %3238 = vst.msk [vmem:[#allocation4 + $0x40] sm:$0x3] %vm3131, %v3211
        %3239 = vst.msk [vmem:[#allocation4 + $0x48] sm:$0xff] %vm3128, %v3212
        %3240 = vst.msk [vmem:[#allocation4 + $0x50] sm:$0xff] %vm3128, %v3213
        %3241 = vst.msk [vmem:[#allocation4 + $0x58] sm:$0x3] %vm3131, %v3214
        %3242 = vst.msk [vmem:[#allocation4 + $0x60] sm:$0xff] %vm3128, %v3215
        %3243 = vst.msk [vmem:[#allocation4 + $0x68] sm:$0xff] %vm3128, %v3216
        %3244 = vst.msk [vmem:[#allocation4 + $0x70] sm:$0x3] %vm3131, %v3217
        %3245 = vst.msk [vmem:[#allocation4 + $0x78] sm:$0xff] %vm3128, %v3218
        %3246 = vst.msk [vmem:[#allocation4 + $0x80] sm:$0xff] %vm3128, %v3219
        %3247 = vst.msk [vmem:[#allocation4 + $0x88] sm:$0x3] %vm3131, %v3220
        %3248 = vst.msk [vmem:[#allocation4 + $0x90] sm:$0xff] %vm3128, %v3221
        %3249 = vst.msk [vmem:[#allocation4 + $0x98] sm:$0xff] %vm3128, %v3222
        %3250 = vst.msk [vmem:[#allocation4 + $0xa0] sm:$0x3] %vm3131, %v3223
        %3251 = vst.msk [vmem:[#allocation4 + $0xa8] sm:$0xff] %vm3128, %v3224
        %3252 = vst.msk [vmem:[#allocation4 + $0xb0] sm:$0xff] %vm3128, %v3225
        %3253 = vst.msk [vmem:[#allocation4 + $0xb8] sm:$0x3] %vm3131, %v3226
        %3254 = vst.msk [vmem:[#allocation4 + $0xc0] sm:$0xff] %vm3128, %v3227
        %3255 = vst.msk [vmem:[#allocation4 + $0xc8] sm:$0xff] %vm3128, %v3228
        %3256 = vst.msk [vmem:[#allocation4 + $0xd0] sm:$0x3] %vm3131, %v3229
        %v3257 = vld [vmem:[%s3137] sm:$0xff]
        %v3258 = vld [vmem:[%s3137 + $0x8] sm:$0xff]
        %v3259 = vld [vmem:[%s3137 + $0x10] sm:$0x3]
        %v3260 = vld [vmem:[%s3137 + $0x30] sm:$0xff]
        %v3261 = vld [vmem:[%s3137 + $0x38] sm:$0xff]
        %v3262 = vld [vmem:[%s3137 + $0x40] sm:$0x3]
        %v3263 = vld [vmem:[%s3137 + $0x60] sm:$0xff]
        %v3264 = vld [vmem:[%s3137 + $0x68] sm:$0xff]
        %v3265 = vld [vmem:[%s3137 + $0x70] sm:$0x3]
        %v3266 = vld [vmem:[%s3137 + $0x90] sm:$0xff]
        %v3267 = vld [vmem:[%s3137 + $0x98] sm:$0xff]
        %v3268 = vld [vmem:[%s3137 + $0xa0] sm:$0x3]
        %v3269 = vld [vmem:[%s3137 + $0xc0] sm:$0xff]
        %v3270 = vld [vmem:[%s3137 + $0xc8] sm:$0xff]
        %v3271 = vld [vmem:[%s3137 + $0xd0] sm:$0x3]
        %v3272 = vld [vmem:[%s3137 + $0xf0] sm:$0xff]
        %v3273 = vld [vmem:[%s3137 + $0xf8] sm:$0xff]
        %v3274 = vld [vmem:[%s3137 + $0x100] sm:$0x3]
        %v3275 = vld [vmem:[%s3137 + $0x120] sm:$0xff]
        %v3276 = vld [vmem:[%s3137 + $0x128] sm:$0xff]
        %v3277 = vld [vmem:[%s3137 + $0x130] sm:$0x3]
        %v3278 = vld [vmem:[%s3137 + $0x150] sm:$0xff]
        %v3279 = vld [vmem:[%s3137 + $0x158] sm:$0xff]
        %v3280 = vld [vmem:[%s3137 + $0x160] sm:$0x3]
        %v3281 = vld [vmem:[%s3137 + $0x180] sm:$0xff]
        %v3282 = vld [vmem:[%s3137 + $0x188] sm:$0xff]
        %v3283 = vld [vmem:[%s3137 + $0x190] sm:$0x3]
        %3284 = vst.msk [vmem:[#allocation5] sm:$0xff] %vm3128, %v3257
        %3285 = vst.msk [vmem:[#allocation5 + $0x8] sm:$0xff] %vm3128, %v3258
        %3286 = vst.msk [vmem:[#allocation5 + $0x10] sm:$0x3] %vm3131, %v3259
        %3287 = vst.msk [vmem:[#allocation5 + $0x18] sm:$0xff] %vm3128, %v3260
        %3288 = vst.msk [vmem:[#allocation5 + $0x20] sm:$0xff] %vm3128, %v3261
        %3289 = vst.msk [vmem:[#allocation5 + $0x28] sm:$0x3] %vm3131, %v3262
        %3290 = vst.msk [vmem:[#allocation5 + $0x30] sm:$0xff] %vm3128, %v3263
        %3291 = vst.msk [vmem:[#allocation5 + $0x38] sm:$0xff] %vm3128, %v3264
        %3292 = vst.msk [vmem:[#allocation5 + $0x40] sm:$0x3] %vm3131, %v3265
        %3293 = vst.msk [vmem:[#allocation5 + $0x48] sm:$0xff] %vm3128, %v3266
        %3294 = vst.msk [vmem:[#allocation5 + $0x50] sm:$0xff] %vm3128, %v3267
        %3295 = vst.msk [vmem:[#allocation5 + $0x58] sm:$0x3] %vm3131, %v3268
        %3296 = vst.msk [vmem:[#allocation5 + $0x60] sm:$0xff] %vm3128, %v3269
        %3297 = vst.msk [vmem:[#allocation5 + $0x68] sm:$0xff] %vm3128, %v3270
        %3298 = vst.msk [vmem:[#allocation5 + $0x70] sm:$0x3] %vm3131, %v3271
        %3299 = vst.msk [vmem:[#allocation5 + $0x78] sm:$0xff] %vm3128, %v3272
        %3300 = vst.msk [vmem:[#allocation5 + $0x80] sm:$0xff] %vm3128, %v3273
        %3301 = vst.msk [vmem:[#allocation5 + $0x88] sm:$0x3] %vm3131, %v3274
        %3302 = vst.msk [vmem:[#allocation5 + $0x90] sm:$0xff] %vm3128, %v3275
        %3303 = vst.msk [vmem:[#allocation5 + $0x98] sm:$0xff] %vm3128, %v3276
        %3304 = vst.msk [vmem:[#allocation5 + $0xa0] sm:$0x3] %vm3131, %v3277
        %3305 = vst.msk [vmem:[#allocation5 + $0xa8] sm:$0xff] %vm3128, %v3278
        %3306 = vst.msk [vmem:[#allocation5 + $0xb0] sm:$0xff] %vm3128, %v3279
        %3307 = vst.msk [vmem:[#allocation5 + $0xb8] sm:$0x3] %vm3131, %v3280
        %3308 = vst.msk [vmem:[#allocation5 + $0xc0] sm:$0xff] %vm3128, %v3281
        %3309 = vst.msk [vmem:[#allocation5 + $0xc8] sm:$0xff] %vm3128, %v3282
        %3310 = vst.msk [vmem:[#allocation5 + $0xd0] sm:$0x3] %vm3131, %v3283
        %v3311 = vld [vmem:[#allocation4] ss:$2 sm:$0xff]
        %s3312 = scalar_lea.vmem [#allocation4], 16
        %v3313 = vld [vmem:[%s3312] ss:$2 sm:$0x1]
        %s3314 = scalar_lea.vmem [#allocation4], 24
        %v3315 = vld [vmem:[%s3314] ss:$2 sm:$0xff]
        %s3316 = scalar_lea.vmem [#allocation4], 40
        %v3317 = vld [vmem:[%s3316] ss:$2 sm:$0x1]
        %s3318 = scalar_lea.vmem [#allocation4], 48
        %v3319 = vld [vmem:[%s3318] ss:$2 sm:$0xff]
        %s3320 = scalar_lea.vmem [#allocation4], 64
        %v3321 = vld [vmem:[%s3320] ss:$2 sm:$0x1]
        %s3322 = scalar_lea.vmem [#allocation4], 72
        %v3323 = vld [vmem:[%s3322] ss:$2 sm:$0xff]
        %s3324 = scalar_lea.vmem [#allocation4], 88
        %v3325 = vld [vmem:[%s3324] ss:$2 sm:$0x1]
        %s3326 = scalar_lea.vmem [#allocation4], 96
        %v3327 = vld [vmem:[%s3326] ss:$2 sm:$0xff]
        %s3328 = scalar_lea.vmem [#allocation4], 112
        %v3329 = vld [vmem:[%s3328] ss:$2 sm:$0x1]
        %s3330 = scalar_lea.vmem [#allocation4], 120
        %v3331 = vld [vmem:[%s3330] ss:$2 sm:$0xff]
        %s3332 = scalar_lea.vmem [#allocation4], 136
        %v3333 = vld [vmem:[%s3332] ss:$2 sm:$0x1]
        %s3334 = scalar_lea.vmem [#allocation4], 144
        %v3335 = vld [vmem:[%s3334] ss:$2 sm:$0xff]
        %s3336 = scalar_lea.vmem [#allocation4], 160
        %v3337 = vld [vmem:[%s3336] ss:$2 sm:$0x1]
        %s3338 = scalar_lea.vmem [#allocation4], 168
        %v3339 = vld [vmem:[%s3338] ss:$2 sm:$0xff]
        %s3340 = scalar_lea.vmem [#allocation4], 184
        %v3341 = vld [vmem:[%s3340] ss:$2 sm:$0x1]
        %s3342 = scalar_lea.vmem [#allocation4], 192
        %v3343 = vld [vmem:[%s3342] ss:$2 sm:$0xff]
        %s3344 = scalar_lea.vmem [#allocation4], 208
        %v3345 = vld [vmem:[%s3344] ss:$2 sm:$0x1]
        %3346 = vst.msk [vmem:[#allocation6] sm:$0xff] %vm3128, %v3311
        %3347 = vst.msk [vmem:[#allocation6 + $0x8] sm:$0x1] %vm3138, %v3313
        %3348 = vst.msk [vmem:[#allocation6 + $0x10] sm:$0xff] %vm3128, %v3315
        %3349 = vst.msk [vmem:[#allocation6 + $0x18] sm:$0x1] %vm3138, %v3317
        %3350 = vst.msk [vmem:[#allocation6 + $0x20] sm:$0xff] %vm3128, %v3319
        %3351 = vst.msk [vmem:[#allocation6 + $0x28] sm:$0x1] %vm3138, %v3321
        %3352 = vst.msk [vmem:[#allocation6 + $0x30] sm:$0xff] %vm3128, %v3323
        %3353 = vst.msk [vmem:[#allocation6 + $0x38] sm:$0x1] %vm3138, %v3325
        %3354 = vst.msk [vmem:[#allocation6 + $0x40] sm:$0xff] %vm3128, %v3327
        %3355 = vst.msk [vmem:[#allocation6 + $0x48] sm:$0x1] %vm3138, %v3329
        %3356 = vst.msk [vmem:[#allocation6 + $0x50] sm:$0xff] %vm3128, %v3331
        %3357 = vst.msk [vmem:[#allocation6 + $0x58] sm:$0x1] %vm3138, %v3333
        %3358 = vst.msk [vmem:[#allocation6 + $0x60] sm:$0xff] %vm3128, %v3335
        %3359 = vst.msk [vmem:[#allocation6 + $0x68] sm:$0x1] %vm3138, %v3337
        %3360 = vst.msk [vmem:[#allocation6 + $0x70] sm:$0xff] %vm3128, %v3339
        %3361 = vst.msk [vmem:[#allocation6 + $0x78] sm:$0x1] %vm3138, %v3341
        %3362 = vst.msk [vmem:[#allocation6 + $0x80] sm:$0xff] %vm3128, %v3343
        %3363 = vst.msk [vmem:[#allocation6 + $0x88] sm:$0x1] %vm3138, %v3345
        %s3364 = scalar_lea.vmem [#allocation4], 1
        %v3365 = vld [vmem:[%s3364] ss:$2 sm:$0xff]
        %s3366 = scalar_lea.vmem [#allocation4], 17
        %v3367 = vld [vmem:[%s3366] ss:$2 sm:$0x1]
        %s3368 = scalar_lea.vmem [#allocation4], 25
        %v3369 = vld [vmem:[%s3368] ss:$2 sm:$0xff]
        %s3370 = scalar_lea.vmem [#allocation4], 41
        %v3371 = vld [vmem:[%s3370] ss:$2 sm:$0x1]
        %s3372 = scalar_lea.vmem [#allocation4], 49
        %v3373 = vld [vmem:[%s3372] ss:$2 sm:$0xff]
        %s3374 = scalar_lea.vmem [#allocation4], 65
        %v3375 = vld [vmem:[%s3374] ss:$2 sm:$0x1]
        %s3376 = scalar_lea.vmem [#allocation4], 73
        %v3377 = vld [vmem:[%s3376] ss:$2 sm:$0xff]
        %s3378 = scalar_lea.vmem [#allocation4], 89
        %v3379 = vld [vmem:[%s3378] ss:$2 sm:$0x1]
        %s3380 = scalar_lea.vmem [#allocation4], 97
        %v3381 = vld [vmem:[%s3380] ss:$2 sm:$0xff]
        %s3382 = scalar_lea.vmem [#allocation4], 113
        %v3383 = vld [vmem:[%s3382] ss:$2 sm:$0x1]
        %s3384 = scalar_lea.vmem [#allocation4], 121
        %v3385 = vld [vmem:[%s3384] ss:$2 sm:$0xff]
        %s3386 = scalar_lea.vmem [#allocation4], 137
        %v3387 = vld [vmem:[%s3386] ss:$2 sm:$0x1]
        %s3388 = scalar_lea.vmem [#allocation4], 145
        %v3389 = vld [vmem:[%s3388] ss:$2 sm:$0xff]
        %s3390 = scalar_lea.vmem [#allocation4], 161
        %v3391 = vld [vmem:[%s3390] ss:$2 sm:$0x1]
        %s3392 = scalar_lea.vmem [#allocation4], 169
        %v3393 = vld [vmem:[%s3392] ss:$2 sm:$0xff]
        %s3394 = scalar_lea.vmem [#allocation4], 185
        %v3395 = vld [vmem:[%s3394] ss:$2 sm:$0x1]
        %s3396 = scalar_lea.vmem [#allocation4], 193
        %v3397 = vld [vmem:[%s3396] ss:$2 sm:$0xff]
        %s3398 = scalar_lea.vmem [#allocation4], 209
        %v3399 = vld [vmem:[%s3398] ss:$2 sm:$0x1]
        %3400 = vst.msk [vmem:[#allocation7] sm:$0xff] %vm3128, %v3365
        %3401 = vst.msk [vmem:[#allocation7 + $0x8] sm:$0x1] %vm3138, %v3367
        %3402 = vst.msk [vmem:[#allocation7 + $0x10] sm:$0xff] %vm3128, %v3369
        %3403 = vst.msk [vmem:[#allocation7 + $0x18] sm:$0x1] %vm3138, %v3371
        %3404 = vst.msk [vmem:[#allocation7 + $0x20] sm:$0xff] %vm3128, %v3373
        %3405 = vst.msk [vmem:[#allocation7 + $0x28] sm:$0x1] %vm3138, %v3375
        %3406 = vst.msk [vmem:[#allocation7 + $0x30] sm:$0xff] %vm3128, %v3377
        %3407 = vst.msk [vmem:[#allocation7 + $0x38] sm:$0x1] %vm3138, %v3379
        %3408 = vst.msk [vmem:[#allocation7 + $0x40] sm:$0xff] %vm3128, %v3381
        %3409 = vst.msk [vmem:[#allocation7 + $0x48] sm:$0x1] %vm3138, %v3383
        %3410 = vst.msk [vmem:[#allocation7 + $0x50] sm:$0xff] %vm3128, %v3385
        %3411 = vst.msk [vmem:[#allocation7 + $0x58] sm:$0x1] %vm3138, %v3387
        %3412 = vst.msk [vmem:[#allocation7 + $0x60] sm:$0xff] %vm3128, %v3389
        %3413 = vst.msk [vmem:[#allocation7 + $0x68] sm:$0x1] %vm3138, %v3391
        %3414 = vst.msk [vmem:[#allocation7 + $0x70] sm:$0xff] %vm3128, %v3393
        %3415 = vst.msk [vmem:[#allocation7 + $0x78] sm:$0x1] %vm3138, %v3395
        %3416 = vst.msk [vmem:[#allocation7 + $0x80] sm:$0xff] %vm3128, %v3397
        %3417 = vst.msk [vmem:[#allocation7 + $0x88] sm:$0x1] %vm3138, %v3399
        %v3418 = vld [vmem:[#allocation5] ss:$2 sm:$0xff]
        %s3419 = scalar_lea.vmem [#allocation5], 16
        %v3420 = vld [vmem:[%s3419] ss:$2 sm:$0x1]
        %s3421 = scalar_lea.vmem [#allocation5], 24
        %v3422 = vld [vmem:[%s3421] ss:$2 sm:$0xff]
        %s3423 = scalar_lea.vmem [#allocation5], 40
        %v3424 = vld [vmem:[%s3423] ss:$2 sm:$0x1]
        %s3425 = scalar_lea.vmem [#allocation5], 48
        %v3426 = vld [vmem:[%s3425] ss:$2 sm:$0xff]
        %s3427 = scalar_lea.vmem [#allocation5], 64
        %v3428 = vld [vmem:[%s3427] ss:$2 sm:$0x1]
        %s3429 = scalar_lea.vmem [#allocation5], 72
        %v3430 = vld [vmem:[%s3429] ss:$2 sm:$0xff]
        %s3431 = scalar_lea.vmem [#allocation5], 88
        %v3432 = vld [vmem:[%s3431] ss:$2 sm:$0x1]
        %s3433 = scalar_lea.vmem [#allocation5], 96
        %v3434 = vld [vmem:[%s3433] ss:$2 sm:$0xff]
        %s3435 = scalar_lea.vmem [#allocation5], 112
        %v3436 = vld [vmem:[%s3435] ss:$2 sm:$0x1]
        %s3437 = scalar_lea.vmem [#allocation5], 120
        %v3438 = vld [vmem:[%s3437] ss:$2 sm:$0xff]
        %s3439 = scalar_lea.vmem [#allocation5], 136
        %v3440 = vld [vmem:[%s3439] ss:$2 sm:$0x1]
        %s3441 = scalar_lea.vmem [#allocation5], 144
        %v3442 = vld [vmem:[%s3441] ss:$2 sm:$0xff]
        %s3443 = scalar_lea.vmem [#allocation5], 160
        %v3444 = vld [vmem:[%s3443] ss:$2 sm:$0x1]
        %s3445 = scalar_lea.vmem [#allocation5], 168
        %v3446 = vld [vmem:[%s3445] ss:$2 sm:$0xff]
        %s3447 = scalar_lea.vmem [#allocation5], 184
        %v3448 = vld [vmem:[%s3447] ss:$2 sm:$0x1]
        %s3449 = scalar_lea.vmem [#allocation5], 192
        %v3450 = vld [vmem:[%s3449] ss:$2 sm:$0xff]
        %s3451 = scalar_lea.vmem [#allocation5], 208
        %v3452 = vld [vmem:[%s3451] ss:$2 sm:$0x1]
        %3453 = vst.msk [vmem:[#allocation8] sm:$0xff] %vm3128, %v3418
        %3454 = vst.msk [vmem:[#allocation8 + $0x8] sm:$0x1] %vm3138, %v3420
        %3455 = vst.msk [vmem:[#allocation8 + $0x10] sm:$0xff] %vm3128, %v3422
        %3456 = vst.msk [vmem:[#allocation8 + $0x18] sm:$0x1] %vm3138, %v3424
        %3457 = vst.msk [vmem:[#allocation8 + $0x20] sm:$0xff] %vm3128, %v3426
        %3458 = vst.msk [vmem:[#allocation8 + $0x28] sm:$0x1] %vm3138, %v3428
        %3459 = vst.msk [vmem:[#allocation8 + $0x30] sm:$0xff] %vm3128, %v3430
        %3460 = vst.msk [vmem:[#allocation8 + $0x38] sm:$0x1] %vm3138, %v3432
        %3461 = vst.msk [vmem:[#allocation8 + $0x40] sm:$0xff] %vm3128, %v3434
        %3462 = vst.msk [vmem:[#allocation8 + $0x48] sm:$0x1] %vm3138, %v3436
        %3463 = vst.msk [vmem:[#allocation8 + $0x50] sm:$0xff] %vm3128, %v3438
        %3464 = vst.msk [vmem:[#allocation8 + $0x58] sm:$0x1] %vm3138, %v3440
        %3465 = vst.msk [vmem:[#allocation8 + $0x60] sm:$0xff] %vm3128, %v3442
        %3466 = vst.msk [vmem:[#allocation8 + $0x68] sm:$0x1] %vm3138, %v3444
        %3467 = vst.msk [vmem:[#allocation8 + $0x70] sm:$0xff] %vm3128, %v3446
        %3468 = vst.msk [vmem:[#allocation8 + $0x78] sm:$0x1] %vm3138, %v3448
        %3469 = vst.msk [vmem:[#allocation8 + $0x80] sm:$0xff] %vm3128, %v3450
        %3470 = vst.msk [vmem:[#allocation8 + $0x88] sm:$0x1] %vm3138, %v3452
        %s3471 = scalar_lea.vmem [#allocation5], 1
        %v3472 = vld [vmem:[%s3471] ss:$2 sm:$0xff]
        %s3473 = scalar_lea.vmem [#allocation5], 17
        %v3474 = vld [vmem:[%s3473] ss:$2 sm:$0x1]
        %s3475 = scalar_lea.vmem [#allocation5], 25
        %v3476 = vld [vmem:[%s3475] ss:$2 sm:$0xff]
        %s3477 = scalar_lea.vmem [#allocation5], 41
        %v3478 = vld [vmem:[%s3477] ss:$2 sm:$0x1]
        %s3479 = scalar_lea.vmem [#allocation5], 49
        %v3480 = vld [vmem:[%s3479] ss:$2 sm:$0xff]
        %s3481 = scalar_lea.vmem [#allocation5], 65
        %v3482 = vld [vmem:[%s3481] ss:$2 sm:$0x1]
        %s3483 = scalar_lea.vmem [#allocation5], 73
        %v3484 = vld [vmem:[%s3483] ss:$2 sm:$0xff]
        %s3485 = scalar_lea.vmem [#allocation5], 89
        %v3486 = vld [vmem:[%s3485] ss:$2 sm:$0x1]
        %s3487 = scalar_lea.vmem [#allocation5], 97
        %v3488 = vld [vmem:[%s3487] ss:$2 sm:$0xff]
        %s3489 = scalar_lea.vmem [#allocation5], 113
        %v3490 = vld [vmem:[%s3489] ss:$2 sm:$0x1]
        %s3491 = scalar_lea.vmem [#allocation5], 121
        %v3492 = vld [vmem:[%s3491] ss:$2 sm:$0xff]
        %s3493 = scalar_lea.vmem [#allocation5], 137
        %v3494 = vld [vmem:[%s3493] ss:$2 sm:$0x1]
        %s3495 = scalar_lea.vmem [#allocation5], 145
        %v3496 = vld [vmem:[%s3495] ss:$2 sm:$0xff]
        %s3497 = scalar_lea.vmem [#allocation5], 161
        %v3498 = vld [vmem:[%s3497] ss:$2 sm:$0x1]
        %s3499 = scalar_lea.vmem [#allocation5], 169
        %v3500 = vld [vmem:[%s3499] ss:$2 sm:$0xff]
        %s3501 = scalar_lea.vmem [#allocation5], 185
        %v3502 = vld [vmem:[%s3501] ss:$2 sm:$0x1]
        %s3503 = scalar_lea.vmem [#allocation5], 193
        %v3504 = vld [vmem:[%s3503] ss:$2 sm:$0xff]
        %s3505 = scalar_lea.vmem [#allocation5], 209
        %v3506 = vld [vmem:[%s3505] ss:$2 sm:$0x1]
        %3507 = vst.msk [vmem:[#allocation9] sm:$0xff] %vm3128, %v3472
        %3508 = vst.msk [vmem:[#allocation9 + $0x8] sm:$0x1] %vm3138, %v3474
        %3509 = vst.msk [vmem:[#allocation9 + $0x10] sm:$0xff] %vm3128, %v3476
        %3510 = vst.msk [vmem:[#allocation9 + $0x18] sm:$0x1] %vm3138, %v3478
        %3511 = vst.msk [vmem:[#allocation9 + $0x20] sm:$0xff] %vm3128, %v3480
        %3512 = vst.msk [vmem:[#allocation9 + $0x28] sm:$0x1] %vm3138, %v3482
        %3513 = vst.msk [vmem:[#allocation9 + $0x30] sm:$0xff] %vm3128, %v3484
        %3514 = vst.msk [vmem:[#allocation9 + $0x38] sm:$0x1] %vm3138, %v3486
        %3515 = vst.msk [vmem:[#allocation9 + $0x40] sm:$0xff] %vm3128, %v3488
        %3516 = vst.msk [vmem:[#allocation9 + $0x48] sm:$0x1] %vm3138, %v3490
        %3517 = vst.msk [vmem:[#allocation9 + $0x50] sm:$0xff] %vm3128, %v3492
        %3518 = vst.msk [vmem:[#allocation9 + $0x58] sm:$0x1] %vm3138, %v3494
        %3519 = vst.msk [vmem:[#allocation9 + $0x60] sm:$0xff] %vm3128, %v3496
        %3520 = vst.msk [vmem:[#allocation9 + $0x68] sm:$0x1] %vm3138, %v3498
        %3521 = vst.msk [vmem:[#allocation9 + $0x70] sm:$0xff] %vm3128, %v3500
        %3522 = vst.msk [vmem:[#allocation9 + $0x78] sm:$0x1] %vm3138, %v3502
        %3523 = vst.msk [vmem:[#allocation9 + $0x80] sm:$0xff] %vm3128, %v3504
        %3524 = vst.msk [vmem:[#allocation9 + $0x88] sm:$0x1] %vm3138, %v3506
        %v3525 = vld [vmem:[#allocation6] sm:$0xff]
        %v3526 = vld [vmem:[#allocation6 + $0x10] sm:$0xff]
        %v3527 = vld [vmem:[#allocation6 + $0x20] sm:$0xff]
        %v3528 = vld [vmem:[#allocation6 + $0x30] sm:$0xff]
        %v3529 = vld [vmem:[#allocation6 + $0x40] sm:$0xff]
        %v3530 = vld [vmem:[#allocation6 + $0x50] sm:$0xff]
        %v3531 = vld [vmem:[#allocation6 + $0x60] sm:$0xff]
        %v3532 = vld [vmem:[#allocation6 + $0x70] sm:$0xff]
        %v3533 = vld [vmem:[#allocation7] sm:$0xff]
        %v3534 = vld [vmem:[#allocation7 + $0x10] sm:$0xff]
        %v3535 = vld [vmem:[#allocation7 + $0x20] sm:$0xff]
        %v3536 = vld [vmem:[#allocation7 + $0x30] sm:$0xff]
        %v3537 = vld [vmem:[#allocation7 + $0x40] sm:$0xff]
        %v3538 = vld [vmem:[#allocation7 + $0x50] sm:$0xff]
        %v3539 = vld [vmem:[#allocation7 + $0x60] sm:$0xff]
        %v3540 = vld [vmem:[#allocation7 + $0x70] sm:$0xff]
        %v3541 = vld [vmem:[#allocation6 + $0x1] sm:$0xff]
        %v3542 = vld [vmem:[#allocation6 + $0x11] sm:$0xff]
        %v3543 = vld [vmem:[#allocation6 + $0x21] sm:$0xff]
        %v3544 = vld [vmem:[#allocation6 + $0x31] sm:$0xff]
        %v3545 = vld [vmem:[#allocation6 + $0x41] sm:$0xff]
        %v3546 = vld [vmem:[#allocation6 + $0x51] sm:$0xff]
        %v3547 = vld [vmem:[#allocation6 + $0x61] sm:$0xff]
        %v3548 = vld [vmem:[#allocation6 + $0x71] sm:$0xff]
        %v3549 = vld [vmem:[%s3] sm:$0xf]
        %v3550 = vld [vmem:[%s3 + $0x4] sm:$0xf]
        %v3551 = vld [vmem:[%s3 + $0x8] sm:$0xf]
        %v3552 = vld [vmem:[%s3 + $0xc] sm:$0xf]
        %v3553 = vld [vmem:[%s3 + $0x10] sm:$0xf]
        %v3554 = vld [vmem:[%s3 + $0x14] sm:$0xf]
        %v3555 = vpack.c.bf16 %v3526, %v3525
        %v3556 = vpack.c.bf16 %v3528, %v3527
        %v3557 = vpack.c.bf16 %v3530, %v3529
        %v3558 = vpack.c.bf16 %v3532, %v3531
        %v3559 = vpack.c.bf16 %v3534, %v3533
        %v3560 = vpack.c.bf16 %v3536, %v3535
        %v3561 = vpack.c.bf16 %v3538, %v3537
        %v3562 = vpack.c.bf16 %v3540, %v3539
        %v3565 = vunpack.c.l.b16 %v3551
        %v3566 = vunpack.c.l.b16 %v3552
        %v3567 = vpack.c.b16 %v3566, %v3565
        %v3570 = vsel %vm3128, %v3559, 0
        %v3573 = vsel %vm3128, %v3560, 0
        %v3576 = vsel %vm3128, %v3561, 0
        %v3579 = vsel %vm3128, %v3562, 0
        %3581 = vmatprep.subr.bf16.mxu0 0
        %3582 = vmatpush1.bf16.msra.mxu0 %v3567
        %3583 = vmatprep.subr.bf16.mxu0 0
        %3584 = vmatpush1.bf16.msra.mxu0 0
        %3585 = vmatprep.subr.bf16.mxu0 0
        %3586 = vmatpush1.bf16.msra.mxu0 0
        %3587 = vmatprep.subr.bf16.mxu0 0
        %3588 = vmatpush1.bf16.msra.mxu0 0
        %3589 = vmatprep.subr.bf16.mxu0 0
        %3590 = vmatpush1.bf16.msra.mxu0 0
        %3591 = vmatprep.subr.bf16.mxu0 0
        %3592 = vmatpush1.bf16.msra.mxu0 0
        %3593 = vmatprep.subr.bf16.mxu0 0
        %3594 = vmatpush1.bf16.msra.mxu0 0
        %3595 = vmatprep.subr.bf16.mxu0 0
        %3596 = vmatpush1.bf16.msra.mxu0 0
        %3597 = vmatprep.subr.bf16.mxu0 0
        %3598 = vmatpush1.bf16.msra.mxu0 0
        %3599 = vmatprep.subr.bf16.mxu0 0
        %3600 = vmatpush1.bf16.msra.mxu0 0
        %3601 = vmatprep.subr.bf16.mxu0 0
        %3602 = vmatpush1.bf16.msra.mxu0 0
        %3603 = vmatprep.subr.bf16.mxu0 0
        %3604 = vmatpush1.bf16.msra.mxu0 0
        %3605 = vmatprep.subr.bf16.mxu0 0
        %3606 = vmatpush1.bf16.msra.mxu0 0
        %3607 = vmatprep.subr.bf16.mxu0 0
        %3608 = vmatpush1.bf16.msra.mxu0 0
        %3609 = vmatprep.subr.bf16.mxu0 0
        %3610 = vmatpush1.bf16.msra.mxu0 0
        %3611 = vmatprep.subr.bf16.mxu0 0
        %3612 = vmatpush1.bf16.msra.mxu0 0
        %3613 = vmatprep.mubr.bf16.mxu0 0
        %3614 = vmatmul.mubr.bf16.gmra.mrb[0].mxu0 %v3570
        %v3615 = vpop.f32.mrb[0].mxu0
        %v3616 = vadd.f32 0.0, %v3615
        %v3617 = vpop.f32.mrb[0].mxu0
        %v3618 = vpop.f32.mrb[0].mxu0
        %v3619 = vadd.f32 0.0, %v3618
        %v3620 = vpop.f32.mrb[0].mxu0
        %3621 = vmatprep.mubr.bf16.mxu0 0
        %3622 = vmatmul.mubr.bf16.gmra.mrb[0].mxu0 %v3573
        %v3623 = vpop.f32.mrb[0].mxu0
        %v3624 = vadd.f32 0.0, %v3623
        %v3625 = vpop.f32.mrb[0].mxu0
        %v3626 = vpop.f32.mrb[0].mxu0
        %v3627 = vadd.f32 0.0, %v3626
        %v3628 = vpop.f32.mrb[0].mxu0
        %3629 = vmatprep.mubr.bf16.mxu0 0
        %3630 = vmatmul.mubr.bf16.gmra.mrb[0].mxu0 %v3576
        %v3631 = vpop.f32.mrb[0].mxu0
        %v3632 = vadd.f32 0.0, %v3631
        %v3633 = vpop.f32.mrb[0].mxu0
        %v3634 = vpop.f32.mrb[0].mxu0
        %v3635 = vadd.f32 0.0, %v3634
        %v3636 = vpop.f32.mrb[0].mxu0
        %3637 = vmatprep.mubr.bf16.mxu0 0
        %3638 = vmatmul.mubr.bf16.gmra.mrb[0].mxu0 %v3579
        %v3639 = vpop.f32.mrb[0].mxu0
        %v3640 = vadd.f32 0.0, %v3639
        %v3641 = vpop.f32.mrb[0].mxu0
        %v3642 = vpop.f32.mrb[0].mxu0
        %v3643 = vadd.f32 0.0, %v3642
        %v3644 = vpop.f32.mrb[0].mxu0
        %3645 = vdwg.mxu0
        %v3648 = vunpack.c.l.b16 %v3549
        %v3649 = vunpack.c.l.b16 %v3550
        %v3650 = vpack.c.b16 %v3649, %v3648
        %v3653 = vsel %vm3128, %v3555, 0
        %v3656 = vsel %vm3128, %v3556, 0
        %v3659 = vsel %vm3128, %v3557, 0
        %v3662 = vsel %vm3128, %v3558, 0
        %3664 = vmatprep.subr.bf16.mxu0 0
        %3665 = vmatpush1.bf16.msra.mxu0 %v3650
        %3666 = vmatprep.subr.bf16.mxu0 0
        %3667 = vmatpush1.bf16.msra.mxu0 0
        %3668 = vmatprep.subr.bf16.mxu0 0
        %3669 = vmatpush1.bf16.msra.mxu0 0
        %3670 = vmatprep.subr.bf16.mxu0 0
        %3671 = vmatpush1.bf16.msra.mxu0 0
        %3672 = vmatprep.subr.bf16.mxu0 0
        %3673 = vmatpush1.bf16.msra.mxu0 0
        %3674 = vmatprep.subr.bf16.mxu0 0
        %3675 = vmatpush1.bf16.msra.mxu0 0
        %3676 = vmatprep.subr.bf16.mxu0 0
        %3677 = vmatpush1.bf16.msra.mxu0 0
        %3678 = vmatprep.subr.bf16.mxu0 0
        %3679 = vmatpush1.bf16.msra.mxu0 0
        %3680 = vmatprep.subr.bf16.mxu0 0
        %3681 = vmatpush1.bf16.msra.mxu0 0
        %3682 = vmatprep.subr.bf16.mxu0 0
        %3683 = vmatpush1.bf16.msra.mxu0 0
        %3684 = vmatprep.subr.bf16.mxu0 0
        %3685 = vmatpush1.bf16.msra.mxu0 0
        %3686 = vmatprep.subr.bf16.mxu0 0
        %3687 = vmatpush1.bf16.msra.mxu0 0
        %3688 = vmatprep.subr.bf16.mxu0 0
        %3689 = vmatpush1.bf16.msra.mxu0 0
        %3690 = vmatprep.subr.bf16.mxu0 0
        %3691 = vmatpush1.bf16.msra.mxu0 0
        %3692 = vmatprep.subr.bf16.mxu0 0
        %3693 = vmatpush1.bf16.msra.mxu0 0
        %3694 = vmatprep.subr.bf16.mxu0 0
        %3695 = vmatpush1.bf16.msra.mxu0 0
        %3696 = vmatprep.mubr.bf16.mxu0 0
        %3697 = vmatmul.mubr.bf16.gmra.mrb[0].mxu0 %v3653
        %v3698 = vpop.f32.mrb[0].mxu0
        %v3699 = vadd.f32 %v3616, %v3698
        %v3700 = vpop.f32.mrb[0].mxu0
        %v3701 = vpop.f32.mrb[0].mxu0
        %v3702 = vadd.f32 %v3619, %v3701
        %v3703 = vpop.f32.mrb[0].mxu0
        %3704 = vmatprep.mubr.bf16.mxu0 0
        %3705 = vmatmul.mubr.bf16.gmra.mrb[0].mxu0 %v3656
        %v3706 = vpop.f32.mrb[0].mxu0
        %v3707 = vadd.f32 %v3624, %v3706
        %v3708 = vpop.f32.mrb[0].mxu0
        %v3709 = vpop.f32.mrb[0].mxu0
        %v3710 = vadd.f32 %v3627, %v3709
        %v3711 = vpop.f32.mrb[0].mxu0
        %3712 = vmatprep.mubr.bf16.mxu0 0
        %3713 = vmatmul.mubr.bf16.gmra.mrb[0].mxu0 %v3659
        %v3714 = vpop.f32.mrb[0].mxu0
        %v3715 = vadd.f32 %v3632, %v3714
        %v3716 = vpop.f32.mrb[0].mxu0
        %v3717 = vpop.f32.mrb[0].mxu0
        %v3718 = vadd.f32 %v3635, %v3717
        %v3719 = vpop.f32.mrb[0].mxu0
        %3720 = vmatprep.mubr.bf16.mxu0 0
        %3721 = vmatmul.mubr.bf16.gmra.mrb[0].mxu0 %v3662
        %v3722 = vpop.f32.mrb[0].mxu0
        %v3723 = vadd.f32 %v3640, %v3722
        %v3724 = vpop.f32.mrb[0].mxu0
        %v3725 = vpop.f32.mrb[0].mxu0
        %v3726 = vadd.f32 %v3643, %v3725
        %v3727 = vpop.f32.mrb[0].mxu0
        %3728 = vdwg.mxu0
        %v3729 = vpack.c.bf16 %v3542, %v3541
        %v3730 = vpack.c.bf16 %v3544, %v3543
        %v3731 = vpack.c.bf16 %v3546, %v3545
        %v3732 = vpack.c.bf16 %v3548, %v3547
        %v3735 = vunpack.c.l.b16 %v3553
        %v3736 = vunpack.c.l.b16 %v3554
        %v3737 = vpack.c.b16 %v3736, %v3735
        %v3740 = vsel %vm3128, %v3729, 0
        %v3743 = vsel %vm3128, %v3730, 0
        %v3746 = vsel %vm3128, %v3731, 0
        %v3749 = vsel %vm3128, %v3732, 0
        %3751 = vmatprep.subr.bf16.mxu0 0
        %3752 = vmatpush1.bf16.msra.mxu0 %v3737
        %3753 = vmatprep.subr.bf16.mxu0 0
        %3754 = vmatpush1.bf16.msra.mxu0 0
        %3755 = vmatprep.subr.bf16.mxu0 0
        %3756 = vmatpush1.bf16.msra.mxu0 0
        %3757 = vmatprep.subr.bf16.mxu0 0
        %3758 = vmatpush1.bf16.msra.mxu0 0
        %3759 = vmatprep.subr.bf16.mxu0 0
        %3760 = vmatpush1.bf16.msra.mxu0 0
        %3761 = vmatprep.subr.bf16.mxu0 0
        %3762 = vmatpush1.bf16.msra.mxu0 0
        %3763 = vmatprep.subr.bf16.mxu0 0
        %3764 = vmatpush1.bf16.msra.mxu0 0
        %3765 = vmatprep.subr.bf16.mxu0 0
        %3766 = vmatpush1.bf16.msra.mxu0 0
        %3767 = vmatprep.subr.bf16.mxu0 0
        %3768 = vmatpush1.bf16.msra.mxu0 0
        %3769 = vmatprep.subr.bf16.mxu0 0
        %3770 = vmatpush1.bf16.msra.mxu0 0
        %3771 = vmatprep.subr.bf16.mxu0 0
        %3772 = vmatpush1.bf16.msra.mxu0 0
        %3773 = vmatprep.subr.bf16.mxu0 0
        %3774 = vmatpush1.bf16.msra.mxu0 0
        %3775 = vmatprep.subr.bf16.mxu0 0
        %3776 = vmatpush1.bf16.msra.mxu0 0
        %3777 = vmatprep.subr.bf16.mxu0 0
        %3778 = vmatpush1.bf16.msra.mxu0 0
        %3779 = vmatprep.subr.bf16.mxu0 0
        %3780 = vmatpush1.bf16.msra.mxu0 0
        %3781 = vmatprep.subr.bf16.mxu0 0
        %3782 = vmatpush1.bf16.msra.mxu0 0
        %3783 = vmatprep.mubr.bf16.mxu0 0
        %3784 = vmatmul.mubr.bf16.gmra.mrb[0].mxu0 %v3740
        %v3785 = vpop.f32.mrb[0].mxu0
        %v3786 = vadd.f32 0.0, %v3785
        %v3787 = vpop.f32.mrb[0].mxu0
        %v3788 = vpop.f32.mrb[0].mxu0
        %v3789 = vadd.f32 0.0, %v3788
        %v3790 = vpop.f32.mrb[0].mxu0
        %3791 = vmatprep.mubr.bf16.mxu0 0
        %3792 = vmatmul.mubr.bf16.gmra.mrb[0].mxu0 %v3743
        %v3793 = vpop.f32.mrb[0].mxu0
        %v3794 = vadd.f32 0.0, %v3793
        %v3795 = vpop.f32.mrb[0].mxu0
        %v3796 = vpop.f32.mrb[0].mxu0
        %v3797 = vadd.f32 0.0, %v3796
        %v3798 = vpop.f32.mrb[0].mxu0
        %3799 = vmatprep.mubr.bf16.mxu0 0
        %3800 = vmatmul.mubr.bf16.gmra.mrb[0].mxu0 %v3746
        %v3801 = vpop.f32.mrb[0].mxu0
        %v3802 = vadd.f32 0.0, %v3801
        %v3803 = vpop.f32.mrb[0].mxu0
        %v3804 = vpop.f32.mrb[0].mxu0
        %v3805 = vadd.f32 0.0, %v3804
        %v3806 = vpop.f32.mrb[0].mxu0
        %3807 = vmatprep.mubr.bf16.mxu0 0
        %3808 = vmatmul.mubr.bf16.gmra.mrb[0].mxu0 %v3749
        %v3809 = vpop.f32.mrb[0].mxu0
        %v3810 = vadd.f32 0.0, %v3809
        %v3811 = vpop.f32.mrb[0].mxu0
        %v3812 = vpop.f32.mrb[0].mxu0
        %v3813 = vadd.f32 0.0, %v3812
        %v3814 = vpop.f32.mrb[0].mxu0
        %3815 = vdwg.mxu0
        %v3816 = vadd.f32 %v3699, %v3786
        %v3817 = vadd.f32 %v3702, %v3789
        %v3818 = vadd.f32 %v3707, %v3794
        %v3819 = vadd.f32 %v3710, %v3797
        %v3820 = vadd.f32 %v3715, %v3802
        %v3821 = vadd.f32 %v3718, %v3805
        %v3822 = vadd.f32 %v3723, %v3810
        %v3823 = vadd.f32 %v3726, %v3813
        %v3824 = vld [vmem:[#allocation8] sm:$0xff]
        %v3825 = vld [vmem:[#allocation8 + $0x10] sm:$0xff]
        %v3826 = vld [vmem:[#allocation8 + $0x20] sm:$0xff]
        %v3827 = vld [vmem:[#allocation8 + $0x30] sm:$0xff]
        %v3828 = vld [vmem:[#allocation8 + $0x40] sm:$0xff]
        %v3829 = vld [vmem:[#allocation8 + $0x50] sm:$0xff]
        %v3830 = vld [vmem:[#allocation8 + $0x60] sm:$0xff]
        %v3831 = vld [vmem:[#allocation8 + $0x70] sm:$0xff]
        %v3832 = vld [vmem:[#allocation9] sm:$0xff]
        %v3833 = vld [vmem:[#allocation9 + $0x10] sm:$0xff]
        %v3834 = vld [vmem:[#allocation9 + $0x20] sm:$0xff]
        %v3835 = vld [vmem:[#allocation9 + $0x30] sm:$0xff]
        %v3836 = vld [vmem:[#allocation9 + $0x40] sm:$0xff]
        %v3837 = vld [vmem:[#allocation9 + $0x50] sm:$0xff]
        %v3838 = vld [vmem:[#allocation9 + $0x60] sm:$0xff]
        %v3839 = vld [vmem:[#allocation9 + $0x70] sm:$0xff]
        %v3840 = vld [vmem:[#allocation8 + $0x1] sm:$0xff]
        %v3841 = vld [vmem:[#allocation8 + $0x11] sm:$0xff]
        %v3842 = vld [vmem:[#allocation8 + $0x21] sm:$0xff]
        %v3843 = vld [vmem:[#allocation8 + $0x31] sm:$0xff]
        %v3844 = vld [vmem:[#allocation8 + $0x41] sm:$0xff]
        %v3845 = vld [vmem:[#allocation8 + $0x51] sm:$0xff]
        %v3846 = vld [vmem:[#allocation8 + $0x61] sm:$0xff]
        %v3847 = vld [vmem:[#allocation8 + $0x71] sm:$0xff]
        %s3848 = scalar_lea.vmem %s3, 24
        %v3849 = vld [vmem:[%s3848] sm:$0xf]
        %v3850 = vld [vmem:[%s3848 + $0x4] sm:$0xf]
        %v3851 = vld [vmem:[%s3848 + $0x8] sm:$0xf]
        %v3852 = vld [vmem:[%s3848 + $0xc] sm:$0xf]
        %v3853 = vld [vmem:[%s3848 + $0x10] sm:$0xf]
        %v3854 = vld [vmem:[%s3848 + $0x14] sm:$0xf]
        %v3855 = vpack.c.bf16 %v3825, %v3824
        %v3856 = vpack.c.bf16 %v3827, %v3826
        %v3857 = vpack.c.bf16 %v3829, %v3828
        %v3858 = vpack.c.bf16 %v3831, %v3830
        %v3859 = vpack.c.bf16 %v3833, %v3832
        %v3860 = vpack.c.bf16 %v3835, %v3834
        %v3861 = vpack.c.bf16 %v3837, %v3836
        %v3862 = vpack.c.bf16 %v3839, %v3838
        %v3865 = vunpack.c.l.b16 %v3851
        %v3866 = vunpack.c.l.b16 %v3852
        %v3867 = vpack.c.b16 %v3866, %v3865
        %v3870 = vsel %vm3128, %v3859, 0
        %v3873 = vsel %vm3128, %v3860, 0
        %v3876 = vsel %vm3128, %v3861, 0
        %v3879 = vsel %vm3128, %v3862, 0
        %3881 = vmatprep.subr.bf16.mxu0 0
        %3882 = vmatpush1.bf16.msra.mxu0 %v3867
        %3883 = vmatprep.subr.bf16.mxu0 0
        %3884 = vmatpush1.bf16.msra.mxu0 0
        %3885 = vmatprep.subr.bf16.mxu0 0
        %3886 = vmatpush1.bf16.msra.mxu0 0
        %3887 = vmatprep.subr.bf16.mxu0 0
        %3888 = vmatpush1.bf16.msra.mxu0 0
        %3889 = vmatprep.subr.bf16.mxu0 0
        %3890 = vmatpush1.bf16.msra.mxu0 0
        %3891 = vmatprep.subr.bf16.mxu0 0
        %3892 = vmatpush1.bf16.msra.mxu0 0
        %3893 = vmatprep.subr.bf16.mxu0 0
        %3894 = vmatpush1.bf16.msra.mxu0 0
        %3895 = vmatprep.subr.bf16.mxu0 0
        %3896 = vmatpush1.bf16.msra.mxu0 0
        %3897 = vmatprep.subr.bf16.mxu0 0
        %3898 = vmatpush1.bf16.msra.mxu0 0
        %3899 = vmatprep.subr.bf16.mxu0 0
        %3900 = vmatpush1.bf16.msra.mxu0 0
        %3901 = vmatprep.subr.bf16.mxu0 0
        %3902 = vmatpush1.bf16.msra.mxu0 0
        %3903 = vmatprep.subr.bf16.mxu0 0
        %3904 = vmatpush1.bf16.msra.mxu0 0
        %3905 = vmatprep.subr.bf16.mxu0 0
        %3906 = vmatpush1.bf16.msra.mxu0 0
        %3907 = vmatprep.subr.bf16.mxu0 0
        %3908 = vmatpush1.bf16.msra.mxu0 0
        %3909 = vmatprep.subr.bf16.mxu0 0
        %3910 = vmatpush1.bf16.msra.mxu0 0
        %3911 = vmatprep.subr.bf16.mxu0 0
        %3912 = vmatpush1.bf16.msra.mxu0 0
        %3913 = vmatprep.mubr.bf16.mxu0 0
        %3914 = vmatmul.mubr.bf16.gmra.mrb[0].mxu0 %v3870
        %v3915 = vpop.f32.mrb[0].mxu0
        %v3916 = vadd.f32 0.0, %v3915
        %v3917 = vpop.f32.mrb[0].mxu0
        %v3918 = vpop.f32.mrb[0].mxu0
        %v3919 = vadd.f32 0.0, %v3918
        %v3920 = vpop.f32.mrb[0].mxu0
        %3921 = vmatprep.mubr.bf16.mxu0 0
        %3922 = vmatmul.mubr.bf16.gmra.mrb[0].mxu0 %v3873
        %v3923 = vpop.f32.mrb[0].mxu0
        %v3924 = vadd.f32 0.0, %v3923
        %v3925 = vpop.f32.mrb[0].mxu0
        %v3926 = vpop.f32.mrb[0].mxu0
        %v3927 = vadd.f32 0.0, %v3926
        %v3928 = vpop.f32.mrb[0].mxu0
        %3929 = vmatprep.mubr.bf16.mxu0 0
        %3930 = vmatmul.mubr.bf16.gmra.mrb[0].mxu0 %v3876
        %v3931 = vpop.f32.mrb[0].mxu0
        %v3932 = vadd.f32 0.0, %v3931
        %v3933 = vpop.f32.mrb[0].mxu0
        %v3934 = vpop.f32.mrb[0].mxu0
        %v3935 = vadd.f32 0.0, %v3934
        %v3936 = vpop.f32.mrb[0].mxu0
        %3937 = vmatprep.mubr.bf16.mxu0 0
        %3938 = vmatmul.mubr.bf16.gmra.mrb[0].mxu0 %v3879
        %v3939 = vpop.f32.mrb[0].mxu0
        %v3940 = vadd.f32 0.0, %v3939
        %v3941 = vpop.f32.mrb[0].mxu0
        %v3942 = vpop.f32.mrb[0].mxu0
        %v3943 = vadd.f32 0.0, %v3942
        %v3944 = vpop.f32.mrb[0].mxu0
        %3945 = vdwg.mxu0
        %v3948 = vunpack.c.l.b16 %v3849
        %v3949 = vunpack.c.l.b16 %v3850
        %v3950 = vpack.c.b16 %v3949, %v3948
        %v3953 = vsel %vm3128, %v3855, 0
        %v3956 = vsel %vm3128, %v3856, 0
        %v3959 = vsel %vm3128, %v3857, 0
        %v3962 = vsel %vm3128, %v3858, 0
        %3964 = vmatprep.subr.bf16.mxu0 0
        %3965 = vmatpush1.bf16.msra.mxu0 %v3950
        %3966 = vmatprep.subr.bf16.mxu0 0
        %3967 = vmatpush1.bf16.msra.mxu0 0
        %3968 = vmatprep.subr.bf16.mxu0 0
        %3969 = vmatpush1.bf16.msra.mxu0 0
        %3970 = vmatprep.subr.bf16.mxu0 0
        %3971 = vmatpush1.bf16.msra.mxu0 0
        %3972 = vmatprep.subr.bf16.mxu0 0
        %3973 = vmatpush1.bf16.msra.mxu0 0
        %3974 = vmatprep.subr.bf16.mxu0 0
        %3975 = vmatpush1.bf16.msra.mxu0 0
        %3976 = vmatprep.subr.bf16.mxu0 0
        %3977 = vmatpush1.bf16.msra.mxu0 0
        %3978 = vmatprep.subr.bf16.mxu0 0
        %3979 = vmatpush1.bf16.msra.mxu0 0
        %3980 = vmatprep.subr.bf16.mxu0 0
        %3981 = vmatpush1.bf16.msra.mxu0 0
        %3982 = vmatprep.subr.bf16.mxu0 0
        %3983 = vmatpush1.bf16.msra.mxu0 0
        %3984 = vmatprep.subr.bf16.mxu0 0
        %3985 = vmatpush1.bf16.msra.mxu0 0
        %3986 = vmatprep.subr.bf16.mxu0 0
        %3987 = vmatpush1.bf16.msra.mxu0 0
        %3988 = vmatprep.subr.bf16.mxu0 0
        %3989 = vmatpush1.bf16.msra.mxu0 0
        %3990 = vmatprep.subr.bf16.mxu0 0
        %3991 = vmatpush1.bf16.msra.mxu0 0
        %3992 = vmatprep.subr.bf16.mxu0 0
        %3993 = vmatpush1.bf16.msra.mxu0 0
        %3994 = vmatprep.subr.bf16.mxu0 0
        %3995 = vmatpush1.bf16.msra.mxu0 0
        %3996 = vmatprep.mubr.bf16.mxu0 0
        %3997 = vmatmul.mubr.bf16.gmra.mrb[0].mxu0 %v3953
        %v3998 = vpop.f32.mrb[0].mxu0
        %v3999 = vadd.f32 %v3916, %v3998
        %v4000 = vpop.f32.mrb[0].mxu0
        %v4001 = vpop.f32.mrb[0].mxu0
        %v4002 = vadd.f32 %v3919, %v4001
        %v4003 = vpop.f32.mrb[0].mxu0
        %4004 = vmatprep.mubr.bf16.mxu0 0
        %4005 = vmatmul.mubr.bf16.gmra.mrb[0].mxu0 %v3956
        %v4006 = vpop.f32.mrb[0].mxu0
        %v4007 = vadd.f32 %v3924, %v4006
        %v4008 = vpop.f32.mrb[0].mxu0
        %v4009 = vpop.f32.mrb[0].mxu0
        %v4010 = vadd.f32 %v3927, %v4009
        %v4011 = vpop.f32.mrb[0].mxu0
        %4012 = vmatprep.mubr.bf16.mxu0 0
        %4013 = vmatmul.mubr.bf16.gmra.mrb[0].mxu0 %v3959
        %v4014 = vpop.f32.mrb[0].mxu0
        %v4015 = vadd.f32 %v3932, %v4014
        %v4016 = vpop.f32.mrb[0].mxu0
        %v4017 = vpop.f32.mrb[0].mxu0
        %v4018 = vadd.f32 %v3935, %v4017
        %v4019 = vpop.f32.mrb[0].mxu0
        %4020 = vmatprep.mubr.bf16.mxu0 0
        %4021 = vmatmul.mubr.bf16.gmra.mrb[0].mxu0 %v3962
        %v4022 = vpop.f32.mrb[0].mxu0
        %v4023 = vadd.f32 %v3940, %v4022
        %v4024 = vpop.f32.mrb[0].mxu0
        %v4025 = vpop.f32.mrb[0].mxu0
        %v4026 = vadd.f32 %v3943, %v4025
        %v4027 = vpop.f32.mrb[0].mxu0
        %4028 = vdwg.mxu0
        %v4029 = vpack.c.bf16 %v3841, %v3840
        %v4030 = vpack.c.bf16 %v3843, %v3842
        %v4031 = vpack.c.bf16 %v3845, %v3844
        %v4032 = vpack.c.bf16 %v3847, %v3846
        %v4035 = vunpack.c.l.b16 %v3853
        %v4036 = vunpack.c.l.b16 %v3854
        %v4037 = vpack.c.b16 %v4036, %v4035
        %v4040 = vsel %vm3128, %v4029, 0
        %v4043 = vsel %vm3128, %v4030, 0
        %v4046 = vsel %vm3128, %v4031, 0
        %v4049 = vsel %vm3128, %v4032, 0
        %4051 = vmatprep.subr.bf16.mxu0 0
        %4052 = vmatpush1.bf16.msra.mxu0 %v4037
        %4053 = vmatprep.subr.bf16.mxu0 0
        %4054 = vmatpush1.bf16.msra.mxu0 0
        %4055 = vmatprep.subr.bf16.mxu0 0
        %4056 = vmatpush1.bf16.msra.mxu0 0
        %4057 = vmatprep.subr.bf16.mxu0 0
        %4058 = vmatpush1.bf16.msra.mxu0 0
        %4059 = vmatprep.subr.bf16.mxu0 0
        %4060 = vmatpush1.bf16.msra.mxu0 0
        %4061 = vmatprep.subr.bf16.mxu0 0
        %4062 = vmatpush1.bf16.msra.mxu0 0
        %4063 = vmatprep.subr.bf16.mxu0 0
        %4064 = vmatpush1.bf16.msra.mxu0 0
        %4065 = vmatprep.subr.bf16.mxu0 0
        %4066 = vmatpush1.bf16.msra.mxu0 0
        %4067 = vmatprep.subr.bf16.mxu0 0
        %4068 = vmatpush1.bf16.msra.mxu0 0
        %4069 = vmatprep.subr.bf16.mxu0 0
        %4070 = vmatpush1.bf16.msra.mxu0 0
        %4071 = vmatprep.subr.bf16.mxu0 0
        %4072 = vmatpush1.bf16.msra.mxu0 0
        %4073 = vmatprep.subr.bf16.mxu0 0
        %4074 = vmatpush1.bf16.msra.mxu0 0
        %4075 = vmatprep.subr.bf16.mxu0 0
        %4076 = vmatpush1.bf16.msra.mxu0 0
        %4077 = vmatprep.subr.bf16.mxu0 0
        %4078 = vmatpush1.bf16.msra.mxu0 0
        %4079 = vmatprep.subr.bf16.mxu0 0
        %4080 = vmatpush1.bf16.msra.mxu0 0
        %4081 = vmatprep.subr.bf16.mxu0 0
        %4082 = vmatpush1.bf16.msra.mxu0 0
        %4083 = vmatprep.mubr.bf16.mxu0 0
        %4084 = vmatmul.mubr.bf16.gmra.mrb[0].mxu0 %v4040
        %v4085 = vpop.f32.mrb[0].mxu0
        %v4086 = vadd.f32 0.0, %v4085
        %v4087 = vpop.f32.mrb[0].mxu0
        %v4088 = vpop.f32.mrb[0].mxu0
        %v4089 = vadd.f32 0.0, %v4088
        %v4090 = vpop.f32.mrb[0].mxu0
        %4091 = vmatprep.mubr.bf16.mxu0 0
        %4092 = vmatmul.mubr.bf16.gmra.mrb[0].mxu0 %v4043
        %v4093 = vpop.f32.mrb[0].mxu0
        %v4094 = vadd.f32 0.0, %v4093
        %v4095 = vpop.f32.mrb[0].mxu0
        %v4096 = vpop.f32.mrb[0].mxu0
        %v4097 = vadd.f32 0.0, %v4096
        %v4098 = vpop.f32.mrb[0].mxu0
        %4099 = vmatprep.mubr.bf16.mxu0 0
        %4100 = vmatmul.mubr.bf16.gmra.mrb[0].mxu0 %v4046
        %v4101 = vpop.f32.mrb[0].mxu0
        %v4102 = vadd.f32 0.0, %v4101
        %v4103 = vpop.f32.mrb[0].mxu0
        %v4104 = vpop.f32.mrb[0].mxu0
        %v4105 = vadd.f32 0.0, %v4104
        %v4106 = vpop.f32.mrb[0].mxu0
        %4107 = vmatprep.mubr.bf16.mxu0 0
        %4108 = vmatmul.mubr.bf16.gmra.mrb[0].mxu0 %v4049
        %v4109 = vpop.f32.mrb[0].mxu0
        %v4110 = vadd.f32 0.0, %v4109
        %v4111 = vpop.f32.mrb[0].mxu0
        %v4112 = vpop.f32.mrb[0].mxu0
        %v4113 = vadd.f32 0.0, %v4112
        %v4114 = vpop.f32.mrb[0].mxu0
        %4115 = vdwg.mxu0
        %v4116 = vadd.f32 %v3999, %v4086
        %v4117 = vadd.f32 %v4002, %v4089
        %v4118 = vadd.f32 %v4007, %v4094
        %v4119 = vadd.f32 %v4010, %v4097
        %v4120 = vadd.f32 %v4015, %v4102
        %v4121 = vadd.f32 %v4018, %v4105
        %v4122 = vadd.f32 %v4023, %v4110
        %v4123 = vadd.f32 %v4026, %v4113
        %v4124 = vadd.f32 %v3816, %v4116
        %v4125 = vadd.f32 %v3817, %v4117
        %v4126 = vadd.f32 %v3818, %v4118
        %v4127 = vadd.f32 %v3819, %v4119
        %v4128 = vadd.f32 %v3820, %v4120
        %v4129 = vadd.f32 %v3821, %v4121
        %v4130 = vadd.f32 %v3822, %v4122
        %v4131 = vadd.f32 %v3823, %v4123
        %s4132 = scalar_lea.vmem [#allocation6], 16
        %v4133 = vld [vmem:[%s4132] sm:$0xff]
        %v4134 = vld [vmem:[%s4132 + $0x10] sm:$0xff]
        %v4135 = vld [vmem:[%s4132 + $0x20] sm:$0xff]
        %v4136 = vld [vmem:[%s4132 + $0x30] sm:$0xff]
        %v4137 = vld [vmem:[%s4132 + $0x40] sm:$0xff]
        %v4138 = vld [vmem:[%s4132 + $0x50] sm:$0xff]
        %v4139 = vld [vmem:[%s4132 + $0x60] sm:$0xff]
        %v4140 = vld [vmem:[%s4132 + $0x70] sm:$0xff]
        %s4141 = scalar_lea.vmem [#allocation7], 16
        %v4142 = vld [vmem:[%s4141] sm:$0xff]
        %v4143 = vld [vmem:[%s4141 + $0x10] sm:$0xff]
        %v4144 = vld [vmem:[%s4141 + $0x20] sm:$0xff]
        %v4145 = vld [vmem:[%s4141 + $0x30] sm:$0xff]
        %v4146 = vld [vmem:[%s4141 + $0x40] sm:$0xff]
        %v4147 = vld [vmem:[%s4141 + $0x50] sm:$0xff]
        %v4148 = vld [vmem:[%s4141 + $0x60] sm:$0xff]
        %v4149 = vld [vmem:[%s4141 + $0x70] sm:$0xff]
        %v4150 = vld [vmem:[%s4132 + $0x1] sm:$0xff]
        %v4151 = vld [vmem:[%s4132 + $0x11] sm:$0xff]
        %v4152 = vld [vmem:[%s4132 + $0x21] sm:$0xff]
        %v4153 = vld [vmem:[%s4132 + $0x31] sm:$0xff]
        %v4154 = vld [vmem:[%s4132 + $0x41] sm:$0xff]
        %v4155 = vld [vmem:[%s4132 + $0x51] sm:$0xff]
        %v4156 = vld [vmem:[%s4132 + $0x61] sm:$0xff]
        %v4157 = vld [vmem:[%s4132 + $0x71] sm:$0xff]
        %s4158 = scalar_lea.vmem %s3, 48
        %v4159 = vld [vmem:[%s4158] sm:$0xf]
        %v4160 = vld [vmem:[%s4158 + $0x4] sm:$0xf]
        %v4161 = vld [vmem:[%s4158 + $0x8] sm:$0xf]
        %v4162 = vld [vmem:[%s4158 + $0xc] sm:$0xf]
        %v4163 = vld [vmem:[%s4158 + $0x10] sm:$0xf]
        %v4164 = vld [vmem:[%s4158 + $0x14] sm:$0xf]
        %v4165 = vpack.c.bf16 %v4134, %v4133
        %v4166 = vpack.c.bf16 %v4136, %v4135
        %v4167 = vpack.c.bf16 %v4138, %v4137
        %v4168 = vpack.c.bf16 %v4140, %v4139
        %v4169 = vpack.c.bf16 %v4143, %v4142
        %v4170 = vpack.c.bf16 %v4145, %v4144
        %v4171 = vpack.c.bf16 %v4147, %v4146
        %v4172 = vpack.c.bf16 %v4149, %v4148
        %v4175 = vunpack.c.l.b16 %v4161
        %v4176 = vunpack.c.l.b16 %v4162
        %v4177 = vpack.c.b16 %v4176, %v4175
        %v4180 = vsel %vm3128, %v4169, 0
        %v4183 = vsel %vm3128, %v4170, 0
        %v4186 = vsel %vm3128, %v4171, 0
        %v4189 = vsel %vm3128, %v4172, 0
        %4191 = vmatprep.subr.bf16.mxu0 0
        %4192 = vmatpush1.bf16.msra.mxu0 %v4177
        %4193 = vmatprep.subr.bf16.mxu0 0
        %4194 = vmatpush1.bf16.msra.mxu0 0
        %4195 = vmatprep.subr.bf16.mxu0 0
        %4196 = vmatpush1.bf16.msra.mxu0 0
        %4197 = vmatprep.subr.bf16.mxu0 0
        %4198 = vmatpush1.bf16.msra.mxu0 0
        %4199 = vmatprep.subr.bf16.mxu0 0
        %4200 = vmatpush1.bf16.msra.mxu0 0
        %4201 = vmatprep.subr.bf16.mxu0 0
        %4202 = vmatpush1.bf16.msra.mxu0 0
        %4203 = vmatprep.subr.bf16.mxu0 0
        %4204 = vmatpush1.bf16.msra.mxu0 0
        %4205 = vmatprep.subr.bf16.mxu0 0
        %4206 = vmatpush1.bf16.msra.mxu0 0
        %4207 = vmatprep.subr.bf16.mxu0 0
        %4208 = vmatpush1.bf16.msra.mxu0 0
        %4209 = vmatprep.subr.bf16.mxu0 0
        %4210 = vmatpush1.bf16.msra.mxu0 0
        %4211 = vmatprep.subr.bf16.mxu0 0
        %4212 = vmatpush1.bf16.msra.mxu0 0
        %4213 = vmatprep.subr.bf16.mxu0 0
        %4214 = vmatpush1.bf16.msra.mxu0 0
        %4215 = vmatprep.subr.bf16.mxu0 0
        %4216 = vmatpush1.bf16.msra.mxu0 0
        %4217 = vmatprep.subr.bf16.mxu0 0
        %4218 = vmatpush1.bf16.msra.mxu0 0
        %4219 = vmatprep.subr.bf16.mxu0 0
        %4220 = vmatpush1.bf16.msra.mxu0 0
        %4221 = vmatprep.subr.bf16.mxu0 0
        %4222 = vmatpush1.bf16.msra.mxu0 0
        %4223 = vmatprep.mubr.bf16.mxu0 0
        %4224 = vmatmul.mubr.bf16.gmra.mrb[0].mxu0 %v4180
        %v4225 = vpop.f32.mrb[0].mxu0
        %v4226 = vadd.f32 0.0, %v4225
        %v4227 = vpop.f32.mrb[0].mxu0
        %v4228 = vpop.f32.mrb[0].mxu0
        %v4229 = vadd.f32 0.0, %v4228
        %v4230 = vpop.f32.mrb[0].mxu0
        %4231 = vmatprep.mubr.bf16.mxu0 0
        %4232 = vmatmul.mubr.bf16.gmra.mrb[0].mxu0 %v4183
        %v4233 = vpop.f32.mrb[0].mxu0
        %v4234 = vadd.f32 0.0, %v4233
        %v4235 = vpop.f32.mrb[0].mxu0
        %v4236 = vpop.f32.mrb[0].mxu0
        %v4237 = vadd.f32 0.0, %v4236
        %v4238 = vpop.f32.mrb[0].mxu0
        %4239 = vmatprep.mubr.bf16.mxu0 0
        %4240 = vmatmul.mubr.bf16.gmra.mrb[0].mxu0 %v4186
        %v4241 = vpop.f32.mrb[0].mxu0
        %v4242 = vadd.f32 0.0, %v4241
        %v4243 = vpop.f32.mrb[0].mxu0
        %v4244 = vpop.f32.mrb[0].mxu0
        %v4245 = vadd.f32 0.0, %v4244
        %v4246 = vpop.f32.mrb[0].mxu0
        %4247 = vmatprep.mubr.bf16.mxu0 0
        %4248 = vmatmul.mubr.bf16.gmra.mrb[0].mxu0 %v4189
        %v4249 = vpop.f32.mrb[0].mxu0
        %v4250 = vadd.f32 0.0, %v4249
        %v4251 = vpop.f32.mrb[0].mxu0
        %v4252 = vpop.f32.mrb[0].mxu0
        %v4253 = vadd.f32 0.0, %v4252
        %v4254 = vpop.f32.mrb[0].mxu0
        %4255 = vdwg.mxu0
        %v4258 = vunpack.c.l.b16 %v4159
        %v4259 = vunpack.c.l.b16 %v4160
        %v4260 = vpack.c.b16 %v4259, %v4258
        %v4263 = vsel %vm3128, %v4165, 0
        %v4266 = vsel %vm3128, %v4166, 0
        %v4269 = vsel %vm3128, %v4167, 0
        %v4272 = vsel %vm3128, %v4168, 0
        %4274 = vmatprep.subr.bf16.mxu0 0
        %4275 = vmatpush1.bf16.msra.mxu0 %v4260
        %4276 = vmatprep.subr.bf16.mxu0 0
        %4277 = vmatpush1.bf16.msra.mxu0 0
        %4278 = vmatprep.subr.bf16.mxu0 0
        %4279 = vmatpush1.bf16.msra.mxu0 0
        %4280 = vmatprep.subr.bf16.mxu0 0
        %4281 = vmatpush1.bf16.msra.mxu0 0
        %4282 = vmatprep.subr.bf16.mxu0 0
        %4283 = vmatpush1.bf16.msra.mxu0 0
        %4284 = vmatprep.subr.bf16.mxu0 0
        %4285 = vmatpush1.bf16.msra.mxu0 0
        %4286 = vmatprep.subr.bf16.mxu0 0
        %4287 = vmatpush1.bf16.msra.mxu0 0
        %4288 = vmatprep.subr.bf16.mxu0 0
        %4289 = vmatpush1.bf16.msra.mxu0 0
        %4290 = vmatprep.subr.bf16.mxu0 0
        %4291 = vmatpush1.bf16.msra.mxu0 0
        %4292 = vmatprep.subr.bf16.mxu0 0
        %4293 = vmatpush1.bf16.msra.mxu0 0
        %4294 = vmatprep.subr.bf16.mxu0 0
        %4295 = vmatpush1.bf16.msra.mxu0 0
        %4296 = vmatprep.subr.bf16.mxu0 0
        %4297 = vmatpush1.bf16.msra.mxu0 0
        %4298 = vmatprep.subr.bf16.mxu0 0
        %4299 = vmatpush1.bf16.msra.mxu0 0
        %4300 = vmatprep.subr.bf16.mxu0 0
        %4301 = vmatpush1.bf16.msra.mxu0 0
        %4302 = vmatprep.subr.bf16.mxu0 0
        %4303 = vmatpush1.bf16.msra.mxu0 0
        %4304 = vmatprep.subr.bf16.mxu0 0
        %4305 = vmatpush1.bf16.msra.mxu0 0
        %4306 = vmatprep.mubr.bf16.mxu0 0
        %4307 = vmatmul.mubr.bf16.gmra.mrb[0].mxu0 %v4263
        %v4308 = vpop.f32.mrb[0].mxu0
        %v4309 = vadd.f32 %v4226, %v4308
        %v4310 = vpop.f32.mrb[0].mxu0
        %v4311 = vpop.f32.mrb[0].mxu0
        %v4312 = vadd.f32 %v4229, %v4311
        %v4313 = vpop.f32.mrb[0].mxu0
        %4314 = vmatprep.mubr.bf16.mxu0 0
        %4315 = vmatmul.mubr.bf16.gmra.mrb[0].mxu0 %v4266
        %v4316 = vpop.f32.mrb[0].mxu0
        %v4317 = vadd.f32 %v4234, %v4316
        %v4318 = vpop.f32.mrb[0].mxu0
        %v4319 = vpop.f32.mrb[0].mxu0
        %v4320 = vadd.f32 %v4237, %v4319
        %v4321 = vpop.f32.mrb[0].mxu0
        %4322 = vmatprep.mubr.bf16.mxu0 0
        %4323 = vmatmul.mubr.bf16.gmra.mrb[0].mxu0 %v4269
        %v4324 = vpop.f32.mrb[0].mxu0
        %v4325 = vadd.f32 %v4242, %v4324
        %v4326 = vpop.f32.mrb[0].mxu0
        %v4327 = vpop.f32.mrb[0].mxu0
        %v4328 = vadd.f32 %v4245, %v4327
        %v4329 = vpop.f32.mrb[0].mxu0
        %4330 = vmatprep.mubr.bf16.mxu0 0
        %4331 = vmatmul.mubr.bf16.gmra.mrb[0].mxu0 %v4272
        %v4332 = vpop.f32.mrb[0].mxu0
        %v4333 = vadd.f32 %v4250, %v4332
        %v4334 = vpop.f32.mrb[0].mxu0
        %v4335 = vpop.f32.mrb[0].mxu0
        %v4336 = vadd.f32 %v4253, %v4335
        %v4337 = vpop.f32.mrb[0].mxu0
        %4338 = vdwg.mxu0
        %v4339 = vpack.c.bf16 %v4151, %v4150
        %v4340 = vpack.c.bf16 %v4153, %v4152
        %v4341 = vpack.c.bf16 %v4155, %v4154
        %v4342 = vpack.c.bf16 %v4157, %v4156
        %v4345 = vunpack.c.l.b16 %v4163
        %v4346 = vunpack.c.l.b16 %v4164
        %v4347 = vpack.c.b16 %v4346, %v4345
        %v4350 = vsel %vm3128, %v4339, 0
        %v4353 = vsel %vm3128, %v4340, 0
        %v4356 = vsel %vm3128, %v4341, 0
        %v4359 = vsel %vm3128, %v4342, 0
        %4361 = vmatprep.subr.bf16.mxu0 0
        %4362 = vmatpush1.bf16.msra.mxu0 %v4347
        %4363 = vmatprep.subr.bf16.mxu0 0
        %4364 = vmatpush1.bf16.msra.mxu0 0
        %4365 = vmatprep.subr.bf16.mxu0 0
        %4366 = vmatpush1.bf16.msra.mxu0 0
        %4367 = vmatprep.subr.bf16.mxu0 0
        %4368 = vmatpush1.bf16.msra.mxu0 0
        %4369 = vmatprep.subr.bf16.mxu0 0
        %4370 = vmatpush1.bf16.msra.mxu0 0
        %4371 = vmatprep.subr.bf16.mxu0 0
        %4372 = vmatpush1.bf16.msra.mxu0 0
        %4373 = vmatprep.subr.bf16.mxu0 0
        %4374 = vmatpush1.bf16.msra.mxu0 0
        %4375 = vmatprep.subr.bf16.mxu0 0
        %4376 = vmatpush1.bf16.msra.mxu0 0
        %4377 = vmatprep.subr.bf16.mxu0 0
        %4378 = vmatpush1.bf16.msra.mxu0 0
        %4379 = vmatprep.subr.bf16.mxu0 0
        %4380 = vmatpush1.bf16.msra.mxu0 0
        %4381 = vmatprep.subr.bf16.mxu0 0
        %4382 = vmatpush1.bf16.msra.mxu0 0
        %4383 = vmatprep.subr.bf16.mxu0 0
        %4384 = vmatpush1.bf16.msra.mxu0 0
        %4385 = vmatprep.subr.bf16.mxu0 0
        %4386 = vmatpush1.bf16.msra.mxu0 0
        %4387 = vmatprep.subr.bf16.mxu0 0
        %4388 = vmatpush1.bf16.msra.mxu0 0
        %4389 = vmatprep.subr.bf16.mxu0 0
        %4390 = vmatpush1.bf16.msra.mxu0 0
        %4391 = vmatprep.subr.bf16.mxu0 0
        %4392 = vmatpush1.bf16.msra.mxu0 0
        %4393 = vmatprep.mubr.bf16.mxu0 0
        %4394 = vmatmul.mubr.bf16.gmra.mrb[0].mxu0 %v4350
        %v4395 = vpop.f32.mrb[0].mxu0
        %v4396 = vadd.f32 0.0, %v4395
        %v4397 = vpop.f32.mrb[0].mxu0
        %v4398 = vpop.f32.mrb[0].mxu0
        %v4399 = vadd.f32 0.0, %v4398
        %v4400 = vpop.f32.mrb[0].mxu0
        %4401 = vmatprep.mubr.bf16.mxu0 0
        %4402 = vmatmul.mubr.bf16.gmra.mrb[0].mxu0 %v4353
        %v4403 = vpop.f32.mrb[0].mxu0
        %v4404 = vadd.f32 0.0, %v4403
        %v4405 = vpop.f32.mrb[0].mxu0
        %v4406 = vpop.f32.mrb[0].mxu0
        %v4407 = vadd.f32 0.0, %v4406
        %v4408 = vpop.f32.mrb[0].mxu0
        %4409 = vmatprep.mubr.bf16.mxu0 0
        %4410 = vmatmul.mubr.bf16.gmra.mrb[0].mxu0 %v4356
        %v4411 = vpop.f32.mrb[0].mxu0
        %v4412 = vadd.f32 0.0, %v4411
        %v4413 = vpop.f32.mrb[0].mxu0
        %v4414 = vpop.f32.mrb[0].mxu0
        %v4415 = vadd.f32 0.0, %v4414
        %v4416 = vpop.f32.mrb[0].mxu0
        %4417 = vmatprep.mubr.bf16.mxu0 0
        %4418 = vmatmul.mubr.bf16.gmra.mrb[0].mxu0 %v4359
        %v4419 = vpop.f32.mrb[0].mxu0
        %v4420 = vadd.f32 0.0, %v4419
        %v4421 = vpop.f32.mrb[0].mxu0
        %v4422 = vpop.f32.mrb[0].mxu0
        %v4423 = vadd.f32 0.0, %v4422
        %v4424 = vpop.f32.mrb[0].mxu0
        %4425 = vdwg.mxu0
        %v4426 = vadd.f32 %v4309, %v4396
        %v4427 = vadd.f32 %v4312, %v4399
        %v4428 = vadd.f32 %v4317, %v4404
        %v4429 = vadd.f32 %v4320, %v4407
        %v4430 = vadd.f32 %v4325, %v4412
        %v4431 = vadd.f32 %v4328, %v4415
        %v4432 = vadd.f32 %v4333, %v4420
        %v4433 = vadd.f32 %v4336, %v4423
        %v4434 = vadd.f32 %v4124, %v4426
        %v4435 = vadd.f32 %v4125, %v4427
        %v4436 = vadd.f32 %v4126, %v4428
        %v4437 = vadd.f32 %v4127, %v4429
        %v4438 = vadd.f32 %v4128, %v4430
        %v4439 = vadd.f32 %v4129, %v4431
        %v4440 = vadd.f32 %v4130, %v4432
        %v4441 = vadd.f32 %v4131, %v4433
        %v4442 = vlaneseq
        %v4443 = vshrl.u32 %v4442, 7
        %v4444 = vsub.s32 2, %v4443
        %v4445 = vrot.slane %v299, %v4444
        %v4446 = vadd.f32 %v4434, %v4445
        %v4447 = vadd.f32 %v4435, %v4445
        %v4448 = vadd.f32 %v4436, %v4445
        %v4449 = vadd.f32 %v4437, %v4445
        %v4450 = vadd.f32 %v4438, %v4445
        %v4451 = vadd.f32 %v4439, %v4445
        %v4452 = vadd.f32 %v4440, %v4445
        %v4453 = vadd.f32 %v4441, %v4445
        %v4454 = vld [vmem:[%s296] sm:$0xff]
        %v4455 = vld [vmem:[%s296 + $0x8] sm:$0xff]
        %v4456 = vld [vmem:[%s296 + $0x10] sm:$0xff]
        %v4457 = vld [vmem:[%s296 + $0x18] sm:$0xff]
        %v4458 = vld [vmem:[%s296 + $0x20] sm:$0xff]
        %v4459 = vld [vmem:[%s296 + $0x28] sm:$0xff]
        %v4460 = vld [vmem:[%s296 + $0x30] sm:$0xff]
        %v4461 = vld [vmem:[%s296 + $0x38] sm:$0xff]
        %v4462 = vpack.c.bf16 %v4454, %v4454
        %v4463 = vpack.c.bf16 %v4455, %v4455
        %v4464 = vpack.c.bf16 %v4456, %v4456
        %v4465 = vpack.c.bf16 %v4457, %v4457
        %v4466 = vpack.c.bf16 %v4458, %v4458
        %v4467 = vpack.c.bf16 %v4459, %v4459
        %v4468 = vpack.c.bf16 %v4460, %v4460
        %v4469 = vpack.c.bf16 %v4461, %v4461
        %v4470 = vld [vmem:[%s4] sm:$0xf]
        %v4471 = vlaneseq
        %v4472 = vshrl.u32 %v4471, 7
        %v4473 = vsub.s32 3, %v4472
        %v4474 = vrot.slane %v299, %v4473
        %v4483 = vunpack.c.l.b16 %v4462
        %v4484 = vunpack.c.l.b16 %v4463
        %v4485 = vunpack.c.l.b16 %v4464
        %v4486 = vunpack.c.l.b16 %v4465
        %v4487 = vunpack.c.l.b16 %v4466
        %v4488 = vunpack.c.l.b16 %v4467
        %v4489 = vunpack.c.l.b16 %v4468
        %v4490 = vunpack.c.l.b16 %v4469
        %v4491 = vpack.c.b16 %v4484, %v4483
        %v4492 = vpack.c.b16 %v4486, %v4485
        %v4493 = vpack.c.b16 %v4488, %v4487
        %v4494 = vpack.c.b16 %v4490, %v4489
        %v4496 = vsel %vm332, %v4491, 0
        %v4499 = vsel %vm332, %v4492, 0
        %v4502 = vsel %vm332, %v4493, 0
        %v4505 = vsel %vm332, %v4494, 0
        %v4508 = vsel %vm658, %v4470, 0
        %4510 = vmatprep.subr.bf16.mxu0 0
        %4511 = vmatpush1.bf16.msra.mxu0 %v4508
        %4512 = vmatprep.subr.bf16.mxu0 0
        %4513 = vmatpush1.bf16.msra.mxu0 0
        %4514 = vmatprep.subr.bf16.mxu0 0
        %4515 = vmatpush1.bf16.msra.mxu0 0
        %4516 = vmatprep.subr.bf16.mxu0 0
        %4517 = vmatpush1.bf16.msra.mxu0 0
        %4518 = vmatprep.subr.bf16.mxu0 0
        %4519 = vmatpush1.bf16.msra.mxu0 0
        %4520 = vmatprep.subr.bf16.mxu0 0
        %4521 = vmatpush1.bf16.msra.mxu0 0
        %4522 = vmatprep.subr.bf16.mxu0 0
        %4523 = vmatpush1.bf16.msra.mxu0 0
        %4524 = vmatprep.subr.bf16.mxu0 0
        %4525 = vmatpush1.bf16.msra.mxu0 0
        %4526 = vmatprep.subr.bf16.mxu0 0
        %4527 = vmatpush1.bf16.msra.mxu0 0
        %4528 = vmatprep.subr.bf16.mxu0 0
        %4529 = vmatpush1.bf16.msra.mxu0 0
        %4530 = vmatprep.subr.bf16.mxu0 0
        %4531 = vmatpush1.bf16.msra.mxu0 0
        %4532 = vmatprep.subr.bf16.mxu0 0
        %4533 = vmatpush1.bf16.msra.mxu0 0
        %4534 = vmatprep.subr.bf16.mxu0 0
        %4535 = vmatpush1.bf16.msra.mxu0 0
        %4536 = vmatprep.subr.bf16.mxu0 0
        %4537 = vmatpush1.bf16.msra.mxu0 0
        %4538 = vmatprep.subr.bf16.mxu0 0
        %4539 = vmatpush1.bf16.msra.mxu0 0
        %4540 = vmatprep.subr.bf16.mxu0 0
        %4541 = vmatpush1.bf16.msra.mxu0 0
        %4542 = vmatprep.mubr.bf16.mxu0 0
        %4543 = vmatmul.mubr.bf16.gmra.mrb[0].mxu0 %v4496
        %v4544 = vpop.f32.mrb[0].mxu0
        %v4545 = vadd.f32 %v4474, %v4544
        %v4546 = vpop.f32.mrb[0].mxu0
        %v4547 = vpop.f32.mrb[0].mxu0
        %v4548 = vadd.f32 %v4474, %v4547
        %v4549 = vpop.f32.mrb[0].mxu0
        %4550 = vmatprep.mubr.bf16.mxu0 0
        %4551 = vmatmul.mubr.bf16.gmra.mrb[0].mxu0 %v4499
        %v4552 = vpop.f32.mrb[0].mxu0
        %v4553 = vadd.f32 %v4474, %v4552
        %v4554 = vpop.f32.mrb[0].mxu0
        %v4555 = vpop.f32.mrb[0].mxu0
        %v4556 = vadd.f32 %v4474, %v4555
        %v4557 = vpop.f32.mrb[0].mxu0
        %4558 = vmatprep.mubr.bf16.mxu0 0
        %4559 = vmatmul.mubr.bf16.gmra.mrb[0].mxu0 %v4502
        %v4560 = vpop.f32.mrb[0].mxu0
        %v4561 = vadd.f32 %v4474, %v4560
        %v4562 = vpop.f32.mrb[0].mxu0
        %v4563 = vpop.f32.mrb[0].mxu0
        %v4564 = vadd.f32 %v4474, %v4563
        %v4565 = vpop.f32.mrb[0].mxu0
        %4566 = vmatprep.mubr.bf16.mxu0 0
        %4567 = vmatmul.mubr.bf16.gmra.mrb[0].mxu0 %v4505
        %v4568 = vpop.f32.mrb[0].mxu0
        %v4569 = vadd.f32 %v4474, %v4568
        %v4570 = vpop.f32.mrb[0].mxu0
        %v4571 = vpop.f32.mrb[0].mxu0
        %v4572 = vadd.f32 %v4474, %v4571
        %v4573 = vpop.f32.mrb[0].mxu0
        %4574 = vdwg.mxu0
        %v4575 = vadd.f32 %v4446, %v4545
        %v4576 = vadd.f32 %v4447, %v4548
        %v4577 = vadd.f32 %v4448, %v4553
        %v4578 = vadd.f32 %v4449, %v4556
        %v4579 = vadd.f32 %v4450, %v4561
        %v4580 = vadd.f32 %v4451, %v4564
        %v4581 = vadd.f32 %v4452, %v4569
        %v4582 = vadd.f32 %v4453, %v4572
        %4583 = vst.msk [vmem:[%s286] sm:$0xff] %vm3128, %v4575
        %4584 = vst.msk [vmem:[%s286 + $0x8] sm:$0xff] %vm3128, %v4576
        %4585 = vst.msk [vmem:[%s286 + $0x10] sm:$0xff] %vm3128, %v4577
        %4586 = vst.msk [vmem:[%s286 + $0x18] sm:$0xff] %vm3128, %v4578
        %4587 = vst.msk [vmem:[%s286 + $0x20] sm:$0xff] %vm3128, %v4579
        %4588 = vst.msk [vmem:[%s286 + $0x28] sm:$0xff] %vm3128, %v4580
        %4589 = vst.msk [vmem:[%s286 + $0x30] sm:$0xff] %vm3128, %v4581
        %4590 = vst.msk [vmem:[%s286 + $0x38] sm:$0xff] %vm3128, %v4582
        %s4591 = sand.u32 %s186, 1
        %s4592 = scalar_lea.sflag [#allocation11], %s4591
        %s4593 = sand.u32 %s186, 1
        %s4594 = smul.addr %s4593, 64
        %s4595 = scalar_lea.vmem [#allocation10], %s4594
        // Predicated region
        $region49: #{tpu_custom_call.1} parent=47 // pred_check
          %p4596 = pneg %p196
        $region50: #{tpu_custom_call.1} parent=47 // pred_check_branch
          %4598 = sbr.rel (%p4596) target = $region52
        $region51: #{tpu_custom_call.1} parent=47 // pred_region
          %s4600 = ssub.s32 1024, 1024
          %4601 = vsyncadd %s4592, %s4600
          %s4602 = smul.addr %s21, 8
          %s4603 = smul.addr %s4602, 128
          %s4604 = scalar_lea.hbm %s7, %s4603
          %s4605 = sshll.u32 %s4595, 4
          %s4606 = int_to_ptr.vmem [resolvable:$true] %s4605
          %4611 = dma.vmem_to_hbm [thread:$0]  %s4606, 1024, %s4604, %s4592, 128, 128, 8
        $region52: #{tpu_custom_call.1} parent=47 // pred_fallthru
          _
      $region48: #{tpu_custom_call.1} parent=5 // pred_fallthru
        _
      %p4612 = scmp.le.s32.totalorder 2, %s16
      // Predicated region
      $region53: #{tpu_custom_call.1} parent=5 // pred_check
        %p4613 = pneg %p4612
      $region54: #{tpu_custom_call.1} parent=5 // pred_check_branch
        %4615 = sbr.rel (%p4613) target = $region56
      $region55: #{tpu_custom_call.1} parent=5 // pred_region
        %s4616 = ssub.s32 %s16, 2
        // Predicated region
        $region57: #{tpu_custom_call.1} parent=55 // pred_check
          %p4617 = pneg %p202
        $region58: #{tpu_custom_call.1} parent=55 // pred_check_branch
          %4619 = sbr.rel (%p4617) target = $region60
        $region59: #{tpu_custom_call.1} parent=55 // pred_region
          %s4620 = sand.u32 %s187, 1
          %s4621 = scalar_lea.sflag [#allocation11], %s4620
          %s4622 = sand.u32 %s187, 1
          %s4623 = smul.addr %s4622, 64
          %s4624 = scalar_lea.vmem [#allocation10], %s4623
          %4625 = dma.done %s4621, 1024
        $region60: #{tpu_custom_call.1} parent=55 // pred_fallthru
          _
      $region56: #{tpu_custom_call.1} parent=5 // pred_fallthru
        _
    $region6: #{tpu_custom_call.1} parent=1 // loop_footer
      %s20 = sadd.s32 1, %s16
    $region7: #{tpu_custom_call.1} parent=1 // loop_footer_branch
      %15 = sbr.rel target = $region3
    $region8: #{tpu_custom_call.1} parent=1 // loop_exit
      _
    %4626 = vsyncpa [#allocation11], 1
    %s4627 = scalar_lea.sflag [#allocation11], 1
    %4628 = vsyncpa %s4627, 1

</llo_original>
